<compile_context>
chip_gen: v5e
topology: v5e:2x2
jax: 0.10.0
libtpu: 0.0.40
codegen_flags: <defaults>
</compile_context>

<pallas_src>
import functools

import jax
import jax.numpy as jnp
from jax.experimental import pallas as pl
from jax.experimental.pallas import tpu as pltpu

EPS = 1e-5


# ----------------------------------------------------------------------------
# Pallas kernel: k images per grid step, tiles of shape (k*H, W*C)
# ----------------------------------------------------------------------------
def _time_res_block_kernel(
    x_ref, tb_ref,
    g1_ref, bg1_ref, m1_ref, w1_ref,
    g2_ref, bg2_ref, m2_ref, w2_ref,
    cbs_ref, r_ref, rt_ref,
    *rest, k, H, has_shortcut):
  if has_shortcut:
    ws_ref, o_ref = rest
  else:
    (o_ref,) = rest
  kH = k * H

  def swish(v):
    return v * jax.nn.sigmoid(v)

  def group_norm(v2, m_ref, gamma, beta):
    # v2: (kH, WC) f32.  r_ref: (k, kH) 0/1 image-row reduce matrix.
    # m_ref: (WC, WC) group-broadcast matrix (pre-divided by H*W*cpg).
    # rt_ref: (kH, k) broadcast-back matrix.
    wc = v2.shape[1]
    s = jnp.dot(r_ref[...], v2, preferred_element_type=jnp.float32)          # (k, WC)
    ssq = jnp.dot(r_ref[...], v2 * v2, preferred_element_type=jnp.float32)   # (k, WC)
    red = jnp.dot(jnp.concatenate([s, ssq], axis=0), m_ref[...],
                  preferred_element_type=jnp.float32)                        # (2k, WC)
    mean = red[:k]
    # Clamp: single-pass E[x^2]-mean^2 can go slightly negative (f32 cancellation).
    var = jnp.maximum(red[k:] - mean * mean, 0.0)
    scale = jax.lax.rsqrt(var + EPS) * gamma                                 # (k, WC)
    shift = beta - mean * scale                                              # (k, WC)
    full = jnp.dot(rt_ref[...], jnp.concatenate([scale, shift], axis=1),
                   preferred_element_type=jnp.float32)                       # (kH, 2WC)
    return v2 * full[:, :wc] + full[:, wc:]

  # Per-image vertical boundary masks (k images of H rows stacked in sublanes).
  y_in_img = jax.lax.broadcasted_iota(jnp.int32, (kH, 1), 0) % H
  top = y_in_img == 0
  bot = y_in_img == H - 1

  def conv3x3(v2, w_ref):
    # v2: (kH, WCin) f32; w_ref: (3*WCin, WCout) bf16 with the three vertical
    # taps K-stacked (kx shift + width zero padding folded into the bands).
    # Row shifts go through the XLU (roll) + per-image masks; one bf16 cast of
    # the lane-concatenated taps; one MXU matmul with f32 accumulation.
    v_dn = jnp.where(top, 0.0, pltpu.roll(v2, shift=1, axis=0))        # row y -> v[y-1]
    v_up = jnp.where(bot, 0.0, pltpu.roll(v2, shift=kH - 1, axis=0))   # row y -> v[y+1]
    v_cat = jnp.concatenate([v_dn, v2, v_up], axis=1).astype(jnp.bfloat16)
    return jnp.dot(v_cat, w_ref[...], preferred_element_type=jnp.float32)

  x2 = x_ref[...].astype(jnp.float32)                                  # (kH, WCi)

  # norm1 -> swish -> conv1
  h = conv3x3(swish(group_norm(x2, m1_ref, g1_ref[...], bg1_ref[...])), w1_ref)

  # + (time_emb(swish(t)) + conv1 bias), broadcast over the H rows of each image
  h = h + jnp.dot(rt_ref[...], tb_ref[...], preferred_element_type=jnp.float32)

  # norm2 -> swish -> dropout -> conv2
  # TODO(synk): nn.Dropout(p=0.1) is identity in eval mode; training-mode RNG mask not implemented.
  h = conv3x3(swish(group_norm(h, m2_ref, g2_ref[...], bg2_ref[...])), w2_ref)

  if has_shortcut:                                                     # 1x1 conv shortcut
    sc = jnp.dot(x2.astype(jnp.bfloat16), ws_ref[...],
                 preferred_element_type=jnp.float32)
  else:                                                                # identity: stay in f32
    sc = x2

  o_ref[...] = (h + sc + cbs_ref[...]).astype(o_ref.dtype)


# ----------------------------------------------------------------------------
# One-time parameter preprocessing (hoisted out of the per-call path)
# ----------------------------------------------------------------------------
def _banded_conv_weights(w, W):
  # w: (Cout, Cin, 3, 3) OIHW -> (3*W*Cin, W*Cout) bf16.  For vertical tap ky:
  # band[x_in*Cin + ci, x_out*Cout + co] = w[co, ci, ky, x_in - x_out + 1];
  # the three ky taps are stacked along K so each conv is a single MXU matmul.
  # TODO(synk): 3*(W*C)^2 bf16 footprint with 3/W nonzero density; switch to a
  # per-tap (rows, C) layout once W*C grows past a few K (bites first on v7x's
  # 64 MiB VMEM).
  Cout, Cin = w.shape[0], w.shape[1]
  xi = jnp.arange(W)
  mats = []
  for ky in range(3):
    m = jnp.zeros((W * Cin, W * Cout), jnp.float32)
    for kx in range(3):
      band = (xi[:, None] - xi[None, :] == (kx - 1)).astype(jnp.float32)
      m = m + jnp.kron(band, w[:, :, ky, kx].T.astype(jnp.float32))
    mats.append(m)
  return jnp.concatenate(mats, axis=0).astype(jnp.bfloat16)


def _group_bcast_matrix(C, n_groups, H, W):
  cpg = C // n_groups
  grp = (jnp.arange(W * C) % C) // cpg
  m = (grp[:, None] == grp[None, :]).astype(jnp.float32)
  return m / float(H * W * cpg)


def _tile_c(v, W):
  return jnp.tile(v.astype(jnp.float32), W)[None, :]        # (1, W*C)


def prepare_params(params, *, n_groups, H, W):
  """Preprocess module parameters once (cache per parameter set)."""
  Cout, Cin = params["w1"].shape[0], params["w1"].shape[1]
  has_shortcut = "ws" in params
  if has_shortcut:
    ws2 = params["ws"][:, :, 0, 0].T.astype(jnp.float32)     # (Cin, Cout)
    ws_b = jnp.kron(jnp.eye(W, dtype=jnp.float32), ws2).astype(jnp.bfloat16)
    bs = params["bs"].astype(jnp.float32)
  else:
    assert Cin == Cout, "identity shortcut requires in_channels == out_channels"
    ws_b = None
    bs = jnp.zeros((Cout,), jnp.float32)
  return dict(
      Cin=Cin, Cout=Cout, H=H, W=W, has_shortcut=has_shortcut,
      w1_b=_banded_conv_weights(params["w1"], W),            # (3*W*Cin, W*Cout)
      w2_b=_banded_conv_weights(params["w2"], W),            # (3*W*Cout, W*Cout)
      ws_b=ws_b,
      g1=_tile_c(params["g1"], W), bg1=_tile_c(params["bg1"], W),
      g2=_tile_c(params["g2"], W), bg2=_tile_c(params["bg2"], W),
      m1=_group_bcast_matrix(Cin, n_groups, H, W),
      m2=_group_bcast_matrix(Cout, n_groups, H, W),
      cbs=_tile_c(params["b2"].astype(jnp.float32) + bs, W), # conv2 bias + shortcut bias
      wt=params["wt"].T.astype(jnp.float32),                 # (Tc, Cout)
      bt1=params["bt"].astype(jnp.float32) + params["b1"].astype(jnp.float32),
  )


# ----------------------------------------------------------------------------
# Forward wrapper: layout conversion + pallas_call
# ----------------------------------------------------------------------------
def time_residual_block(x, t, prepped, *, block_batch=None):
  B, Cin, H, W = x.shape
  assert (Cin, H, W) == (prepped["Cin"], prepped["H"], prepped["W"])
  Cout = prepped["Cout"]
  WCi, WCo = W * Cin, W * Cout
  has_shortcut = prepped["has_shortcut"]

  # Batch k images per grid step: target kH ~= 256 (fill MXU M, amortize
  # per-step overhead) while keeping >= 2 parallel grid steps when possible.
  if block_batch is None:
    k = min(B, max(1, 256 // H))
    if B >= 2 and pl.cdiv(B, k) < 2:
      k = pl.cdiv(B, 2)
  else:
    k = block_batch
  n_steps = pl.cdiv(B, k)
  Bp = n_steps * k
  kH = k * H

  # NCHW -> (B, H, W*C), channels fastest in the lane dim.
  # TODO(synk): keep activations in (B, H, W*C) (optionally bf16) across the
  # model to drop this HBM round trip; NCHW is lane-sparse so it cannot be read
  # directly in-kernel.
  x_rows = jnp.transpose(x, (0, 2, 3, 1)).reshape(B, H, WCi)

  # Time path (tiny GEMM) in plain JAX, fused with conv1 bias, width-tiled.
  t32 = t.astype(jnp.float32)
  tb = (t32 * jax.nn.sigmoid(t32)) @ prepped["wt"] + prepped["bt1"]
  tb = jnp.tile(tb, (1, W))                                   # (B, W*Cout)

  if Bp != B:
    x_rows = jnp.pad(x_rows, ((0, Bp - B), (0, 0), (0, 0)))
    tb = jnp.pad(tb, ((0, Bp - B), (0, 0)))
  x_g = x_rows.reshape(n_steps, kH, WCi)
  tb_g = tb.reshape(n_steps, k, WCo)

  img = jnp.arange(kH) // H
  r = (jnp.arange(k)[:, None] == img[None, :]).astype(jnp.float32)   # (k, kH)
  rt = r.T                                                           # (kH, k)

  param_args = (
      prepped["g1"], prepped["bg1"], prepped["m1"], prepped["w1_b"],
      prepped["g2"], prepped["bg2"], prepped["m2"], prepped["w2_b"],
      prepped["cbs"], r, rt)
  if has_shortcut:
    param_args = param_args + (prepped["ws_b"],)

  def full_spec(a):
    nd = a.ndim
    # TODO(synk): single-buffer these grid-invariant blocks (pl.Buffered(1))
    # once top-level pallas_call pipelining honors pipeline_mode; halves their
    # VMEM footprint (matters most under v7x's 64 MiB VMEM).
    return pl.BlockSpec(a.shape, lambda b, _nd=nd: (0,) * _nd)

  in_specs = [
      pl.BlockSpec((None, kH, WCi), lambda b: (b, 0, 0)),     # x rows: k images / step
      pl.BlockSpec((None, k, WCo), lambda b: (b, 0, 0)),      # fused time+conv1 bias
  ] + [full_spec(a) for a in param_args]
  out_spec = pl.BlockSpec((None, kH, WCo), lambda b: (b, 0, 0))

  # Explicit VMEM budget + cost estimate for the scheduler.
  itemsize = jnp.dtype(x.dtype).itemsize
  param_bytes = sum(int(a.size) * a.dtype.itemsize for a in param_args)
  block_bytes = kH * WCi * itemsize + k * WCo * 4 + kH * WCo * itemsize
  act_bytes = kH * max(WCi, WCo) * 4
  vmem_limit = int(min(64 * 2**20,
                       max(32 * 2**20, 2 * (param_bytes + block_bytes) + 24 * act_bytes)))
  conv_flops = 2 * kH * (3 * WCi * WCo + 3 * WCo * WCo)
  sc_flops = 2 * kH * WCi * WCo if has_shortcut else 0
  gn_flops = 2 * k * kH * 3 * (WCi + WCo) + 4 * k * (WCi * WCi + WCo * WCo)
  cost = pl.CostEstimate(
      flops=int(n_steps * (conv_flops + sc_flops + gn_flops + 2 * kH * k * WCo)),
      transcendentals=int(n_steps * kH * (WCi + WCo)),
      bytes_accessed=int(int(x_g.size) * x_g.dtype.itemsize
                         + int(tb_g.size) * tb_g.dtype.itemsize
                         + Bp * H * WCo * itemsize + param_bytes))

  kernel = functools.partial(_time_res_block_kernel, k=k, H=H,
                             has_shortcut=has_shortcut)

  y_g = pl.pallas_call(
      kernel,
      out_shape=jax.ShapeDtypeStruct((n_steps, kH, WCo), x.dtype),
      grid_spec=pltpu.PrefetchScalarGridSpec(
          num_scalar_prefetch=0,
          grid=(n_steps,),
          in_specs=in_specs,
          out_specs=out_spec),
      compiler_params=pltpu.CompilerParams(
          dimension_semantics=("parallel",),
          vmem_limit_bytes=vmem_limit),
      cost_estimate=cost,
  )(x_g, tb_g, *param_args)

  y = y_g.reshape(Bp, H, W, Cout)[:B]
  return jnp.transpose(y, (0, 3, 1, 2))                       # -> NCHW


# ----------------------------------------------------------------------------
# Pure-JAX reference of the PyTorch forward (for correctness check)
# ----------------------------------------------------------------------------
def ref_forward(x, t, params, n_groups):
  def gn(v, gamma, beta):
    B, C, H, W = v.shape
    vg = v.reshape(B, n_groups, C // n_groups, H * W)
    mean = vg.mean(axis=(2, 3), keepdims=True)
    var = vg.var(axis=(2, 3), keepdims=True)
    vn = ((vg - mean) / jnp.sqrt(var + EPS)).reshape(B, C, H, W)
    return vn * gamma[None, :, None, None] + beta[None, :, None, None]

  def swish(v):
    return v * jax.nn.sigmoid(v)

  def conv(v, w, b, pad):
    y = jax.lax.conv_general_dilated(
        v, w, (1, 1), ((pad, pad), (pad, pad)),
        dimension_numbers=("NCHW", "OIHW", "NCHW"))
    return y + b[None, :, None, None]

  h = conv(swish(gn(x, params["g1"], params["bg1"])), params["w1"], params["b1"], 1)
  te = swish(t) @ params["wt"].T + params["bt"]
  h = h + te[:, :, None, None]
  h = conv(swish(gn(h, params["g2"], params["bg2"])), params["w2"], params["b2"], 1)
  sc = conv(x, params["ws"], params["bs"], 0) if "ws" in params else x
  return h + sc


if __name__ == "__main__":
  def make_params(key, Cin, Cout, Tc, with_shortcut):
    ks = jax.random.split(key, 12)
    p = dict(
        g1=1.0 + 0.1 * jax.random.normal(ks[0], (Cin,), jnp.float32),
        bg1=0.1 * jax.random.normal(ks[1], (Cin,), jnp.float32),
        w1=0.1 * jax.random.normal(ks[2], (Cout, Cin, 3, 3), jnp.float32),
        b1=0.1 * jax.random.normal(ks[3], (Cout,), jnp.float32),
        wt=0.1 * jax.random.normal(ks[4], (Cout, Tc), jnp.float32),
        bt=0.1 * jax.random.normal(ks[5], (Cout,), jnp.float32),
        g2=1.0 + 0.1 * jax.random.normal(ks[6], (Cout,), jnp.float32),
        bg2=0.1 * jax.random.normal(ks[7], (Cout,), jnp.float32),
        w2=0.1 * jax.random.normal(ks[8], (Cout, Cout, 3, 3), jnp.float32),
        b2=0.1 * jax.random.normal(ks[9], (Cout,), jnp.float32),
    )
    if with_shortcut:
      p["ws"] = 0.1 * jax.random.normal(ks[10], (Cout, Cin, 1, 1), jnp.float32)
      p["bs"] = 0.1 * jax.random.normal(ks[11], (Cout,), jnp.float32)
    return p

  root = jax.random.PRNGKey(0)
  kp1, kp2, kx1, kt1, kx2, kt2 = jax.random.split(root, 6)

  B, Tc, H, W, G = 4, 32, 16, 16, 4

  # Case 1: in_channels != out_channels -> 1x1 conv shortcut path.
  Cin, Cout = 8, 16
  params = make_params(kp1, Cin, Cout, Tc, with_shortcut=True)
  x = jax.random.normal(kx1, (B, Cin, H, W), jnp.float32)
  t = jax.random.normal(kt1, (B, Tc), jnp.float32)
  prepped = prepare_params(params, n_groups=G, H=H, W=W)      # done once per param set
  y = jax.block_until_ready(time_residual_block(x, t, prepped))
  y_ref = ref_forward(x, t, params, G)
  assert y.shape == (B, Cout, H, W)
  err1 = float(jnp.max(jnp.abs(y - y_ref)))
  # bf16 MXU operands on the conv / shortcut path -> looser tolerance than pure f32.
  assert err1 < 1e-1, f"shortcut case: max abs err {err1}"

  # Case 2: in_channels == out_channels -> identity shortcut (no matmul, f32 skip).
  Cin2 = Cout2 = 16
  params2 = make_params(kp2, Cin2, Cout2, Tc, with_shortcut=False)
  x2 = jax.random.normal(kx2, (B, Cin2, H, W), jnp.float32)
  t2 = jax.random.normal(kt2, (B, Tc), jnp.float32)
  prepped2 = prepare_params(params2, n_groups=G, H=H, W=W)
  y2 = jax.block_until_ready(time_residual_block(x2, t2, prepped2))
  y2_ref = ref_forward(x2, t2, params2, G)
  err2 = float(jnp.max(jnp.abs(y2 - y2_ref)))
  assert err2 < 1e-1, f"identity case: max abs err {err2}"

  print("KERNEL_OK")
</pallas_src>

<mosaic_0001>
module attributes {stable_mosaic.version = 11 : i64} {
  func.func @_time_res_block_kernel(%arg0: i32, %arg1: memref<1x32x128xf32, #tpu.memory_space<vmem>>, %arg2: memref<1x2x256xf32, #tpu.memory_space<vmem>>, %arg3: memref<1x128xf32, #tpu.memory_space<vmem>>, %arg4: memref<1x128xf32, #tpu.memory_space<vmem>>, %arg5: memref<128x128xf32, #tpu.memory_space<vmem>>, %arg6: memref<384x256xbf16, #tpu.memory_space<vmem>>, %arg7: memref<1x256xf32, #tpu.memory_space<vmem>>, %arg8: memref<1x256xf32, #tpu.memory_space<vmem>>, %arg9: memref<256x256xf32, #tpu.memory_space<vmem>>, %arg10: memref<768x256xbf16, #tpu.memory_space<vmem>>, %arg11: memref<1x256xf32, #tpu.memory_space<vmem>>, %arg12: memref<2x32xf32, #tpu.memory_space<vmem>>, %arg13: memref<32x2xf32, #tpu.memory_space<vmem>>, %arg14: memref<128x256xbf16, #tpu.memory_space<vmem>>, %arg15: memref<1x32x256xf32, #tpu.memory_space<vmem>>) attributes {dimension_semantics = [#tpu.dimension_semantics<parallel>], iteration_bounds = array<i64: 2>, scalar_prefetch = 0 : i64, scratch_operands = 0 : i64, tpu.core_type = #tpu.core_type<tc>, window_params = [{transform_indices = @transform_0, window_bounds = array<i64: 1, 32, 128>}, {transform_indices = @transform_1, window_bounds = array<i64: 1, 2, 256>}, {pipeline_mode = #tpu.pipeline_mode<synchronous>, transform_indices = @transform_2, window_bounds = array<i64: 1, 128>}, {pipeline_mode = #tpu.pipeline_mode<synchronous>, transform_indices = @transform_3, window_bounds = array<i64: 1, 128>}, {pipeline_mode = #tpu.pipeline_mode<synchronous>, transform_indices = @transform_4, window_bounds = array<i64: 128, 128>}, {pipeline_mode = #tpu.pipeline_mode<synchronous>, transform_indices = @transform_5, window_bounds = array<i64: 384, 256>}, {pipeline_mode = #tpu.pipeline_mode<synchronous>, transform_indices = @transform_6, window_bounds = array<i64: 1, 256>}, {pipeline_mode = #tpu.pipeline_mode<synchronous>, transform_indices = @transform_7, window_bounds = array<i64: 1, 256>}, {pipeline_mode = #tpu.pipeline_mode<synchronous>, transform_indices = @transform_8, window_bounds = array<i64: 256, 256>}, {pipeline_mode = #tpu.pipeline_mode<synchronous>, transform_indices = @transform_9, window_bounds = array<i64: 768, 256>}, {pipeline_mode = #tpu.pipeline_mode<synchronous>, transform_indices = @transform_10, window_bounds = array<i64: 1, 256>}, {pipeline_mode = #tpu.pipeline_mode<synchronous>, transform_indices = @transform_11, window_bounds = array<i64: 2, 32>}, {pipeline_mode = #tpu.pipeline_mode<synchronous>, transform_indices = @transform_12, window_bounds = array<i64: 32, 2>}, {pipeline_mode = #tpu.pipeline_mode<synchronous>, transform_indices = @transform_13, window_bounds = array<i64: 128, 256>}, {transform_indices = @transform_14, window_bounds = array<i64: 1, 32, 256>}]} {
    %0 = tpu.iota {dimensions = array<i32: 0>} : vector<32x1xi32>
    %c16_i32 = arith.constant 16 : i32
    %c0_i32 = arith.constant 0 : i32
    %1 = arith.cmpi eq, %c16_i32, %c0_i32 : i32
    %c1_i32 = arith.constant 1 : i32
    %2 = arith.select %1, %c1_i32, %c16_i32 : i32
    %3 = vector.broadcast %2 : i32 to vector<32x1xi32>
    %4 = arith.remsi %0, %3 : vector<32x1xi32>
    %c0_i32_0 = arith.constant 0 : i32
    %5 = vector.broadcast %c0_i32_0 : i32 to vector<32x1xi32>
    %6 = arith.cmpi ne, %4, %5 : vector<32x1xi32>
    %c0_i32_1 = arith.constant 0 : i32
    %7 = vector.broadcast %c0_i32_1 : i32 to vector<32x1xi32>
    %8 = arith.cmpi slt, %4, %7 : vector<32x1xi32>
    %c0_i32_2 = arith.constant 0 : i32
    %9 = arith.cmpi slt, %2, %c0_i32_2 : i32
    %10 = vector.broadcast %9 : i1 to vector<32x1xi1>
    %11 = vector.broadcast %10 : vector<32x1xi1> to vector<32x1xi1>
    %12 = arith.xori %8, %11 : vector<32x1xi1>
    %13 = arith.andi %12, %6 : vector<32x1xi1>
    %14 = vector.broadcast %2 : i32 to vector<32x1xi32>
    %15 = arith.addi %4, %14 : vector<32x1xi32>
    %16 = arith.select %13, %15, %4 : vector<32x1xi1>, vector<32x1xi32>
    %c0_i32_3 = arith.constant 0 : i32
    %17 = vector.broadcast %c0_i32_3 : i32 to vector<32x1xi32>
    %18 = arith.cmpi eq, %16, %17 : vector<32x1xi32>
    %c15_i32 = arith.constant 15 : i32
    %19 = vector.broadcast %c15_i32 : i32 to vector<32x1xi32>
    %20 = arith.cmpi eq, %16, %19 : vector<32x1xi32>
    %c0 = arith.constant 0 : index
    %c0_4 = arith.constant 0 : index
    %c0_5 = arith.constant 0 : index
    %21 = vector.load %arg1[%c0, %c0_4, %c0_5] : memref<1x32x128xf32, #tpu.memory_space<vmem>>, vector<1x32x128xf32>
    %22 = vector.shape_cast %21 : vector<1x32x128xf32> to vector<32x128xf32>
    %c0_6 = arith.constant 0 : index
    %c0_7 = arith.constant 0 : index
    %23 = vector.load %arg3[%c0_6, %c0_7] : memref<1x128xf32, #tpu.memory_space<vmem>>, vector<1x128xf32>
    %c0_8 = arith.constant 0 : index
    %c0_9 = arith.constant 0 : index
    %24 = vector.load %arg4[%c0_8, %c0_9] : memref<1x128xf32, #tpu.memory_space<vmem>>, vector<1x128xf32>
    %c0_10 = arith.constant 0 : index
    %c0_11 = arith.constant 0 : index
    %25 = vector.load %arg12[%c0_10, %c0_11] : memref<2x32xf32, #tpu.memory_space<vmem>>, vector<2x32xf32>
    %cst = arith.constant dense<0.000000e+00> : vector<2x128xf32>
    %26 = tpu.matmul %25, %22, %cst {dimension_numbers = #tpu.dot_dimension_numbers<[1], [0], [0], [1], [0, 0, 1, 1], [], []>} : vector<2x32xf32>, vector<32x128xf32>, vector<2x128xf32> -> vector<2x128xf32>
    %c0_12 = arith.constant 0 : index
    %c0_13 = arith.constant 0 : index
    %27 = vector.load %arg12[%c0_12, %c0_13] : memref<2x32xf32, #tpu.memory_space<vmem>>, vector<2x32xf32>
    %28 = arith.mulf %22, %22 : vector<32x128xf32>
    %cst_14 = arith.constant dense<0.000000e+00> : vector<2x128xf32>
    %29 = tpu.matmul %27, %28, %cst_14 {dimension_numbers = #tpu.dot_dimension_numbers<[1], [0], [0], [1], [0, 0, 1, 1], [], []>} : vector<2x32xf32>, vector<32x128xf32>, vector<2x128xf32> -> vector<2x128xf32>
    %30 = tpu.concatenate %26, %29 in 0 : vector<2x128xf32>, vector<2x128xf32> -> vector<4x128xf32>
    %c0_15 = arith.constant 0 : index
    %c0_16 = arith.constant 0 : index
    %31 = vector.load %arg5[%c0_15, %c0_16] : memref<128x128xf32, #tpu.memory_space<vmem>>, vector<128x128xf32>
    %cst_17 = arith.constant dense<0.000000e+00> : vector<4x128xf32>
    %32 = tpu.matmul %30, %31, %cst_17 {dimension_numbers = #tpu.dot_dimension_numbers<[1], [0], [0], [1], [0, 0, 1, 1], [], []>} : vector<4x128xf32>, vector<128x128xf32>, vector<4x128xf32> -> vector<4x128xf32>
    %33 = vector.extract_strided_slice %32 {offsets = [0, 0], sizes = [2, 128], strides = [1, 1]} : vector<4x128xf32> to vector<2x128xf32>
    %34 = vector.extract_strided_slice %32 {offsets = [2, 0], sizes = [2, 128], strides = [1, 1]} : vector<4x128xf32> to vector<2x128xf32>
    %35 = arith.mulf %33, %33 : vector<2x128xf32>
    %36 = arith.subf %34, %35 : vector<2x128xf32>
    %cst_18 = arith.constant 0.000000e+00 : f32
    %37 = vector.broadcast %cst_18 : f32 to vector<2x128xf32>
    %38 = arith.maximumf %36, %37 : vector<2x128xf32>
    %cst_19 = arith.constant 9.99999974E-6 : f32
    %39 = vector.broadcast %cst_19 : f32 to vector<2x128xf32>
    %40 = arith.addf %38, %39 : vector<2x128xf32>
    %41 = math.rsqrt %40 : vector<2x128xf32>
    %42 = vector.broadcast %23 : vector<1x128xf32> to vector<2x128xf32>
    %43 = arith.mulf %41, %42 : vector<2x128xf32>
    %44 = arith.mulf %33, %43 : vector<2x128xf32>
    %45 = vector.broadcast %24 : vector<1x128xf32> to vector<2x128xf32>
    %46 = arith.subf %45, %44 : vector<2x128xf32>
    %c0_20 = arith.constant 0 : index
    %c0_21 = arith.constant 0 : index
    %47 = vector.load %arg13[%c0_20, %c0_21] : memref<32x2xf32, #tpu.memory_space<vmem>>, vector<32x2xf32>
    %48 = tpu.concatenate %43, %46 in 1 : vector<2x128xf32>, vector<2x128xf32> -> vector<2x256xf32>
    %cst_22 = arith.constant dense<0.000000e+00> : vector<32x256xf32>
    %49 = tpu.matmul %47, %48, %cst_22 {dimension_numbers = #tpu.dot_dimension_numbers<[1], [0], [0], [1], [0, 0, 1, 1], [], []>} : vector<32x2xf32>, vector<2x256xf32>, vector<32x256xf32> -> vector<32x256xf32>
    %50 = vector.extract_strided_slice %49 {offsets = [0, 0], sizes = [32, 128], strides = [1, 1]} : vector<32x256xf32> to vector<32x128xf32>
    %51 = arith.mulf %22, %50 : vector<32x128xf32>
    %52 = vector.extract_strided_slice %49 {offsets = [0, 128], sizes = [32, 128], strides = [1, 1]} : vector<32x256xf32> to vector<32x128xf32>
    %53 = arith.addf %51, %52 : vector<32x128xf32>
    %54 = arith.negf %53 : vector<32x128xf32>
    %55 = math.exp %54 : vector<32x128xf32>
    %cst_23 = arith.constant 1.000000e+00 : f32
    %56 = vector.broadcast %cst_23 : f32 to vector<32x128xf32>
    %57 = arith.addf %56, %55 : vector<32x128xf32>
    %58 = arith.divf %56, %57 : vector<32x128xf32>
    %59 = arith.mulf %53, %58 : vector<32x128xf32>
    %c1_i32_24 = arith.constant 1 : i32
    %60 = tpu.dynamic_rotate %59 by %c1_i32_24 dim 0 : vector<32x128xf32>, i32 -> vector<32x128xf32>
    %cst_25 = arith.constant 0.000000e+00 : f32
    %61 = vector.shape_cast %18 : vector<32x1xi1> to vector<32x1xi1>
    %62 = vector.broadcast %61 : vector<32x1xi1> to vector<32x128xi1>
    %63 = vector.broadcast %cst_25 : f32 to vector<32x128xf32>
    %64 = arith.select %62, %63, %60 : vector<32x128xi1>, vector<32x128xf32>
    %c31_i32 = arith.constant 31 : i32
    %65 = tpu.dynamic_rotate %59 by %c31_i32 dim 0 : vector<32x128xf32>, i32 -> vector<32x128xf32>
    %cst_26 = arith.constant 0.000000e+00 : f32
    %66 = vector.shape_cast %20 : vector<32x1xi1> to vector<32x1xi1>
    %67 = vector.broadcast %66 : vector<32x1xi1> to vector<32x128xi1>
    %68 = vector.broadcast %cst_26 : f32 to vector<32x128xf32>
    %69 = arith.select %67, %68, %65 : vector<32x128xi1>, vector<32x128xf32>
    %70 = tpu.concatenate %64, %59, %69 in 1 : vector<32x128xf32>, vector<32x128xf32>, vector<32x128xf32> -> vector<32x384xf32>
    %71 = arith.truncf %70 : vector<32x384xf32> to vector<32x384xbf16>
    %c0_27 = arith.constant 0 : index
    %c0_28 = arith.constant 0 : index
    %72 = vector.load %arg6[%c0_27, %c0_28] : memref<384x256xbf16, #tpu.memory_space<vmem>>, vector<384x256xbf16>
    %cst_29 = arith.constant dense<0.000000e+00> : vector<32x256xf32>
    %73 = tpu.matmul %71, %72, %cst_29 {dimension_numbers = #tpu.dot_dimension_numbers<[1], [0], [0], [1], [0, 0, 1, 1], [], []>} : vector<32x384xbf16>, vector<384x256xbf16>, vector<32x256xf32> -> vector<32x256xf32>
    %c0_30 = arith.constant 0 : index
    %c0_31 = arith.constant 0 : index
    %74 = vector.load %arg13[%c0_30, %c0_31] : memref<32x2xf32, #tpu.memory_space<vmem>>, vector<32x2xf32>
    %c0_32 = arith.constant 0 : index
    %c0_33 = arith.constant 0 : index
    %c0_34 = arith.constant 0 : index
    %75 = vector.load %arg2[%c0_32, %c0_33, %c0_34] : memref<1x2x256xf32, #tpu.memory_space<vmem>>, vector<1x2x256xf32>
    %76 = vector.shape_cast %75 : vector<1x2x256xf32> to vector<2x256xf32>
    %cst_35 = arith.constant dense<0.000000e+00> : vector<32x256xf32>
    %77 = tpu.matmul %74, %76, %cst_35 {dimension_numbers = #tpu.dot_dimension_numbers<[1], [0], [0], [1], [0, 0, 1, 1], [], []>} : vector<32x2xf32>, vector<2x256xf32>, vector<32x256xf32> -> vector<32x256xf32>
    %78 = arith.addf %73, %77 : vector<32x256xf32>
    %c0_36 = arith.constant 0 : index
    %c0_37 = arith.constant 0 : index
    %79 = vector.load %arg7[%c0_36, %c0_37] : memref<1x256xf32, #tpu.memory_space<vmem>>, vector<1x256xf32>
    %c0_38 = arith.constant 0 : index
    %c0_39 = arith.constant 0 : index
    %80 = vector.load %arg8[%c0_38, %c0_39] : memref<1x256xf32, #tpu.memory_space<vmem>>, vector<1x256xf32>
    %c0_40 = arith.constant 0 : index
    %c0_41 = arith.constant 0 : index
    %81 = vector.load %arg12[%c0_40, %c0_41] : memref<2x32xf32, #tpu.memory_space<vmem>>, vector<2x32xf32>
    %cst_42 = arith.constant dense<0.000000e+00> : vector<2x256xf32>
    %82 = tpu.matmul %81, %78, %cst_42 {dimension_numbers = #tpu.dot_dimension_numbers<[1], [0], [0], [1], [0, 0, 1, 1], [], []>} : vector<2x32xf32>, vector<32x256xf32>, vector<2x256xf32> -> vector<2x256xf32>
    %c0_43 = arith.constant 0 : index
    %c0_44 = arith.constant 0 : index
    %83 = vector.load %arg12[%c0_43, %c0_44] : memref<2x32xf32, #tpu.memory_space<vmem>>, vector<2x32xf32>
    %84 = arith.mulf %78, %78 : vector<32x256xf32>
    %cst_45 = arith.constant dense<0.000000e+00> : vector<2x256xf32>
    %85 = tpu.matmul %83, %84, %cst_45 {dimension_numbers = #tpu.dot_dimension_numbers<[1], [0], [0], [1], [0, 0, 1, 1], [], []>} : vector<2x32xf32>, vector<32x256xf32>, vector<2x256xf32> -> vector<2x256xf32>
    %86 = tpu.concatenate %82, %85 in 0 : vector<2x256xf32>, vector<2x256xf32> -> vector<4x256xf32>
    %c0_46 = arith.constant 0 : index
    %c0_47 = arith.constant 0 : index
    %87 = vector.load %arg9[%c0_46, %c0_47] : memref<256x256xf32, #tpu.memory_space<vmem>>, vector<256x256xf32>
    %cst_48 = arith.constant dense<0.000000e+00> : vector<4x256xf32>
    %88 = tpu.matmul %86, %87, %cst_48 {dimension_numbers = #tpu.dot_dimension_numbers<[1], [0], [0], [1], [0, 0, 1, 1], [], []>} : vector<4x256xf32>, vector<256x256xf32>, vector<4x256xf32> -> vector<4x256xf32>
    %89 = vector.extract_strided_slice %88 {offsets = [0, 0], sizes = [2, 256], strides = [1, 1]} : vector<4x256xf32> to vector<2x256xf32>
    %90 = vector.extract_strided_slice %88 {offsets = [2, 0], sizes = [2, 256], strides = [1, 1]} : vector<4x256xf32> to vector<2x256xf32>
    %91 = arith.mulf %89, %89 : vector<2x256xf32>
    %92 = arith.subf %90, %91 : vector<2x256xf32>
    %cst_49 = arith.constant 0.000000e+00 : f32
    %93 = vector.broadcast %cst_49 : f32 to vector<2x256xf32>
    %94 = arith.maximumf %92, %93 : vector<2x256xf32>
    %cst_50 = arith.constant 9.99999974E-6 : f32
    %95 = vector.broadcast %cst_50 : f32 to vector<2x256xf32>
    %96 = arith.addf %94, %95 : vector<2x256xf32>
    %97 = math.rsqrt %96 : vector<2x256xf32>
    %98 = vector.broadcast %79 : vector<1x256xf32> to vector<2x256xf32>
    %99 = arith.mulf %97, %98 : vector<2x256xf32>
    %100 = arith.mulf %89, %99 : vector<2x256xf32>
    %101 = vector.broadcast %80 : vector<1x256xf32> to vector<2x256xf32>
    %102 = arith.subf %101, %100 : vector<2x256xf32>
    %c0_51 = arith.constant 0 : index
    %c0_52 = arith.constant 0 : index
    %103 = vector.load %arg13[%c0_51, %c0_52] : memref<32x2xf32, #tpu.memory_space<vmem>>, vector<32x2xf32>
    %104 = tpu.concatenate %99, %102 in 1 : vector<2x256xf32>, vector<2x256xf32> -> vector<2x512xf32>
    %cst_53 = arith.constant dense<0.000000e+00> : vector<32x512xf32>
    %105 = tpu.matmul %103, %104, %cst_53 {dimension_numbers = #tpu.dot_dimension_numbers<[1], [0], [0], [1], [0, 0, 1, 1], [], []>} : vector<32x2xf32>, vector<2x512xf32>, vector<32x512xf32> -> vector<32x512xf32>
    %106 = vector.extract_strided_slice %105 {offsets = [0, 0], sizes = [32, 256], strides = [1, 1]} : vector<32x512xf32> to vector<32x256xf32>
    %107 = arith.mulf %78, %106 : vector<32x256xf32>
    %108 = vector.extract_strided_slice %105 {offsets = [0, 256], sizes = [32, 256], strides = [1, 1]} : vector<32x512xf32> to vector<32x256xf32>
    %109 = arith.addf %107, %108 : vector<32x256xf32>
    %110 = arith.negf %109 : vector<32x256xf32>
    %111 = math.exp %110 : vector<32x256xf32>
    %cst_54 = arith.constant 1.000000e+00 : f32
    %112 = vector.broadcast %cst_54 : f32 to vector<32x256xf32>
    %113 = arith.addf %112, %111 : vector<32x256xf32>
    %114 = arith.divf %112, %113 : vector<32x256xf32>
    %115 = arith.mulf %109, %114 : vector<32x256xf32>
    %c1_i32_55 = arith.constant 1 : i32
    %116 = tpu.dynamic_rotate %115 by %c1_i32_55 dim 0 : vector<32x256xf32>, i32 -> vector<32x256xf32>
    %cst_56 = arith.constant 0.000000e+00 : f32
    %117 = vector.shape_cast %18 : vector<32x1xi1> to vector<32x1xi1>
    %118 = vector.broadcast %117 : vector<32x1xi1> to vector<32x256xi1>
    %119 = vector.broadcast %cst_56 : f32 to vector<32x256xf32>
    %120 = arith.select %118, %119, %116 : vector<32x256xi1>, vector<32x256xf32>
    %c31_i32_57 = arith.constant 31 : i32
    %121 = tpu.dynamic_rotate %115 by %c31_i32_57 dim 0 : vector<32x256xf32>, i32 -> vector<32x256xf32>
    %cst_58 = arith.constant 0.000000e+00 : f32
    %122 = vector.shape_cast %20 : vector<32x1xi1> to vector<32x1xi1>
    %123 = vector.broadcast %122 : vector<32x1xi1> to vector<32x256xi1>
    %124 = vector.broadcast %cst_58 : f32 to vector<32x256xf32>
    %125 = arith.select %123, %124, %121 : vector<32x256xi1>, vector<32x256xf32>
    %126 = tpu.concatenate %120, %115, %125 in 1 : vector<32x256xf32>, vector<32x256xf32>, vector<32x256xf32> -> vector<32x768xf32>
    %127 = arith.truncf %126 : vector<32x768xf32> to vector<32x768xbf16>
    %c0_59 = arith.constant 0 : index
    %c0_60 = arith.constant 0 : index
    %128 = vector.load %arg10[%c0_59, %c0_60] : memref<768x256xbf16, #tpu.memory_space<vmem>>, vector<768x256xbf16>
    %cst_61 = arith.constant dense<0.000000e+00> : vector<32x256xf32>
    %129 = tpu.matmul %127, %128, %cst_61 {dimension_numbers = #tpu.dot_dimension_numbers<[1], [0], [0], [1], [0, 0, 1, 1], [], []>} : vector<32x768xbf16>, vector<768x256xbf16>, vector<32x256xf32> -> vector<32x256xf32>
    %130 = arith.truncf %22 : vector<32x128xf32> to vector<32x128xbf16>
    %c0_62 = arith.constant 0 : index
    %c0_63 = arith.constant 0 : index
    %131 = vector.load %arg14[%c0_62, %c0_63] : memref<128x256xbf16, #tpu.memory_space<vmem>>, vector<128x256xbf16>
    %cst_64 = arith.constant dense<0.000000e+00> : vector<32x256xf32>
    %132 = tpu.matmul %130, %131, %cst_64 {dimension_numbers = #tpu.dot_dimension_numbers<[1], [0], [0], [1], [0, 0, 1, 1], [], []>} : vector<32x128xbf16>, vector<128x256xbf16>, vector<32x256xf32> -> vector<32x256xf32>
    %133 = arith.addf %129, %132 : vector<32x256xf32>
    %c0_65 = arith.constant 0 : index
    %c0_66 = arith.constant 0 : index
    %134 = vector.load %arg11[%c0_65, %c0_66] : memref<1x256xf32, #tpu.memory_space<vmem>>, vector<1x256xf32>
    %135 = vector.broadcast %134 : vector<1x256xf32> to vector<32x256xf32>
    %136 = arith.addf %133, %135 : vector<32x256xf32>
    %c0_67 = arith.constant 0 : index
    %c0_68 = arith.constant 0 : index
    %c0_69 = arith.constant 0 : index
    %137 = vector.load %arg15[%c0_67, %c0_68, %c0_69] : memref<1x32x256xf32, #tpu.memory_space<vmem>>, vector<1x32x256xf32>
    %138 = vector.shape_cast %137 : vector<1x32x256xf32> to vector<32x256xf32>
    %139 = vector.shape_cast %136 : vector<32x256xf32> to vector<1x32x256xf32>
    tpu.vector_store %arg15[%c0_67, %c0_68, %c0_69], %139 {strides = array<i32>} : memref<1x32x256xf32, #tpu.memory_space<vmem>>, vector<1x32x256xf32>,
    return
  }
  func.func @transform_0(%arg0: i32) -> (i32, i32, i32) {
    %c0_i32 = arith.constant 0 : i32
    %c0_i32_0 = arith.constant 0 : i32
    %c0_i32_1 = arith.constant 0 : i32
    return %arg0, %c0_i32, %c0_i32_0 : i32, i32, i32
  }
  func.func @transform_1(%arg0: i32) -> (i32, i32, i32) {
    %c0_i32 = arith.constant 0 : i32
    %c0_i32_0 = arith.constant 0 : i32
    %c0_i32_1 = arith.constant 0 : i32
    return %arg0, %c0_i32, %c0_i32_0 : i32, i32, i32
  }
  func.func @transform_2(%arg0: i32) -> (i32, i32) {
    %c0_i32 = arith.constant 0 : i32
    %c0_i32_0 = arith.constant 0 : i32
    %c0_i32_1 = arith.constant 0 : i32
    return %c0_i32, %c0_i32_0 : i32, i32
  }
  func.func @transform_3(%arg0: i32) -> (i32, i32) {
    %c0_i32 = arith.constant 0 : i32
    %c0_i32_0 = arith.constant 0 : i32
    %c0_i32_1 = arith.constant 0 : i32
    return %c0_i32, %c0_i32_0 : i32, i32
  }
  func.func @transform_4(%arg0: i32) -> (i32, i32) {
    %c0_i32 = arith.constant 0 : i32
    %c0_i32_0 = arith.constant 0 : i32
    %c0_i32_1 = arith.constant 0 : i32
    return %c0_i32, %c0_i32_0 : i32, i32
  }
  func.func @transform_5(%arg0: i32) -> (i32, i32) {
    %c0_i32 = arith.constant 0 : i32
    %c0_i32_0 = arith.constant 0 : i32
    %c0_i32_1 = arith.constant 0 : i32
    return %c0_i32, %c0_i32_0 : i32, i32
  }
  func.func @transform_6(%arg0: i32) -> (i32, i32) {
    %c0_i32 = arith.constant 0 : i32
    %c0_i32_0 = arith.constant 0 : i32
    %c0_i32_1 = arith.constant 0 : i32
    return %c0_i32, %c0_i32_0 : i32, i32
  }
  func.func @transform_7(%arg0: i32) -> (i32, i32) {
    %c0_i32 = arith.constant 0 : i32
    %c0_i32_0 = arith.constant 0 : i32
    %c0_i32_1 = arith.constant 0 : i32
    return %c0_i32, %c0_i32_0 : i32, i32
  }
  func.func @transform_8(%arg0: i32) -> (i32, i32) {
    %c0_i32 = arith.constant 0 : i32
    %c0_i32_0 = arith.constant 0 : i32
    %c0_i32_1 = arith.constant 0 : i32
    return %c0_i32, %c0_i32_0 : i32, i32
  }
  func.func @transform_9(%arg0: i32) -> (i32, i32) {
    %c0_i32 = arith.constant 0 : i32
    %c0_i32_0 = arith.constant 0 : i32
    %c0_i32_1 = arith.constant 0 : i32
    return %c0_i32, %c0_i32_0 : i32, i32
  }
  func.func @transform_10(%arg0: i32) -> (i32, i32) {
    %c0_i32 = arith.constant 0 : i32
    %c0_i32_0 = arith.constant 0 : i32
    %c0_i32_1 = arith.constant 0 : i32
    return %c0_i32, %c0_i32_0 : i32, i32
  }
  func.func @transform_11(%arg0: i32) -> (i32, i32) {
    %c0_i32 = arith.constant 0 : i32
    %c0_i32_0 = arith.constant 0 : i32
    %c0_i32_1 = arith.constant 0 : i32
    return %c0_i32, %c0_i32_0 : i32, i32
  }
  func.func @transform_12(%arg0: i32) -> (i32, i32) {
    %c0_i32 = arith.constant 0 : i32
    %c0_i32_0 = arith.constant 0 : i32
    %c0_i32_1 = arith.constant 0 : i32
    return %c0_i32, %c0_i32_0 : i32, i32
  }
  func.func @transform_13(%arg0: i32) -> (i32, i32) {
    %c0_i32 = arith.constant 0 : i32
    %c0_i32_0 = arith.constant 0 : i32
    %c0_i32_1 = arith.constant 0 : i32
    return %c0_i32, %c0_i32_0 : i32, i32
  }
  func.func @transform_14(%arg0: i32) -> (i32, i32, i32) {
    %c0_i32 = arith.constant 0 : i32
    %c0_i32_0 = arith.constant 0 : i32
    %c0_i32_1 = arith.constant 0 : i32
    return %arg0, %c0_i32, %c0_i32_0 : i32, i32, i32
  }
}

</mosaic_0001>

<llo_original>
// kernel: tpu_custom_call.1
$region0: #{tpu_custom_call.1}
  #allocation0 [shape = 'u32[]', space=smem, size = 0x4, offset = 0x4, fixed_abs, tag = 'smem constant byte address 0x4 - core index']
  #allocation1 [shape = 'u32[72,128]{1,0:T(1,128)}', space=vmem, size = 0x9000, scoped, tag = 'internal scratch']
  %s0 = inlined_call_operand.hbm [shape: f32[2,32,128], index: 0, kind: input, shape index: {}]
  %s1 = inlined_call_operand.vmem [shape: f32[2,2,256], index: 1, kind: input, shape index: {}]
  %s2 = inlined_call_operand.vmem [shape: f32[1,128], index: 2, kind: input, shape index: {}]
  %s3 = inlined_call_operand.vmem [shape: f32[1,128], index: 3, kind: input, shape index: {}]
  %s4 = inlined_call_operand.hbm [shape: f32[128,128], index: 4, kind: input, shape index: {}]
  %s5 = inlined_call_operand.hbm [shape: bf16[384,256], index: 5, kind: input, shape index: {}]
  %s6 = inlined_call_operand.vmem [shape: f32[1,256], index: 6, kind: input, shape index: {}]
  %s7 = inlined_call_operand.vmem [shape: f32[1,256], index: 7, kind: input, shape index: {}]
  %s8 = inlined_call_operand.hbm [shape: f32[256,256], index: 8, kind: input, shape index: {}]
  %s9 = inlined_call_operand.hbm [shape: bf16[768,256], index: 9, kind: input, shape index: {}]
  %s10 = inlined_call_operand.vmem [shape: f32[1,256], index: 10, kind: input, shape index: {}]
  %s11 = inlined_call_operand.vmem [shape: f32[2,32], index: 11, kind: input, shape index: {}]
  %s12 = inlined_call_operand.vmem [shape: f32[32,2], index: 12, kind: input, shape index: {}]
  %s13 = inlined_call_operand.hbm [shape: bf16[128,256], index: 13, kind: input, shape index: {}]
  %s14 = inlined_call_operand.hbm [shape: f32[2,32,256], index: 14, kind: output, shape index: {}]
  %s15 = sld [smem:[#allocation0]]
  $region113: #{tpu_custom_call.1} parent=0
    _
  %s17 = ssub.s32 1, %s15
  %s18 = scalar_select 0, %s17, %s15
  $region1: #{tpu_custom_call.1} parent=0
    #allocation2 [shape = 'u8[32768]{0}', space=vmem, size = 0x8000, scoped, tag = 'input window, operand 0']
    #allocation3 [shape = 's32[2]{0}', space=sflag, size = 0x8, scoped, tag = 'scoped memory for tpu_custom_call.1']
    #allocation4 [shape = 's32[2]{0}', space=sflag, size = 0x8, scoped, tag = 'scoped memory for tpu_custom_call.1']
    #allocation5 [shape = 'u8[65536]{0}', space=vmem, size = 0x10000, scoped, tag = 'input window, operand 4, single buffered']
    #allocation6 [shape = 's32[1]{0}', space=sflag, size = 0x4, scoped, tag = 'scoped memory for tpu_custom_call.1']
    #allocation7 [shape = 'u8[196608]{0}', space=vmem, size = 0x30000, scoped, tag = 'input window, operand 5, single buffered']
    #allocation8 [shape = 'u8[262144]{0}', space=vmem, size = 0x40000, scoped, tag = 'input window, operand 8, single buffered']
    #allocation9 [shape = 's32[1]{0}', space=sflag, size = 0x4, scoped, tag = 'scoped memory for tpu_custom_call.1']
    #allocation10 [shape = 'u8[393216]{0}', space=vmem, size = 0x60000, scoped, tag = 'input window, operand 9, single buffered']
    #allocation11 [shape = 'u8[65536]{0}', space=vmem, size = 0x10000, scoped, tag = 'input window, operand 13, single buffered']
    #allocation12 [shape = 's32[1]{0}', space=sflag, size = 0x4, scoped, tag = 'scoped memory for tpu_custom_call.1']
    #allocation13 [shape = 'u8[65536]{0}', space=vmem, size = 0x10000, scoped, tag = 'output window, operand 0']
    %19 = vsyncpa [#allocation3], 0
    %s20 = scalar_lea.sflag [#allocation3], 1
    %21 = vsyncpa %s20, 0
    %22 = vsyncpa [#allocation6], 0
    %23 = vsyncpa [#allocation9], 0
    %24 = vsyncpa [#allocation12], 0
    %25 = vsyncpa [#allocation4], 0
    %s26 = scalar_lea.sflag [#allocation4], 1
    %27 = vsyncpa %s26, 0
    loop: start=0, step=1, limit=4
    $region2: #{tpu_custom_call.1} parent=1 // loop_pre_header
      _
    $region3: #{tpu_custom_call.1} parent=1 // loop_header
      %s29 = sphi 0, %s33
      %p30 = scmp.ge.s32.totalorder %s29, 4
      %s39 = sphi 0, %s41
      %s42 = sphi 0, %s39
      %s43 = sphi 0, %s42
      %s59 = sphi 0, %s43
      %s65 = sphi 0, %s67
      %s68 = sphi 0, %s65
      %s69 = sphi 0, %s68
      %s85 = sphi 0, %s69
      %s89 = sphi 0, %s89
      %s91 = sphi 0, %s89
      %s92 = sphi 0, %s91
      %s106 = sphi 0, %s92
      %s110 = sphi 0, %s110
      %s112 = sphi 0, %s110
      %s113 = sphi 0, %s112
      %s127 = sphi 0, %s113
      %s131 = sphi 0, %s131
      %s133 = sphi 0, %s131
      %s134 = sphi 0, %s133
      %s148 = sphi 0, %s134
      %s152 = sphi 0, %s152
      %s154 = sphi 0, %s152
      %s155 = sphi 0, %s154
      %s169 = sphi 0, %s155
      %s173 = sphi 0, %s173
      %s175 = sphi 0, %s173
      %s176 = sphi 0, %s175
      %s190 = sphi 0, %s176
      %s194 = sphi 0, %s194
      %s196 = sphi 0, %s194
      %s197 = sphi 0, %s196
      %s211 = sphi 0, %s197
      %s215 = sphi 0, %s215
      %s217 = sphi 0, %s215
      %s218 = sphi 0, %s217
      %s232 = sphi 0, %s218
      %s236 = sphi 0, %s236
      %s238 = sphi 0, %s236
      %s239 = sphi 0, %s238
      %s253 = sphi 0, %s239
      %s257 = sphi 0, %s257
      %s259 = sphi 0, %s257
      %s260 = sphi 0, %s259
      %s274 = sphi 0, %s260
      %s278 = sphi 0, %s278
      %s280 = sphi 0, %s278
      %s281 = sphi 0, %s280
      %s295 = sphi 0, %s281
      %s299 = sphi 0, %s299
      %s301 = sphi 0, %s299
      %s302 = sphi 0, %s301
      %s316 = sphi 0, %s302
      %s320 = sphi 0, %s320
      %s322 = sphi 0, %s320
      %s323 = sphi 0, %s322
      %s337 = sphi 0, %s323
      %s343 = sphi 0, %s345
      %s346 = sphi 0, %s343
      %s347 = sphi 0, %s346
      %s363 = sphi 0, %s347
    $region4: #{tpu_custom_call.1} parent=1 // loop_header_branch
      %32 = sbr.rel (%p30) target = $region8
    $region5: #{tpu_custom_call.1} parent=1 // loop_body
      %s34 = ssub.s32 %s29, 1
      %s35 = ssub.s32 %s29, 2
      %s36 = sadd.s32 %s29, 1
      %s37 = ssub.s32 %s29, %s36
      %p38 = scmp.eq.s32.totalorder %s37, 0
      %s40 = sadd.s32 %s39, 1
      %s41 = scalar_select %p38, %s39, %s40
      %p44 = pneg %p38
      %p45 = scmp.eq.s32.totalorder %s29, 1
      %p46 = por %p44, %p45
      %p47 = scmp.ne.s32.totalorder %s39, %s42
      %p48 = scmp.eq.s32.totalorder %s29, 0
      %p49 = por %p47, %p48
      %p50 = scmp.ne.s32.totalorder %s39, %s42
      %p51 = scmp.eq.s32.totalorder %s34, 1
      %p52 = por %p50, %p51
      %p53 = scmp.ne.s32.totalorder %s42, %s43
      %p54 = scmp.eq.s32.totalorder %s34, 0
      %p55 = por %p53, %p54
      %p56 = scmp.ne.s32.totalorder %s42, %s43
      %p57 = scmp.eq.s32.totalorder %s35, 1
      %p58 = por %p56, %p57
      %p60 = scmp.ne.s32.totalorder %s43, %s59
      %p61 = scmp.eq.s32.totalorder %s35, 0
      %p62 = por %p60, %p61
      %s63 = ssub.s32 %s29, %s36
      %p64 = scmp.eq.s32.totalorder %s63, 0
      %s66 = sadd.s32 %s65, 1
      %s67 = scalar_select %p64, %s65, %s66
      %p70 = pneg %p64
      %p71 = scmp.eq.s32.totalorder %s29, 1
      %p72 = por %p70, %p71
      %p73 = scmp.ne.s32.totalorder %s65, %s68
      %p74 = scmp.eq.s32.totalorder %s29, 0
      %p75 = por %p73, %p74
      %p76 = scmp.ne.s32.totalorder %s65, %s68
      %p77 = scmp.eq.s32.totalorder %s34, 1
      %p78 = por %p76, %p77
      %p79 = scmp.ne.s32.totalorder %s68, %s69
      %p80 = scmp.eq.s32.totalorder %s34, 0
      %p81 = por %p79, %p80
      %p82 = scmp.ne.s32.totalorder %s68, %s69
      %p83 = scmp.eq.s32.totalorder %s35, 1
      %p84 = por %p82, %p83
      %p86 = scmp.ne.s32.totalorder %s69, %s85
      %p87 = scmp.eq.s32.totalorder %s35, 0
      %p88 = por %p86, %p87
      %s90 = sadd.s32 %s89, 1
      %p93 = scmp.eq.s32.totalorder %s29, 1
      %p94 = scmp.ne.s32.totalorder %s89, %s91
      %p95 = scmp.eq.s32.totalorder %s29, 0
      %p96 = por %p94, %p95
      %p97 = scmp.ne.s32.totalorder %s89, %s91
      %p98 = scmp.eq.s32.totalorder %s34, 1
      %p99 = por %p97, %p98
      %p100 = scmp.ne.s32.totalorder %s91, %s92
      %p101 = scmp.eq.s32.totalorder %s34, 0
      %p102 = por %p100, %p101
      %p103 = scmp.ne.s32.totalorder %s91, %s92
      %p104 = scmp.eq.s32.totalorder %s35, 1
      %p105 = por %p103, %p104
      %p107 = scmp.ne.s32.totalorder %s92, %s106
      %p108 = scmp.eq.s32.totalorder %s35, 0
      %p109 = por %p107, %p108
      %s111 = sadd.s32 %s110, 1
      %p114 = scmp.eq.s32.totalorder %s29, 1
      %p115 = scmp.ne.s32.totalorder %s110, %s112
      %p116 = scmp.eq.s32.totalorder %s29, 0
      %p117 = por %p115, %p116
      %p118 = scmp.ne.s32.totalorder %s110, %s112
      %p119 = scmp.eq.s32.totalorder %s34, 1
      %p120 = por %p118, %p119
      %p121 = scmp.ne.s32.totalorder %s112, %s113
      %p122 = scmp.eq.s32.totalorder %s34, 0
      %p123 = por %p121, %p122
      %p124 = scmp.ne.s32.totalorder %s112, %s113
      %p125 = scmp.eq.s32.totalorder %s35, 1
      %p126 = por %p124, %p125
      %p128 = scmp.ne.s32.totalorder %s113, %s127
      %p129 = scmp.eq.s32.totalorder %s35, 0
      %p130 = por %p128, %p129
      %s132 = sadd.s32 %s131, 1
      %p135 = scmp.eq.s32.totalorder %s29, 1
      %p136 = scmp.ne.s32.totalorder %s131, %s133
      %p137 = scmp.eq.s32.totalorder %s29, 0
      %p138 = por %p136, %p137
      %p139 = scmp.ne.s32.totalorder %s131, %s133
      %p140 = scmp.eq.s32.totalorder %s34, 1
      %p141 = por %p139, %p140
      %p142 = scmp.ne.s32.totalorder %s133, %s134
      %p143 = scmp.eq.s32.totalorder %s34, 0
      %p144 = por %p142, %p143
      %p145 = scmp.ne.s32.totalorder %s133, %s134
      %p146 = scmp.eq.s32.totalorder %s35, 1
      %p147 = por %p145, %p146
      %p149 = scmp.ne.s32.totalorder %s134, %s148
      %p150 = scmp.eq.s32.totalorder %s35, 0
      %p151 = por %p149, %p150
      %s153 = sadd.s32 %s152, 1
      %p156 = scmp.eq.s32.totalorder %s29, 1
      %p157 = scmp.ne.s32.totalorder %s152, %s154
      %p158 = scmp.eq.s32.totalorder %s29, 0
      %p159 = por %p157, %p158
      %p160 = scmp.ne.s32.totalorder %s152, %s154
      %p161 = scmp.eq.s32.totalorder %s34, 1
      %p162 = por %p160, %p161
      %p163 = scmp.ne.s32.totalorder %s154, %s155
      %p164 = scmp.eq.s32.totalorder %s34, 0
      %p165 = por %p163, %p164
      %p166 = scmp.ne.s32.totalorder %s154, %s155
      %p167 = scmp.eq.s32.totalorder %s35, 1
      %p168 = por %p166, %p167
      %p170 = scmp.ne.s32.totalorder %s155, %s169
      %p171 = scmp.eq.s32.totalorder %s35, 0
      %p172 = por %p170, %p171
      %s174 = sadd.s32 %s173, 1
      %p177 = scmp.eq.s32.totalorder %s29, 1
      %p178 = scmp.ne.s32.totalorder %s173, %s175
      %p179 = scmp.eq.s32.totalorder %s29, 0
      %p180 = por %p178, %p179
      %p181 = scmp.ne.s32.totalorder %s173, %s175
      %p182 = scmp.eq.s32.totalorder %s34, 1
      %p183 = por %p181, %p182
      %p184 = scmp.ne.s32.totalorder %s175, %s176
      %p185 = scmp.eq.s32.totalorder %s34, 0
      %p186 = por %p184, %p185
      %p187 = scmp.ne.s32.totalorder %s175, %s176
      %p188 = scmp.eq.s32.totalorder %s35, 1
      %p189 = por %p187, %p188
      %p191 = scmp.ne.s32.totalorder %s176, %s190
      %p192 = scmp.eq.s32.totalorder %s35, 0
      %p193 = por %p191, %p192
      %s195 = sadd.s32 %s194, 1
      %p198 = scmp.eq.s32.totalorder %s29, 1
      %p199 = scmp.ne.s32.totalorder %s194, %s196
      %p200 = scmp.eq.s32.totalorder %s29, 0
      %p201 = por %p199, %p200
      %p202 = scmp.ne.s32.totalorder %s194, %s196
      %p203 = scmp.eq.s32.totalorder %s34, 1
      %p204 = por %p202, %p203
      %p205 = scmp.ne.s32.totalorder %s196, %s197
      %p206 = scmp.eq.s32.totalorder %s34, 0
      %p207 = por %p205, %p206
      %p208 = scmp.ne.s32.totalorder %s196, %s197
      %p209 = scmp.eq.s32.totalorder %s35, 1
      %p210 = por %p208, %p209
      %p212 = scmp.ne.s32.totalorder %s197, %s211
      %p213 = scmp.eq.s32.totalorder %s35, 0
      %p214 = por %p212, %p213
      %s216 = sadd.s32 %s215, 1
      %p219 = scmp.eq.s32.totalorder %s29, 1
      %p220 = scmp.ne.s32.totalorder %s215, %s217
      %p221 = scmp.eq.s32.totalorder %s29, 0
      %p222 = por %p220, %p221
      %p223 = scmp.ne.s32.totalorder %s215, %s217
      %p224 = scmp.eq.s32.totalorder %s34, 1
      %p225 = por %p223, %p224
      %p226 = scmp.ne.s32.totalorder %s217, %s218
      %p227 = scmp.eq.s32.totalorder %s34, 0
      %p228 = por %p226, %p227
      %p229 = scmp.ne.s32.totalorder %s217, %s218
      %p230 = scmp.eq.s32.totalorder %s35, 1
      %p231 = por %p229, %p230
      %p233 = scmp.ne.s32.totalorder %s218, %s232
      %p234 = scmp.eq.s32.totalorder %s35, 0
      %p235 = por %p233, %p234
      %s237 = sadd.s32 %s236, 1
      %p240 = scmp.eq.s32.totalorder %s29, 1
      %p241 = scmp.ne.s32.totalorder %s236, %s238
      %p242 = scmp.eq.s32.totalorder %s29, 0
      %p243 = por %p241, %p242
      %p244 = scmp.ne.s32.totalorder %s236, %s238
      %p245 = scmp.eq.s32.totalorder %s34, 1
      %p246 = por %p244, %p245
      %p247 = scmp.ne.s32.totalorder %s238, %s239
      %p248 = scmp.eq.s32.totalorder %s34, 0
      %p249 = por %p247, %p248
      %p250 = scmp.ne.s32.totalorder %s238, %s239
      %p251 = scmp.eq.s32.totalorder %s35, 1
      %p252 = por %p250, %p251
      %p254 = scmp.ne.s32.totalorder %s239, %s253
      %p255 = scmp.eq.s32.totalorder %s35, 0
      %p256 = por %p254, %p255
      %s258 = sadd.s32 %s257, 1
      %p261 = scmp.eq.s32.totalorder %s29, 1
      %p262 = scmp.ne.s32.totalorder %s257, %s259
      %p263 = scmp.eq.s32.totalorder %s29, 0
      %p264 = por %p262, %p263
      %p265 = scmp.ne.s32.totalorder %s257, %s259
      %p266 = scmp.eq.s32.totalorder %s34, 1
      %p267 = por %p265, %p266
      %p268 = scmp.ne.s32.totalorder %s259, %s260
      %p269 = scmp.eq.s32.totalorder %s34, 0
      %p270 = por %p268, %p269
      %p271 = scmp.ne.s32.totalorder %s259, %s260
      %p272 = scmp.eq.s32.totalorder %s35, 1
      %p273 = por %p271, %p272
      %p275 = scmp.ne.s32.totalorder %s260, %s274
      %p276 = scmp.eq.s32.totalorder %s35, 0
      %p277 = por %p275, %p276
      %s279 = sadd.s32 %s278, 1
      %p282 = scmp.eq.s32.totalorder %s29, 1
      %p283 = scmp.ne.s32.totalorder %s278, %s280
      %p284 = scmp.eq.s32.totalorder %s29, 0
      %p285 = por %p283, %p284
      %p286 = scmp.ne.s32.totalorder %s278, %s280
      %p287 = scmp.eq.s32.totalorder %s34, 1
      %p288 = por %p286, %p287
      %p289 = scmp.ne.s32.totalorder %s280, %s281
      %p290 = scmp.eq.s32.totalorder %s34, 0
      %p291 = por %p289, %p290
      %p292 = scmp.ne.s32.totalorder %s280, %s281
      %p293 = scmp.eq.s32.totalorder %s35, 1
      %p294 = por %p292, %p293
      %p296 = scmp.ne.s32.totalorder %s281, %s295
      %p297 = scmp.eq.s32.totalorder %s35, 0
      %p298 = por %p296, %p297
      %s300 = sadd.s32 %s299, 1
      %p303 = scmp.eq.s32.totalorder %s29, 1
      %p304 = scmp.ne.s32.totalorder %s299, %s301
      %p305 = scmp.eq.s32.totalorder %s29, 0
      %p306 = por %p304, %p305
      %p307 = scmp.ne.s32.totalorder %s299, %s301
      %p308 = scmp.eq.s32.totalorder %s34, 1
      %p309 = por %p307, %p308
      %p310 = scmp.ne.s32.totalorder %s301, %s302
      %p311 = scmp.eq.s32.totalorder %s34, 0
      %p312 = por %p310, %p311
      %p313 = scmp.ne.s32.totalorder %s301, %s302
      %p314 = scmp.eq.s32.totalorder %s35, 1
      %p315 = por %p313, %p314
      %p317 = scmp.ne.s32.totalorder %s302, %s316
      %p318 = scmp.eq.s32.totalorder %s35, 0
      %p319 = por %p317, %p318
      %s321 = sadd.s32 %s320, 1
      %p324 = scmp.eq.s32.totalorder %s29, 1
      %p325 = scmp.ne.s32.totalorder %s320, %s322
      %p326 = scmp.eq.s32.totalorder %s29, 0
      %p327 = por %p325, %p326
      %p328 = scmp.ne.s32.totalorder %s320, %s322
      %p329 = scmp.eq.s32.totalorder %s34, 1
      %p330 = por %p328, %p329
      %p331 = scmp.ne.s32.totalorder %s322, %s323
      %p332 = scmp.eq.s32.totalorder %s34, 0
      %p333 = por %p331, %p332
      %p334 = scmp.ne.s32.totalorder %s322, %s323
      %p335 = scmp.eq.s32.totalorder %s35, 1
      %p336 = por %p334, %p335
      %p338 = scmp.ne.s32.totalorder %s323, %s337
      %p339 = scmp.eq.s32.totalorder %s35, 0
      %p340 = por %p338, %p339
      %s341 = ssub.s32 %s29, %s36
      %p342 = scmp.eq.s32.totalorder %s341, 0
      %s344 = sadd.s32 %s343, 1
      %s345 = scalar_select %p342, %s343, %s344
      %p348 = pneg %p342
      %p349 = scmp.eq.s32.totalorder %s29, 1
      %p350 = por %p348, %p349
      %p351 = scmp.ne.s32.totalorder %s343, %s346
      %p352 = scmp.eq.s32.totalorder %s29, 0
      %p353 = por %p351, %p352
      %p354 = scmp.ne.s32.totalorder %s343, %s346
      %p355 = scmp.eq.s32.totalorder %s34, 1
      %p356 = por %p354, %p355
      %p357 = scmp.ne.s32.totalorder %s346, %s347
      %p358 = scmp.eq.s32.totalorder %s34, 0
      %p359 = por %p357, %p358
      %p360 = scmp.ne.s32.totalorder %s346, %s347
      %p361 = scmp.eq.s32.totalorder %s35, 1
      %p362 = por %p360, %p361
      %p364 = scmp.ne.s32.totalorder %s347, %s363
      %p365 = scmp.eq.s32.totalorder %s35, 0
      %p366 = por %p364, %p365
      %p367 = scmp.le.s32.totalorder 1, %s29
      %p368 = scmp.lt.s32.totalorder %s29, 3
      %p369 = pnand %p367, %p368
      %p370 = pneg %p369
      // Predicated region
      $region9: #{tpu_custom_call.1} parent=5 // pred_check
        _
      $region10: #{tpu_custom_call.1} parent=5 // pred_check_branch
        %372 = sbr.rel (%p369) target = $region12
      $region11: #{tpu_custom_call.1} parent=5 // pred_region
        %s373 = ssub.s32 %s29, 1
        // Predicated region
        $region13: #{tpu_custom_call.1} parent=11 // pred_check
          %p374 = pneg %p102
        $region14: #{tpu_custom_call.1} parent=11 // pred_check_branch
          %376 = sbr.rel (%p374) target = $region16
        $region15: #{tpu_custom_call.1} parent=11 // pred_region
          _
        $region16: #{tpu_custom_call.1} parent=11 // pred_fallthru
          _
        // Predicated region
        $region17: #{tpu_custom_call.1} parent=11 // pred_check
          %p377 = pneg %p123
        $region18: #{tpu_custom_call.1} parent=11 // pred_check_branch
          %379 = sbr.rel (%p377) target = $region20
        $region19: #{tpu_custom_call.1} parent=11 // pred_region
          _
        $region20: #{tpu_custom_call.1} parent=11 // pred_fallthru
          _
        // Predicated region
        $region21: #{tpu_custom_call.1} parent=11 // pred_check
          %p380 = pneg %p144
        $region22: #{tpu_custom_call.1} parent=11 // pred_check_branch
          %382 = sbr.rel (%p380) target = $region24
        $region23: #{tpu_custom_call.1} parent=11 // pred_region
          %384 = vsyncadd [#allocation6], 0
          %s385 = sshll.u32 %s4, 4
          %s386 = int_to_ptr.hbm [resolvable:$true] %s385
          %s387 = sshll.u32 [#allocation5], 4
          %s388 = int_to_ptr.vmem [resolvable:$true] %s387
          %393 = dma.hbm_to_vmem [thread:$0]  %s386, 2048, %s388, [#allocation6], 128, 128, 8
        $region24: #{tpu_custom_call.1} parent=11 // pred_fallthru
          _
        // Predicated region
        $region25: #{tpu_custom_call.1} parent=11 // pred_check
          %p394 = pneg %p165
        $region26: #{tpu_custom_call.1} parent=11 // pred_check_branch
          %396 = sbr.rel (%p394) target = $region28
        $region27: #{tpu_custom_call.1} parent=11 // pred_region
          %398 = vsyncadd [#allocation6], 0
          %s399 = sshll.u32 %s5, 4
          %s400 = int_to_ptr.hbm [resolvable:$true] %s399
          %s401 = sshll.u32 [#allocation7], 4
          %s402 = int_to_ptr.vmem [resolvable:$true] %s401
          %407 = dma.hbm_to_vmem [thread:$0]  %s400, 6144, %s402, [#allocation6], 128, 128, 8
        $region28: #{tpu_custom_call.1} parent=11 // pred_fallthru
          _
        // Predicated region
        $region29: #{tpu_custom_call.1} parent=11 // pred_check
          %p408 = pneg %p186
        $region30: #{tpu_custom_call.1} parent=11 // pred_check_branch
          %410 = sbr.rel (%p408) target = $region32
        $region31: #{tpu_custom_call.1} parent=11 // pred_region
          _
        $region32: #{tpu_custom_call.1} parent=11 // pred_fallthru
          _
        // Predicated region
        $region33: #{tpu_custom_call.1} parent=11 // pred_check
          %p411 = pneg %p207
        $region34: #{tpu_custom_call.1} parent=11 // pred_check_branch
          %413 = sbr.rel (%p411) target = $region36
        $region35: #{tpu_custom_call.1} parent=11 // pred_region
          _
        $region36: #{tpu_custom_call.1} parent=11 // pred_fallthru
          _
        // Predicated region
        $region37: #{tpu_custom_call.1} parent=11 // pred_check
          %p414 = pneg %p228
        $region38: #{tpu_custom_call.1} parent=11 // pred_check_branch
          %416 = sbr.rel (%p414) target = $region40
        $region39: #{tpu_custom_call.1} parent=11 // pred_region
          %418 = vsyncadd [#allocation9], 0
          %s419 = sshll.u32 %s8, 4
          %s420 = int_to_ptr.hbm [resolvable:$true] %s419
          %s421 = sshll.u32 [#allocation8], 4
          %s422 = int_to_ptr.vmem [resolvable:$true] %s421
          %427 = dma.hbm_to_vmem [thread:$0]  %s420, 8192, %s422, [#allocation9], 256, 256, 16
        $region40: #{tpu_custom_call.1} parent=11 // pred_fallthru
          _
        // Predicated region
        $region41: #{tpu_custom_call.1} parent=11 // pred_check
          %p428 = pneg %p249
        $region42: #{tpu_custom_call.1} parent=11 // pred_check_branch
          %430 = sbr.rel (%p428) target = $region44
        $region43: #{tpu_custom_call.1} parent=11 // pred_region
          %432 = vsyncadd [#allocation9], 0
          %s433 = sshll.u32 %s9, 4
          %s434 = int_to_ptr.hbm [resolvable:$true] %s433
          %s435 = sshll.u32 [#allocation10], 4
          %s436 = int_to_ptr.vmem [resolvable:$true] %s435
          %441 = dma.hbm_to_vmem [thread:$0]  %s434, 12288, %s436, [#allocation9], 128, 128, 8
        $region44: #{tpu_custom_call.1} parent=11 // pred_fallthru
          _
        // Predicated region
        $region45: #{tpu_custom_call.1} parent=11 // pred_check
          %p442 = pneg %p270
        $region46: #{tpu_custom_call.1} parent=11 // pred_check_branch
          %444 = sbr.rel (%p442) target = $region48
        $region47: #{tpu_custom_call.1} parent=11 // pred_region
          _
        $region48: #{tpu_custom_call.1} parent=11 // pred_fallthru
          _
        // Predicated region
        $region49: #{tpu_custom_call.1} parent=11 // pred_check
          %p445 = pneg %p291
        $region50: #{tpu_custom_call.1} parent=11 // pred_check_branch
          %447 = sbr.rel (%p445) target = $region52
        $region51: #{tpu_custom_call.1} parent=11 // pred_region
          _
        $region52: #{tpu_custom_call.1} parent=11 // pred_fallthru
          _
        // Predicated region
        $region53: #{tpu_custom_call.1} parent=11 // pred_check
          %p448 = pneg %p312
        $region54: #{tpu_custom_call.1} parent=11 // pred_check_branch
          %450 = sbr.rel (%p448) target = $region56
        $region55: #{tpu_custom_call.1} parent=11 // pred_region
          _
        $region56: #{tpu_custom_call.1} parent=11 // pred_fallthru
          _
        // Predicated region
        $region57: #{tpu_custom_call.1} parent=11 // pred_check
          %p451 = pneg %p333
        $region58: #{tpu_custom_call.1} parent=11 // pred_check_branch
          %453 = sbr.rel (%p451) target = $region60
        $region59: #{tpu_custom_call.1} parent=11 // pred_region
          %455 = vsyncadd [#allocation12], 0
          %s456 = sshll.u32 %s13, 4
          %s457 = int_to_ptr.hbm [resolvable:$true] %s456
          %s458 = sshll.u32 [#allocation11], 4
          %s459 = int_to_ptr.vmem [resolvable:$true] %s458
          %464 = dma.hbm_to_vmem [thread:$0]  %s457, 2048, %s459, [#allocation12], 128, 128, 8
        $region60: #{tpu_custom_call.1} parent=11 // pred_fallthru
          _
      $region12: #{tpu_custom_call.1} parent=5 // pred_fallthru
        _
      %p465 = scmp.lt.s32.totalorder %s29, 2
      // Predicated region
      $region61: #{tpu_custom_call.1} parent=5 // pred_check
        %p466 = pneg %p465
      $region62: #{tpu_custom_call.1} parent=5 // pred_check_branch
        %468 = sbr.rel (%p466) target = $region64
      $region63: #{tpu_custom_call.1} parent=5 // pred_region
        // Predicated region
        $region65: #{tpu_custom_call.1} parent=63 // pred_check
          %p469 = pneg %p49
        $region66: #{tpu_custom_call.1} parent=63 // pred_check_branch
          %471 = sbr.rel (%p469) target = $region68
        $region67: #{tpu_custom_call.1} parent=63 // pred_region
          %s472 = sand.u32 %s39, 1
          %s473 = scalar_lea.sflag [#allocation3], %s472
          %s474 = sand.u32 %s39, 1
          %s475 = smul.addr %s474, 32
          %s476 = scalar_lea.vmem [#allocation2], %s475
          %478 = vsyncadd %s473, 0
          %s479 = smul.addr %s29, 4
          %s480 = smul.addr %s479, 8
          %s481 = scalar_lea.hbm %s0, %s480
          %s482 = sshll.u32 %s481, 4
          %s483 = int_to_ptr.hbm [resolvable:$true] %s482
          %s484 = sshll.u32 %s476, 4
          %s485 = int_to_ptr.vmem [resolvable:$true] %s484
          %490 = dma.hbm_to_vmem [thread:$0]  %s483, 512, %s485, %s473, 128, 128, 8
        $region68: #{tpu_custom_call.1} parent=63 // pred_fallthru
          _
        // Predicated region
        $region69: #{tpu_custom_call.1} parent=63 // pred_check
          %p491 = pneg %p75
        $region70: #{tpu_custom_call.1} parent=63 // pred_check_branch
          %493 = sbr.rel (%p491) target = $region72
        $region71: #{tpu_custom_call.1} parent=63 // pred_region
          %p494 = scmp.lt.s32.totalorder %s29, 1
          %s495 = scalar_select %p494, %s29, 1
          %s496 = smul.addr %s495, 2
          %s497 = smul.addr %s496, 2
          %s498 = scalar_lea.vmem %s1, %s497
        $region72: #{tpu_custom_call.1} parent=63 // pred_fallthru
          _
      $region64: #{tpu_custom_call.1} parent=5 // pred_fallthru
        _
      %p499 = scmp.le.s32.totalorder 1, %s29
      %p500 = scmp.lt.s32.totalorder %s29, 3
      %p501 = pnand %p499, %p500
      %p502 = pneg %p501
      // Predicated region
      $region73: #{tpu_custom_call.1} parent=5 // pred_check
        _
      $region74: #{tpu_custom_call.1} parent=5 // pred_check_branch
        %504 = sbr.rel (%p501) target = $region76
      $region75: #{tpu_custom_call.1} parent=5 // pred_region
        %s505 = ssub.s32 %s29, 1
        %s506 = sand.u32 %s42, 1
        %s507 = scalar_lea.sflag [#allocation3], %s506
        %s508 = sand.u32 %s42, 1
        %s509 = smul.addr %s508, 32
        %s510 = scalar_lea.vmem [#allocation2], %s509
        // Predicated region
        $region77: #{tpu_custom_call.1} parent=75 // pred_check
          %p511 = pneg %p55
        $region78: #{tpu_custom_call.1} parent=75 // pred_check_branch
          %513 = sbr.rel (%p511) target = $region80
        $region79: #{tpu_custom_call.1} parent=75 // pred_region
          %515 = dma.done %s507, 512
        $region80: #{tpu_custom_call.1} parent=75 // pred_fallthru
          _
        // Predicated region
        $region81: #{tpu_custom_call.1} parent=75 // pred_check
          %p516 = pneg %p144
        $region82: #{tpu_custom_call.1} parent=75 // pred_check_branch
          %518 = sbr.rel (%p516) target = $region84
        $region83: #{tpu_custom_call.1} parent=75 // pred_region
          %520 = dma.done [#allocation6], 2048
        $region84: #{tpu_custom_call.1} parent=75 // pred_fallthru
          _
        // Predicated region
        $region85: #{tpu_custom_call.1} parent=75 // pred_check
          %p521 = pneg %p165
        $region86: #{tpu_custom_call.1} parent=75 // pred_check_branch
          %523 = sbr.rel (%p521) target = $region88
        $region87: #{tpu_custom_call.1} parent=75 // pred_region
          %525 = dma.done [#allocation6], 6144
        $region88: #{tpu_custom_call.1} parent=75 // pred_fallthru
          _
        // Predicated region
        $region89: #{tpu_custom_call.1} parent=75 // pred_check
          %p526 = pneg %p228
        $region90: #{tpu_custom_call.1} parent=75 // pred_check_branch
          %528 = sbr.rel (%p526) target = $region92
        $region91: #{tpu_custom_call.1} parent=75 // pred_region
          %530 = dma.done [#allocation9], 8192
        $region92: #{tpu_custom_call.1} parent=75 // pred_fallthru
          _
        // Predicated region
        $region93: #{tpu_custom_call.1} parent=75 // pred_check
          %p531 = pneg %p249
        $region94: #{tpu_custom_call.1} parent=75 // pred_check_branch
          %533 = sbr.rel (%p531) target = $region96
        $region95: #{tpu_custom_call.1} parent=75 // pred_region
          %535 = dma.done [#allocation9], 12288
        $region96: #{tpu_custom_call.1} parent=75 // pred_fallthru
          _
        // Predicated region
        $region97: #{tpu_custom_call.1} parent=75 // pred_check
          %p536 = pneg %p333
        $region98: #{tpu_custom_call.1} parent=75 // pred_check_branch
          %538 = sbr.rel (%p536) target = $region100
        $region99: #{tpu_custom_call.1} parent=75 // pred_region
          %540 = dma.done [#allocation12], 2048
        $region100: #{tpu_custom_call.1} parent=75 // pred_fallthru
          _
        %s541 = sand.u32 %s42, 1
        %s542 = scalar_lea.sflag [#allocation3], %s541
        %s543 = sand.u32 %s42, 1
        %s544 = smul.addr %s543, 32
        %s545 = scalar_lea.vmem [#allocation2], %s544
        %p546 = pneg %p55
        %p547 = pneg %p52
        %p548 = scmp.lt.s32.totalorder %s34, 1
        %s549 = scalar_select %p548, %s34, 1
        %s550 = smul.addr %s549, 2
        %s551 = smul.addr %s550, 2
        %s552 = scalar_lea.vmem %s1, %s551
        %p553 = pneg %p81
        %p554 = pneg %p78
        %p555 = pneg %p102
        %p556 = pneg %p99
        %p557 = pneg %p123
        %p558 = pneg %p120
        %p559 = pneg %p144
        %p560 = pneg %p141
        %p561 = pneg %p165
        %p562 = pneg %p162
        %p563 = pneg %p186
        %p564 = pneg %p183
        %p565 = pneg %p207
        %p566 = pneg %p204
        %p567 = pneg %p228
        %p568 = pneg %p225
        %p569 = pneg %p249
        %p570 = pneg %p246
        %p571 = pneg %p270
        %p572 = pneg %p267
        %p573 = pneg %p291
        %p574 = pneg %p288
        %p575 = pneg %p312
        %p576 = pneg %p309
        %p577 = pneg %p333
        %p578 = pneg %p330
        %p579 = pneg %p359
        %p580 = pneg %p356
        %s581 = sand.u32 %s346, 1
        %s582 = scalar_lea.sflag [#allocation4], %s581
        %s583 = sand.u32 %s346, 1
        %s584 = smul.addr %s583, 64
        %s585 = scalar_lea.vmem [#allocation13], %s584
        %p586 = scmp.lt.s32.totalorder %s34, 1
        %s587 = scalar_select %p586, %s34, 1
        %s588 = smul.addr %s587, 2
        %s589 = smul.addr %s588, 2
        %s590 = scalar_lea.vmem %s1, %s589
        %v591 = vlaneseq
        %v592 = vshrl.u32 %v591, 7
        %v593 = vadd.s32 %v592, 8
        %v594 = vadd.s32 %v592, 16
        %v595 = vadd.s32 %v592, 24
        %vm596 = vcmp.lt.s32.totalorder %v592, 0
        %v597 = vsub.s32 0, %v592
        %v598 = vsel %vm596, %v597, %v592
        %v599 = vshrl.u32 %v598, 4
        %v600 = vand.u32 %v598, 15
        %v601 = vsub.s32 0, %v600
        %v602 = vsel %vm596, %v601, %v600
        %vm603 = vcmp.lt.s32.totalorder %v593, 0
        %v604 = vsub.s32 0, %v593
        %v605 = vsel %vm603, %v604, %v593
        %v606 = vshrl.u32 %v605, 4
        %v607 = vand.u32 %v605, 15
        %v608 = vsub.s32 0, %v607
        %v609 = vsel %vm603, %v608, %v607
        %vm610 = vcmp.lt.s32.totalorder %v594, 0
        %v611 = vsub.s32 0, %v594
        %v612 = vsel %vm610, %v611, %v594
        %v613 = vshrl.u32 %v612, 4
        %v614 = vand.u32 %v612, 15
        %v615 = vsub.s32 0, %v614
        %v616 = vsel %vm610, %v615, %v614
        %vm617 = vcmp.lt.s32.totalorder %v595, 0
        %v618 = vsub.s32 0, %v595
        %v619 = vsel %vm617, %v618, %v595
        %v620 = vshrl.u32 %v619, 4
        %v621 = vand.u32 %v619, 15
        %v622 = vsub.s32 0, %v621
        %v623 = vsel %vm617, %v622, %v621
        %vm624 = vcmp.ne.s32.totalorder %v602, 0
        %vm625 = vcmp.ne.s32.totalorder %v609, 0
        %vm626 = vcmp.ne.s32.totalorder %v616, 0
        %vm627 = vcmp.ne.s32.totalorder %v623, 0
        %vm628 = vcmp.lt.s32.totalorder %v602, 0
        %vm629 = vcmp.lt.s32.totalorder %v609, 0
        %vm630 = vcmp.lt.s32.totalorder %v616, 0
        %vm631 = vcmp.lt.s32.totalorder %v623, 0
        %vm632 = vmand %vm628, %vm624
        %vm633 = vmand %vm629, %vm625
        %vm634 = vmand %vm630, %vm626
        %vm635 = vmand %vm631, %vm627
        %v636 = vadd.s32 %v602, 16
        %v637 = vadd.s32 %v609, 16
        %v638 = vadd.s32 %v616, 16
        %v639 = vadd.s32 %v623, 16
        %v640 = vsel %vm632, %v636, %v602
        %v641 = vsel %vm633, %v637, %v609
        %v642 = vsel %vm634, %v638, %v616
        %v643 = vsel %vm635, %v639, %v623
        %vm644 = vcmp.eq.s32.totalorder %v640, 0
        %vm645 = vcmp.eq.s32.totalorder %v641, 0
        %vm646 = vcmp.eq.s32.totalorder %v642, 0
        %vm647 = vcmp.eq.s32.totalorder %v643, 0
        %vm648 = vcmp.eq.s32.totalorder %v640, 15
        %vm649 = vcmp.eq.s32.totalorder %v641, 15
        %vm650 = vcmp.eq.s32.totalorder %v642, 15
        %vm651 = vcmp.eq.s32.totalorder %v643, 15
        %v652 = vld [vmem:[%s510] sm:$0xff]
        %v653 = vld [vmem:[%s510 + $0x8] sm:$0xff]
        %v654 = vld [vmem:[%s510 + $0x10] sm:$0xff]
        %v655 = vld [vmem:[%s510 + $0x18] sm:$0xff]
        %v656 = vld [vmem:[%s2] sm:$0x1]
        %v657 = vld [vmem:[%s3] sm:$0x1]
        %v658 = vld [vmem:[%s11] sm:$0x3]
        %vm659 = vcmask 261120
        %v661 = vsel %vm659, %v658, 0
        %663 = vmatpush.msra.mxu0 0.0
        %664 = vmatpush.msra.mxu0 0.0
        %665 = vmatpush.msra.mxu0 0.0
        %666 = vmatpush.msra.mxu0 0.0
        %667 = vmatpush.msra.mxu0 0.0
        %668 = vmatpush.msra.mxu0 0.0
        %669 = vmatpush.msra.mxu0 0.0
        %670 = vmatpush.msra.mxu0 0.0
        %671 = vmatpush.msra.mxu0 0.0
        %672 = vmatpush.msra.mxu0 0.0
        %673 = vmatpush.msra.mxu0 0.0
        %674 = vmatpush.msra.mxu0 0.0
        %675 = vmatpush.msra.mxu0 %v655
        %676 = vmatpush.msra.mxu0 %v654
        %677 = vmatpush.msra.mxu0 %v653
        %678 = vmatpush.msra.mxu0 %v652
        %679 = vmatmul.f32.gmra.mxu0 %v661
        %v680 = vpop.f32.mrf.mxu0
        %v681 = vadd.f32 0.0, %v680
        %682 = vdwg.mxu0
        %v683 = vmul.f32 %v652, %v652
        %v684 = vmul.f32 %v653, %v653
        %v685 = vmul.f32 %v654, %v654
        %v686 = vmul.f32 %v655, %v655
        %687 = vmatpush.msra.mxu0 0.0
        %688 = vmatpush.msra.mxu0 0.0
        %689 = vmatpush.msra.mxu0 0.0
        %690 = vmatpush.msra.mxu0 0.0
        %691 = vmatpush.msra.mxu0 0.0
        %692 = vmatpush.msra.mxu0 0.0
        %693 = vmatpush.msra.mxu0 0.0
        %694 = vmatpush.msra.mxu0 0.0
        %695 = vmatpush.msra.mxu0 0.0
        %696 = vmatpush.msra.mxu0 0.0
        %697 = vmatpush.msra.mxu0 0.0
        %698 = vmatpush.msra.mxu0 0.0
        %699 = vmatpush.msra.mxu0 %v686
        %700 = vmatpush.msra.mxu0 %v685
        %701 = vmatpush.msra.mxu0 %v684
        %702 = vmatpush.msra.mxu0 %v683
        %703 = vmatmul.f32.gmra.mxu0 %v661
        %v704 = vpop.f32.mrf.mxu0
        %v705 = vadd.f32 0.0, %v704
        %706 = vdwg.mxu0
        %v708 = vrot.slane %v705, 6
        %vm710 = vcmask 1041408
        %v711 = vsel %vm710, %v681, %v708
        %v712 = vld [vmem:[#allocation5] sm:$0xff]
        %v713 = vld [vmem:[#allocation5 + $0x8] sm:$0xff]
        %v714 = vld [vmem:[#allocation5 + $0x10] sm:$0xff]
        %v715 = vld [vmem:[#allocation5 + $0x18] sm:$0xff]
        %v716 = vld [vmem:[#allocation5 + $0x20] sm:$0xff]
        %v717 = vld [vmem:[#allocation5 + $0x28] sm:$0xff]
        %v718 = vld [vmem:[#allocation5 + $0x30] sm:$0xff]
        %v719 = vld [vmem:[#allocation5 + $0x38] sm:$0xff]
        %v720 = vld [vmem:[#allocation5 + $0x40] sm:$0xff]
        %v721 = vld [vmem:[#allocation5 + $0x48] sm:$0xff]
        %v722 = vld [vmem:[#allocation5 + $0x50] sm:$0xff]
        %v723 = vld [vmem:[#allocation5 + $0x58] sm:$0xff]
        %v724 = vld [vmem:[#allocation5 + $0x60] sm:$0xff]
        %v725 = vld [vmem:[#allocation5 + $0x68] sm:$0xff]
        %v726 = vld [vmem:[#allocation5 + $0x70] sm:$0xff]
        %v727 = vld [vmem:[#allocation5 + $0x78] sm:$0xff]
        %728 = vmatpush.msra.mxu0 %v727
        %729 = vmatpush.msra.mxu0 %v726
        %730 = vmatpush.msra.mxu0 %v725
        %731 = vmatpush.msra.mxu0 %v724
        %732 = vmatpush.msra.mxu0 %v723
        %733 = vmatpush.msra.mxu0 %v722
        %734 = vmatpush.msra.mxu0 %v721
        %735 = vmatpush.msra.mxu0 %v720
        %736 = vmatpush.msra.mxu0 %v719
        %737 = vmatpush.msra.mxu0 %v718
        %738 = vmatpush.msra.mxu0 %v717
        %739 = vmatpush.msra.mxu0 %v716
        %740 = vmatpush.msra.mxu0 %v715
        %741 = vmatpush.msra.mxu0 %v714
        %742 = vmatpush.msra.mxu0 %v713
        %743 = vmatpush.msra.mxu0 %v712
        %744 = vmatmul.f32.gmra.mxu0 %v711
        %v745 = vpop.f32.mrf.mxu0
        %v746 = vadd.f32 0.0, %v745
        %747 = vdwg.mxu0
        %v748 = vmul.f32 %v746, %v746
        %v750 = vrot.slane %v748, 6
        %v752 = vsub.f32 %v746, %v750
        %v753 = vmax.f32 %v752, 0.0
        %v754 = vadd.f32 %v753, 1e-05
        %v755 = vrsqrt.pop %v754
        %v756 = vmul.f32 %v755, %v754
        %v757 = vmul.f32 %v756, %v755
        %v758 = vmul.f32 0.5, %v757
        %v759 = vsub.f32 1.5, %v758
        %v760 = vmul.f32 %v755, %v759
        %vm761 = vweird.f32 %v754
        %vm762 = vweird.f32 %v755
        %vm763 = vmor %vm761, %vm762
        %v764 = vsel %vm763, %v755, %v760
        %v766 = vperm.slane %v656, 0
        %v768 = vmul.f32 %v764, %v766
        %v770 = vrot.slane %v768, 2
        %v772 = vmul.f32 %v746, %v770
        %v774 = vperm.slane %v657, 0
        %v776 = vsub.f32 %v774, %v772
        %v777 = vld [vmem:[%s12] sm:$0xff]
        %v778 = vld [vmem:[%s12 + $0x8] sm:$0xff]
        %v779 = vld [vmem:[%s12 + $0x10] sm:$0xff]
        %v780 = vld [vmem:[%s12 + $0x18] sm:$0xff]
        %v782 = vrot.slane %v776, 6
        %v783 = vrot.slane %v782, 2
        %vm784 = vcmask 15360
        %v786 = vsel %vm784, %v777, 0
        %v789 = vsel %vm784, %v778, 0
        %v792 = vsel %vm784, %v779, 0
        %v795 = vsel %vm784, %v780, 0
        %v797 = vsel %vm710, %v770, 0
        %v799 = vsel %vm710, %v783, 0
        %801 = vmatpush.msra.mxu0 0.0
        %802 = vmatpush.msra.mxu0 0.0
        %803 = vmatpush.msra.mxu0 0.0
        %804 = vmatpush.msra.mxu0 0.0
        %805 = vmatpush.msra.mxu0 0.0
        %806 = vmatpush.msra.mxu0 0.0
        %807 = vmatpush.msra.mxu0 0.0
        %808 = vmatpush.msra.mxu0 0.0
        %809 = vmatpush.msra.mxu0 0.0
        %810 = vmatpush.msra.mxu0 0.0
        %811 = vmatpush.msra.mxu0 0.0
        %812 = vmatpush.msra.mxu0 0.0
        %813 = vmatpush.msra.mxu0 0.0
        %814 = vmatpush.msra.mxu0 0.0
        %815 = vmatpush.msra.mxu0 0.0
        %816 = vmatpush.msra.mxu0 %v797
        %817 = vmatmul.f32.gmra.mxu0 %v786
        %v818 = vpop.f32.mrf.mxu0
        %v819 = vadd.f32 0.0, %v818
        %820 = vmatmul.f32.gmra.mxu0 %v789
        %v821 = vpop.f32.mrf.mxu0
        %v822 = vadd.f32 0.0, %v821
        %823 = vmatmul.f32.gmra.mxu0 %v792
        %v824 = vpop.f32.mrf.mxu0
        %v825 = vadd.f32 0.0, %v824
        %826 = vmatmul.f32.gmra.mxu0 %v795
        %v827 = vpop.f32.mrf.mxu0
        %v828 = vadd.f32 0.0, %v827
        %829 = vdwg.mxu0
        %830 = vmatpush.msra.mxu0 0.0
        %831 = vmatpush.msra.mxu0 0.0
        %832 = vmatpush.msra.mxu0 0.0
        %833 = vmatpush.msra.mxu0 0.0
        %834 = vmatpush.msra.mxu0 0.0
        %835 = vmatpush.msra.mxu0 0.0
        %836 = vmatpush.msra.mxu0 0.0
        %837 = vmatpush.msra.mxu0 0.0
        %838 = vmatpush.msra.mxu0 0.0
        %839 = vmatpush.msra.mxu0 0.0
        %840 = vmatpush.msra.mxu0 0.0
        %841 = vmatpush.msra.mxu0 0.0
        %842 = vmatpush.msra.mxu0 0.0
        %843 = vmatpush.msra.mxu0 0.0
        %844 = vmatpush.msra.mxu0 0.0
        %845 = vmatpush.msra.mxu0 %v799
        %846 = vmatmul.f32.gmra.mxu0 %v786
        %v847 = vpop.f32.mrf.mxu0
        %v848 = vadd.f32 0.0, %v847
        %849 = vmatmul.f32.gmra.mxu0 %v789
        %v850 = vpop.f32.mrf.mxu0
        %v851 = vadd.f32 0.0, %v850
        %852 = vmatmul.f32.gmra.mxu0 %v792
        %v853 = vpop.f32.mrf.mxu0
        %v854 = vadd.f32 0.0, %v853
        %855 = vmatmul.f32.gmra.mxu0 %v795
        %v856 = vpop.f32.mrf.mxu0
        %v857 = vadd.f32 0.0, %v856
        %858 = vdwg.mxu0
        %v859 = vmul.f32 %v652, %v819
        %v860 = vmul.f32 %v653, %v822
        %v861 = vmul.f32 %v654, %v825
        %v862 = vmul.f32 %v655, %v828
        %v863 = vadd.f32 %v859, %v848
        %v864 = vadd.f32 %v860, %v851
        %v865 = vadd.f32 %v861, %v854
        %v866 = vadd.f32 %v862, %v857
        %v867 = vxor.u32 %v863, 2147483648
        %v868 = vxor.u32 %v864, 2147483648
        %v869 = vxor.u32 %v865, 2147483648
        %v870 = vxor.u32 %v866, 2147483648
        %v871 = vmul.f32 %v867, 1.442695
        %v872 = vpow.pop %v871
        %v873 = vmul.f32 %v868, 1.442695
        %v874 = vpow.pop %v873
        %v875 = vmul.f32 %v869, 1.442695
        %v876 = vpow.pop %v875
        %v877 = vmul.f32 %v870, 1.442695
        %v878 = vpow.pop %v877
        %v879 = vadd.f32 %v872, 1.0
        %v880 = vadd.f32 %v874, 1.0
        %v881 = vadd.f32 %v876, 1.0
        %v882 = vadd.f32 %v878, 1.0
        %v883 = vrcp.pop %v879
        %v884 = vmul.f32 %v879, %v883
        %v885 = vsub.f32 1.0, %v884
        %v886 = vmul.f32 %v883, %v885
        %v887 = vadd.f32 %v883, %v886
        %vm888 = vweird.f32 %v879
        %vm889 = vweird.f32 %v883
        %vm890 = vmor %vm888, %vm889
        %v891 = vsel %vm890, %v883, %v887
        %v892 = vand.u32 2147483647, %v879
        %vm893 = vcmp.eq.f32.partialorder %v892, 8.507059e+37
        %v894 = vand.u32 %v879, 2147483648
        %v895 = vor.u32 1.1754944e-38, %v894
        %v896 = vsel %vm893, %v895, %v891
        %v897 = vmul.f32 1.0, %v896
        %v898 = vrcp.pop %v880
        %v899 = vmul.f32 %v880, %v898
        %v900 = vsub.f32 1.0, %v899
        %v901 = vmul.f32 %v898, %v900
        %v902 = vadd.f32 %v898, %v901
        %vm903 = vweird.f32 %v880
        %vm904 = vweird.f32 %v898
        %vm905 = vmor %vm903, %vm904
        %v906 = vsel %vm905, %v898, %v902
        %v907 = vand.u32 2147483647, %v880
        %vm908 = vcmp.eq.f32.partialorder %v907, 8.507059e+37
        %v909 = vand.u32 %v880, 2147483648
        %v910 = vor.u32 1.1754944e-38, %v909
        %v911 = vsel %vm908, %v910, %v906
        %v912 = vmul.f32 1.0, %v911
        %v913 = vrcp.pop %v881
        %v914 = vmul.f32 %v881, %v913
        %v915 = vsub.f32 1.0, %v914
        %v916 = vmul.f32 %v913, %v915
        %v917 = vadd.f32 %v913, %v916
        %vm918 = vweird.f32 %v881
        %vm919 = vweird.f32 %v913
        %vm920 = vmor %vm918, %vm919
        %v921 = vsel %vm920, %v913, %v917
        %v922 = vand.u32 2147483647, %v881
        %vm923 = vcmp.eq.f32.partialorder %v922, 8.507059e+37
        %v924 = vand.u32 %v881, 2147483648
        %v925 = vor.u32 1.1754944e-38, %v924
        %v926 = vsel %vm923, %v925, %v921
        %v927 = vmul.f32 1.0, %v926
        %v928 = vrcp.pop %v882
        %v929 = vmul.f32 %v882, %v928
        %v930 = vsub.f32 1.0, %v929
        %v931 = vmul.f32 %v928, %v930
        %v932 = vadd.f32 %v928, %v931
        %vm933 = vweird.f32 %v882
        %vm934 = vweird.f32 %v928
        %vm935 = vmor %vm933, %vm934
        %v936 = vsel %vm935, %v928, %v932
        %v937 = vand.u32 2147483647, %v882
        %vm938 = vcmp.eq.f32.partialorder %v937, 8.507059e+37
        %v939 = vand.u32 %v882, 2147483648
        %v940 = vor.u32 1.1754944e-38, %v939
        %v941 = vsel %vm938, %v940, %v936
        %v942 = vmul.f32 1.0, %v941
        %v943 = vmul.f32 %v863, %v897
        %v944 = vmul.f32 %v864, %v912
        %v945 = vmul.f32 %v865, %v927
        %v946 = vmul.f32 %v866, %v942
        %v947 = vrot.slane %v943, 7
        %v948 = vrot.slane %v944, 7
        %v949 = vrot.slane %v945, 7
        %v950 = vrot.slane %v946, 7
        %vm951 = vcmp.lt.s32.totalorder %v592, 1
        %v952 = vsel %vm951, %v949, %v950
        %v953 = vsel %vm951, %v948, %v949
        %v954 = vsel %vm951, %v947, %v948
        %v955 = vsel %vm951, %v950, %v947
        %v956 = vsel %vm644, 1, 0
        %v957 = vsel %vm645, 1, 0
        %v958 = vsel %vm646, 1, 0
        %v959 = vsel %vm647, 1, 0
        %vm960 = vcmp.eq.s32.totalorder %v956, 1
        %vm961 = vcmp.eq.s32.totalorder %v957, 1
        %vm962 = vcmp.eq.s32.totalorder %v958, 1
        %vm963 = vcmp.eq.s32.totalorder %v959, 1
        %v964 = vsel %vm960, 0.0, %v955
        %v965 = vsel %vm961, 0.0, %v954
        %v966 = vsel %vm962, 0.0, %v953
        %v967 = vsel %vm963, 0.0, %v952
        %v968 = vrot.slane %v943, 1
        %v969 = vrot.slane %v944, 1
        %v970 = vrot.slane %v945, 1
        %v971 = vrot.slane %v946, 1
        %vm972 = vcmp.lt.s32.totalorder %v592, 7
        %v973 = vsel %vm972, %v970, %v971
        %v974 = vsel %vm972, %v969, %v970
        %v975 = vsel %vm972, %v968, %v969
        %v976 = vsel %vm972, %v971, %v968
        %v977 = vsel %vm648, 1, 0
        %v978 = vsel %vm649, 1, 0
        %v979 = vsel %vm650, 1, 0
        %v980 = vsel %vm651, 1, 0
        %vm981 = vcmp.eq.s32.totalorder %v977, 1
        %vm982 = vcmp.eq.s32.totalorder %v978, 1
        %vm983 = vcmp.eq.s32.totalorder %v979, 1
        %vm984 = vcmp.eq.s32.totalorder %v980, 1
        %v985 = vsel %vm981, 0.0, %v975
        %v986 = vsel %vm982, 0.0, %v974
        %v987 = vsel %vm983, 0.0, %v973
        %v988 = vsel %vm984, 0.0, %v976
        %v989 = vpack.c.bf16 %v965, %v964
        %v990 = vpack.c.bf16 %v944, %v943
        %v991 = vpack.c.bf16 %v986, %v985
        %v992 = vpack.c.bf16 %v967, %v966
        %v993 = vpack.c.bf16 %v946, %v945
        %v994 = vpack.c.bf16 %v988, %v987
        %v995 = vld [vmem:[#allocation7] sm:$0xff]
        %v996 = vld [vmem:[#allocation7 + $0x8] sm:$0xff]
        %v997 = vld [vmem:[#allocation7 + $0x10] sm:$0xff]
        %v998 = vld [vmem:[#allocation7 + $0x18] sm:$0xff]
        %v999 = vld [vmem:[#allocation7 + $0x20] sm:$0xff]
        %v1000 = vld [vmem:[#allocation7 + $0x28] sm:$0xff]
        %v1001 = vld [vmem:[#allocation7 + $0x30] sm:$0xff]
        %v1002 = vld [vmem:[#allocation7 + $0x38] sm:$0xff]
        %v1003 = vld [vmem:[#allocation7 + $0x40] sm:$0xff]
        %v1004 = vld [vmem:[#allocation7 + $0x48] sm:$0xff]
        %v1005 = vld [vmem:[#allocation7 + $0x50] sm:$0xff]
        %v1006 = vld [vmem:[#allocation7 + $0x58] sm:$0xff]
        %v1007 = vld [vmem:[#allocation7 + $0x60] sm:$0xff]
        %v1008 = vld [vmem:[#allocation7 + $0x68] sm:$0xff]
        %v1009 = vld [vmem:[#allocation7 + $0x70] sm:$0xff]
        %v1010 = vld [vmem:[#allocation7 + $0x78] sm:$0xff]
        %v1011 = vld [vmem:[#allocation7 + $0x80] sm:$0xff]
        %v1012 = vld [vmem:[#allocation7 + $0x88] sm:$0xff]
        %v1013 = vld [vmem:[#allocation7 + $0x90] sm:$0xff]
        %v1014 = vld [vmem:[#allocation7 + $0x98] sm:$0xff]
        %v1015 = vld [vmem:[#allocation7 + $0xa0] sm:$0xff]
        %v1016 = vld [vmem:[#allocation7 + $0xa8] sm:$0xff]
        %v1017 = vld [vmem:[#allocation7 + $0xb0] sm:$0xff]
        %v1018 = vld [vmem:[#allocation7 + $0xb8] sm:$0xff]
        %v1019 = vld [vmem:[#allocation7 + $0xc0] sm:$0xff]
        %v1020 = vld [vmem:[#allocation7 + $0xc8] sm:$0xff]
        %v1021 = vld [vmem:[#allocation7 + $0xd0] sm:$0xff]
        %v1022 = vld [vmem:[#allocation7 + $0xd8] sm:$0xff]
        %v1023 = vld [vmem:[#allocation7 + $0xe0] sm:$0xff]
        %v1024 = vld [vmem:[#allocation7 + $0xe8] sm:$0xff]
        %v1025 = vld [vmem:[#allocation7 + $0xf0] sm:$0xff]
        %v1026 = vld [vmem:[#allocation7 + $0xf8] sm:$0xff]
        %v1027 = vld [vmem:[#allocation7 + $0x100] sm:$0xff]
        %v1028 = vld [vmem:[#allocation7 + $0x108] sm:$0xff]
        %v1029 = vld [vmem:[#allocation7 + $0x110] sm:$0xff]
        %v1030 = vld [vmem:[#allocation7 + $0x118] sm:$0xff]
        %v1031 = vld [vmem:[#allocation7 + $0x120] sm:$0xff]
        %v1032 = vld [vmem:[#allocation7 + $0x128] sm:$0xff]
        %v1033 = vld [vmem:[#allocation7 + $0x130] sm:$0xff]
        %v1034 = vld [vmem:[#allocation7 + $0x138] sm:$0xff]
        %v1035 = vld [vmem:[#allocation7 + $0x140] sm:$0xff]
        %v1036 = vld [vmem:[#allocation7 + $0x148] sm:$0xff]
        %v1037 = vld [vmem:[#allocation7 + $0x150] sm:$0xff]
        %v1038 = vld [vmem:[#allocation7 + $0x158] sm:$0xff]
        %v1039 = vld [vmem:[#allocation7 + $0x160] sm:$0xff]
        %v1040 = vld [vmem:[#allocation7 + $0x168] sm:$0xff]
        %v1041 = vld [vmem:[#allocation7 + $0x170] sm:$0xff]
        %v1042 = vld [vmem:[#allocation7 + $0x178] sm:$0xff]
        %v1043 = vld [vmem:[%s590] sm:$0xf]
        %1045 = vst [vmem:[#allocation1] ss:$4 sm:$0xff] %v1043
        %v1046 = vld.sshfl [vmem:[#allocation1] sm:$0xff pattern:$0x73625140]
        %v1047 = vld.sshfl [vmem:[#allocation1 + $0x8] sm:$0xff pattern:$0x73625140]
        %v1048 = vsel %vm710, %v1046, 0
        %v1050 = vsel %vm710, %v1047, 0
        %1052 = vmatpush.msra.mxu0 0.0
        %1053 = vmatpush.msra.mxu0 0.0
        %1054 = vmatpush.msra.mxu0 0.0
        %1055 = vmatpush.msra.mxu0 0.0
        %1056 = vmatpush.msra.mxu0 0.0
        %1057 = vmatpush.msra.mxu0 0.0
        %1058 = vmatpush.msra.mxu0 0.0
        %1059 = vmatpush.msra.mxu0 0.0
        %1060 = vmatpush.msra.mxu0 0.0
        %1061 = vmatpush.msra.mxu0 0.0
        %1062 = vmatpush.msra.mxu0 0.0
        %1063 = vmatpush.msra.mxu0 0.0
        %1064 = vmatpush.msra.mxu0 0.0
        %1065 = vmatpush.msra.mxu0 0.0
        %1066 = vmatpush.msra.mxu0 0.0
        %1067 = vmatpush.msra.mxu0 %v1048
        %1068 = vmatmul.f32.gmra.mxu0 %v786
        %v1069 = vpop.f32.mrf.mxu0
        %v1070 = vadd.f32 0.0, %v1069
        %1071 = vmatmul.f32.gmra.mxu0 %v789
        %v1072 = vpop.f32.mrf.mxu0
        %v1073 = vadd.f32 0.0, %v1072
        %1074 = vmatmul.f32.gmra.mxu0 %v792
        %v1075 = vpop.f32.mrf.mxu0
        %v1076 = vadd.f32 0.0, %v1075
        %1077 = vmatmul.f32.gmra.mxu0 %v795
        %v1078 = vpop.f32.mrf.mxu0
        %v1079 = vadd.f32 0.0, %v1078
        %1080 = vdwg.mxu0
        %1081 = vmatpush.msra.mxu0 0.0
        %1082 = vmatpush.msra.mxu0 0.0
        %1083 = vmatpush.msra.mxu0 0.0
        %1084 = vmatpush.msra.mxu0 0.0
        %1085 = vmatpush.msra.mxu0 0.0
        %1086 = vmatpush.msra.mxu0 0.0
        %1087 = vmatpush.msra.mxu0 0.0
        %1088 = vmatpush.msra.mxu0 0.0
        %1089 = vmatpush.msra.mxu0 0.0
        %1090 = vmatpush.msra.mxu0 0.0
        %1091 = vmatpush.msra.mxu0 0.0
        %1092 = vmatpush.msra.mxu0 0.0
        %1093 = vmatpush.msra.mxu0 0.0
        %1094 = vmatpush.msra.mxu0 0.0
        %1095 = vmatpush.msra.mxu0 0.0
        %1096 = vmatpush.msra.mxu0 %v1050
        %1097 = vmatmul.f32.gmra.mxu0 %v786
        %v1098 = vpop.f32.mrf.mxu0
        %v1099 = vadd.f32 0.0, %v1098
        %1100 = vmatmul.f32.gmra.mxu0 %v789
        %v1101 = vpop.f32.mrf.mxu0
        %v1102 = vadd.f32 0.0, %v1101
        %1103 = vmatmul.f32.gmra.mxu0 %v792
        %v1104 = vpop.f32.mrf.mxu0
        %v1105 = vadd.f32 0.0, %v1104
        %1106 = vmatmul.f32.gmra.mxu0 %v795
        %v1107 = vpop.f32.mrf.mxu0
        %v1108 = vadd.f32 0.0, %v1107
        %1109 = vdwg.mxu0
        %v1158 = vunpack.c.l.b16 %v995
        %v1159 = vunpack.c.h.b16 %v995
        %v1160 = vunpack.c.l.b16 %v996
        %v1161 = vunpack.c.h.b16 %v996
        %v1162 = vunpack.c.l.b16 %v997
        %v1163 = vunpack.c.h.b16 %v997
        %v1164 = vunpack.c.l.b16 %v998
        %v1165 = vunpack.c.h.b16 %v998
        %v1166 = vunpack.c.l.b16 %v999
        %v1167 = vunpack.c.h.b16 %v999
        %v1168 = vunpack.c.l.b16 %v1000
        %v1169 = vunpack.c.h.b16 %v1000
        %v1170 = vunpack.c.l.b16 %v1001
        %v1171 = vunpack.c.h.b16 %v1001
        %v1172 = vunpack.c.l.b16 %v1002
        %v1173 = vunpack.c.h.b16 %v1002
        %v1174 = vunpack.c.l.b16 %v1003
        %v1175 = vunpack.c.h.b16 %v1003
        %v1176 = vunpack.c.l.b16 %v1004
        %v1177 = vunpack.c.h.b16 %v1004
        %v1178 = vunpack.c.l.b16 %v1005
        %v1179 = vunpack.c.h.b16 %v1005
        %v1180 = vunpack.c.l.b16 %v1006
        %v1181 = vunpack.c.h.b16 %v1006
        %v1182 = vunpack.c.l.b16 %v1007
        %v1183 = vunpack.c.h.b16 %v1007
        %v1184 = vunpack.c.l.b16 %v1008
        %v1185 = vunpack.c.h.b16 %v1008
        %v1186 = vunpack.c.l.b16 %v1009
        %v1187 = vunpack.c.h.b16 %v1009
        %v1188 = vunpack.c.l.b16 %v1010
        %v1189 = vunpack.c.h.b16 %v1010
        %v1190 = vunpack.c.l.b16 %v1011
        %v1191 = vunpack.c.h.b16 %v1011
        %v1192 = vunpack.c.l.b16 %v1012
        %v1193 = vunpack.c.h.b16 %v1012
        %v1194 = vunpack.c.l.b16 %v1013
        %v1195 = vunpack.c.h.b16 %v1013
        %v1196 = vunpack.c.l.b16 %v1014
        %v1197 = vunpack.c.h.b16 %v1014
        %v1198 = vunpack.c.l.b16 %v1015
        %v1199 = vunpack.c.h.b16 %v1015
        %v1200 = vunpack.c.l.b16 %v1016
        %v1201 = vunpack.c.h.b16 %v1016
        %v1202 = vunpack.c.l.b16 %v1017
        %v1203 = vunpack.c.h.b16 %v1017
        %v1204 = vunpack.c.l.b16 %v1018
        %v1205 = vunpack.c.h.b16 %v1018
        %v1206 = vunpack.c.l.b16 %v1019
        %v1207 = vunpack.c.h.b16 %v1019
        %v1208 = vunpack.c.l.b16 %v1020
        %v1209 = vunpack.c.h.b16 %v1020
        %v1210 = vunpack.c.l.b16 %v1021
        %v1211 = vunpack.c.h.b16 %v1021
        %v1212 = vunpack.c.l.b16 %v1022
        %v1213 = vunpack.c.h.b16 %v1022
        %v1214 = vunpack.c.l.b16 %v1023
        %v1215 = vunpack.c.h.b16 %v1023
        %v1216 = vunpack.c.l.b16 %v1024
        %v1217 = vunpack.c.h.b16 %v1024
        %v1218 = vunpack.c.l.b16 %v1025
        %v1219 = vunpack.c.h.b16 %v1025
        %v1220 = vunpack.c.l.b16 %v1026
        %v1221 = vunpack.c.h.b16 %v1026
        %v1222 = vunpack.c.l.b16 %v1027
        %v1223 = vunpack.c.h.b16 %v1027
        %v1224 = vunpack.c.l.b16 %v1028
        %v1225 = vunpack.c.h.b16 %v1028
        %v1226 = vunpack.c.l.b16 %v1029
        %v1227 = vunpack.c.h.b16 %v1029
        %v1228 = vunpack.c.l.b16 %v1030
        %v1229 = vunpack.c.h.b16 %v1030
        %v1230 = vunpack.c.l.b16 %v1031
        %v1231 = vunpack.c.h.b16 %v1031
        %v1232 = vunpack.c.l.b16 %v1032
        %v1233 = vunpack.c.h.b16 %v1032
        %v1234 = vunpack.c.l.b16 %v1033
        %v1235 = vunpack.c.h.b16 %v1033
        %v1236 = vunpack.c.l.b16 %v1034
        %v1237 = vunpack.c.h.b16 %v1034
        %v1238 = vunpack.c.l.b16 %v1035
        %v1239 = vunpack.c.h.b16 %v1035
        %v1240 = vunpack.c.l.b16 %v1036
        %v1241 = vunpack.c.h.b16 %v1036
        %v1242 = vunpack.c.l.b16 %v1037
        %v1243 = vunpack.c.h.b16 %v1037
        %v1244 = vunpack.c.l.b16 %v1038
        %v1245 = vunpack.c.h.b16 %v1038
        %v1246 = vunpack.c.l.b16 %v1039
        %v1247 = vunpack.c.h.b16 %v1039
        %v1248 = vunpack.c.l.b16 %v1040
        %v1249 = vunpack.c.h.b16 %v1040
        %v1250 = vunpack.c.l.b16 %v1041
        %v1251 = vunpack.c.h.b16 %v1041
        %v1252 = vunpack.c.l.b16 %v1042
        %v1253 = vunpack.c.h.b16 %v1042
        %v1254 = vpack.c.b16 %v1160, %v1158
        %v1255 = vpack.c.b16 %v1161, %v1159
        %v1256 = vpack.c.b16 %v1164, %v1162
        %v1257 = vpack.c.b16 %v1165, %v1163
        %v1258 = vpack.c.b16 %v1168, %v1166
        %v1259 = vpack.c.b16 %v1169, %v1167
        %v1260 = vpack.c.b16 %v1172, %v1170
        %v1261 = vpack.c.b16 %v1173, %v1171
        %v1262 = vpack.c.b16 %v1176, %v1174
        %v1263 = vpack.c.b16 %v1177, %v1175
        %v1264 = vpack.c.b16 %v1180, %v1178
        %v1265 = vpack.c.b16 %v1181, %v1179
        %v1266 = vpack.c.b16 %v1184, %v1182
        %v1267 = vpack.c.b16 %v1185, %v1183
        %v1268 = vpack.c.b16 %v1188, %v1186
        %v1269 = vpack.c.b16 %v1189, %v1187
        %v1270 = vpack.c.b16 %v1192, %v1190
        %v1271 = vpack.c.b16 %v1193, %v1191
        %v1272 = vpack.c.b16 %v1196, %v1194
        %v1273 = vpack.c.b16 %v1197, %v1195
        %v1274 = vpack.c.b16 %v1200, %v1198
        %v1275 = vpack.c.b16 %v1201, %v1199
        %v1276 = vpack.c.b16 %v1204, %v1202
        %v1277 = vpack.c.b16 %v1205, %v1203
        %v1278 = vpack.c.b16 %v1208, %v1206
        %v1279 = vpack.c.b16 %v1209, %v1207
        %v1280 = vpack.c.b16 %v1212, %v1210
        %v1281 = vpack.c.b16 %v1213, %v1211
        %v1282 = vpack.c.b16 %v1216, %v1214
        %v1283 = vpack.c.b16 %v1217, %v1215
        %v1284 = vpack.c.b16 %v1220, %v1218
        %v1285 = vpack.c.b16 %v1221, %v1219
        %v1286 = vpack.c.b16 %v1224, %v1222
        %v1287 = vpack.c.b16 %v1225, %v1223
        %v1288 = vpack.c.b16 %v1228, %v1226
        %v1289 = vpack.c.b16 %v1229, %v1227
        %v1290 = vpack.c.b16 %v1232, %v1230
        %v1291 = vpack.c.b16 %v1233, %v1231
        %v1292 = vpack.c.b16 %v1236, %v1234
        %v1293 = vpack.c.b16 %v1237, %v1235
        %v1294 = vpack.c.b16 %v1240, %v1238
        %v1295 = vpack.c.b16 %v1241, %v1239
        %v1296 = vpack.c.b16 %v1244, %v1242
        %v1297 = vpack.c.b16 %v1245, %v1243
        %v1298 = vpack.c.b16 %v1248, %v1246
        %v1299 = vpack.c.b16 %v1249, %v1247
        %v1300 = vpack.c.b16 %v1252, %v1250
        %v1301 = vpack.c.b16 %v1253, %v1251
        %1350 = vmatpush.bf16.msra.mxu0 %v1268
        %1351 = vmatpush.bf16.msra.mxu0 %v1266
        %1352 = vmatpush.bf16.msra.mxu0 %v1264
        %1353 = vmatpush.bf16.msra.mxu0 %v1262
        %1354 = vmatpush.bf16.msra.mxu0 %v1260
        %1355 = vmatpush.bf16.msra.mxu0 %v1258
        %1356 = vmatpush.bf16.msra.mxu0 %v1256
        %1357 = vmatpush.bf16.msra.mxu0 %v1254
        %1358 = vmatmul.bf16.gmra.mxu0 %v989
        %v1359 = vpop.f32.mrf.mxu0
        %v1360 = vadd.f32 %v1070, %v1359
        %v1361 = vpop.f32.mrf.mxu0
        %v1362 = vadd.f32 %v1073, %v1361
        %1363 = vmatmul.bf16.gmra.mxu0 %v992
        %v1364 = vpop.f32.mrf.mxu0
        %v1365 = vadd.f32 %v1076, %v1364
        %v1366 = vpop.f32.mrf.mxu0
        %v1367 = vadd.f32 %v1079, %v1366
        %1368 = vdwg.mxu0
        %1369 = vmatpush.bf16.msra.mxu0 %v1284
        %1370 = vmatpush.bf16.msra.mxu0 %v1282
        %1371 = vmatpush.bf16.msra.mxu0 %v1280
        %1372 = vmatpush.bf16.msra.mxu0 %v1278
        %1373 = vmatpush.bf16.msra.mxu0 %v1276
        %1374 = vmatpush.bf16.msra.mxu0 %v1274
        %1375 = vmatpush.bf16.msra.mxu0 %v1272
        %1376 = vmatpush.bf16.msra.mxu0 %v1270
        %1377 = vmatmul.bf16.gmra.mxu0 %v990
        %v1378 = vpop.f32.mrf.mxu0
        %v1379 = vadd.f32 %v1360, %v1378
        %v1380 = vpop.f32.mrf.mxu0
        %v1381 = vadd.f32 %v1362, %v1380
        %1382 = vmatmul.bf16.gmra.mxu0 %v993
        %v1383 = vpop.f32.mrf.mxu0
        %v1384 = vadd.f32 %v1365, %v1383
        %v1385 = vpop.f32.mrf.mxu0
        %v1386 = vadd.f32 %v1367, %v1385
        %1387 = vdwg.mxu0
        %1388 = vmatpush.bf16.msra.mxu0 %v1300
        %1389 = vmatpush.bf16.msra.mxu0 %v1298
        %1390 = vmatpush.bf16.msra.mxu0 %v1296
        %1391 = vmatpush.bf16.msra.mxu0 %v1294
        %1392 = vmatpush.bf16.msra.mxu0 %v1292
        %1393 = vmatpush.bf16.msra.mxu0 %v1290
        %1394 = vmatpush.bf16.msra.mxu0 %v1288
        %1395 = vmatpush.bf16.msra.mxu0 %v1286
        %1396 = vmatmul.bf16.gmra.mxu0 %v991
        %v1397 = vpop.f32.mrf.mxu0
        %v1398 = vadd.f32 %v1379, %v1397
        %v1399 = vpop.f32.mrf.mxu0
        %v1400 = vadd.f32 %v1381, %v1399
        %1401 = vmatmul.bf16.gmra.mxu0 %v994
        %v1402 = vpop.f32.mrf.mxu0
        %v1403 = vadd.f32 %v1384, %v1402
        %v1404 = vpop.f32.mrf.mxu0
        %v1405 = vadd.f32 %v1386, %v1404
        %1406 = vdwg.mxu0
        %1407 = vmatpush.bf16.msra.mxu0 %v1269
        %1408 = vmatpush.bf16.msra.mxu0 %v1267
        %1409 = vmatpush.bf16.msra.mxu0 %v1265
        %1410 = vmatpush.bf16.msra.mxu0 %v1263
        %1411 = vmatpush.bf16.msra.mxu0 %v1261
        %1412 = vmatpush.bf16.msra.mxu0 %v1259
        %1413 = vmatpush.bf16.msra.mxu0 %v1257
        %1414 = vmatpush.bf16.msra.mxu0 %v1255
        %1415 = vmatmul.bf16.gmra.mxu0 %v989
        %v1416 = vpop.f32.mrf.mxu0
        %v1417 = vadd.f32 %v1099, %v1416
        %v1418 = vpop.f32.mrf.mxu0
        %v1419 = vadd.f32 %v1102, %v1418
        %1420 = vmatmul.bf16.gmra.mxu0 %v992
        %v1421 = vpop.f32.mrf.mxu0
        %v1422 = vadd.f32 %v1105, %v1421
        %v1423 = vpop.f32.mrf.mxu0
        %v1424 = vadd.f32 %v1108, %v1423
        %1425 = vdwg.mxu0
        %1426 = vmatpush.bf16.msra.mxu0 %v1285
        %1427 = vmatpush.bf16.msra.mxu0 %v1283
        %1428 = vmatpush.bf16.msra.mxu0 %v1281
        %1429 = vmatpush.bf16.msra.mxu0 %v1279
        %1430 = vmatpush.bf16.msra.mxu0 %v1277
        %1431 = vmatpush.bf16.msra.mxu0 %v1275
        %1432 = vmatpush.bf16.msra.mxu0 %v1273
        %1433 = vmatpush.bf16.msra.mxu0 %v1271
        %1434 = vmatmul.bf16.gmra.mxu0 %v990
        %v1435 = vpop.f32.mrf.mxu0
        %v1436 = vadd.f32 %v1417, %v1435
        %v1437 = vpop.f32.mrf.mxu0
        %v1438 = vadd.f32 %v1419, %v1437
        %1439 = vmatmul.bf16.gmra.mxu0 %v993
        %v1440 = vpop.f32.mrf.mxu0
        %v1441 = vadd.f32 %v1422, %v1440
        %v1442 = vpop.f32.mrf.mxu0
        %v1443 = vadd.f32 %v1424, %v1442
        %1444 = vdwg.mxu0
        %1445 = vmatpush.bf16.msra.mxu0 %v1301
        %1446 = vmatpush.bf16.msra.mxu0 %v1299
        %1447 = vmatpush.bf16.msra.mxu0 %v1297
        %1448 = vmatpush.bf16.msra.mxu0 %v1295
        %1449 = vmatpush.bf16.msra.mxu0 %v1293
        %1450 = vmatpush.bf16.msra.mxu0 %v1291
        %1451 = vmatpush.bf16.msra.mxu0 %v1289
        %1452 = vmatpush.bf16.msra.mxu0 %v1287
        %1453 = vmatmul.bf16.gmra.mxu0 %v991
        %v1454 = vpop.f32.mrf.mxu0
        %v1455 = vadd.f32 %v1436, %v1454
        %v1456 = vpop.f32.mrf.mxu0
        %v1457 = vadd.f32 %v1438, %v1456
        %1458 = vmatmul.bf16.gmra.mxu0 %v994
        %v1459 = vpop.f32.mrf.mxu0
        %v1460 = vadd.f32 %v1441, %v1459
        %v1461 = vpop.f32.mrf.mxu0
        %v1462 = vadd.f32 %v1443, %v1461
        %1463 = vdwg.mxu0
        %v1464 = vld [vmem:[%s6] sm:$0x3]
        %v1465 = vld [vmem:[%s7] sm:$0x3]
        %1466 = vmatpush.msra.mxu0 0.0
        %1467 = vmatpush.msra.mxu0 0.0
        %1468 = vmatpush.msra.mxu0 0.0
        %1469 = vmatpush.msra.mxu0 0.0
        %1470 = vmatpush.msra.mxu0 0.0
        %1471 = vmatpush.msra.mxu0 0.0
        %1472 = vmatpush.msra.mxu0 0.0
        %1473 = vmatpush.msra.mxu0 0.0
        %1474 = vmatpush.msra.mxu0 0.0
        %1475 = vmatpush.msra.mxu0 0.0
        %1476 = vmatpush.msra.mxu0 0.0
        %1477 = vmatpush.msra.mxu0 0.0
        %1478 = vmatpush.msra.mxu0 %v1405
        %1479 = vmatpush.msra.mxu0 %v1403
        %1480 = vmatpush.msra.mxu0 %v1400
        %1481 = vmatpush.msra.mxu0 %v1398
        %1482 = vmatmul.f32.gmra.mxu0 %v661
        %v1483 = vpop.f32.mrf.mxu0
        %v1484 = vadd.f32 0.0, %v1483
        %1485 = vdwg.mxu0
        %1486 = vmatpush.msra.mxu0 0.0
        %1487 = vmatpush.msra.mxu0 0.0
        %1488 = vmatpush.msra.mxu0 0.0
        %1489 = vmatpush.msra.mxu0 0.0
        %1490 = vmatpush.msra.mxu0 0.0
        %1491 = vmatpush.msra.mxu0 0.0
        %1492 = vmatpush.msra.mxu0 0.0
        %1493 = vmatpush.msra.mxu0 0.0
        %1494 = vmatpush.msra.mxu0 0.0
        %1495 = vmatpush.msra.mxu0 0.0
        %1496 = vmatpush.msra.mxu0 0.0
        %1497 = vmatpush.msra.mxu0 0.0
        %1498 = vmatpush.msra.mxu0 %v1462
        %1499 = vmatpush.msra.mxu0 %v1460
        %1500 = vmatpush.msra.mxu0 %v1457
        %1501 = vmatpush.msra.mxu0 %v1455
        %1502 = vmatmul.f32.gmra.mxu0 %v661
        %v1503 = vpop.f32.mrf.mxu0
        %v1504 = vadd.f32 0.0, %v1503
        %1505 = vdwg.mxu0
        %v1506 = vmul.f32 %v1398, %v1398
        %v1507 = vmul.f32 %v1455, %v1455
        %v1508 = vmul.f32 %v1400, %v1400
        %v1509 = vmul.f32 %v1457, %v1457
        %v1510 = vmul.f32 %v1403, %v1403
        %v1511 = vmul.f32 %v1460, %v1460
        %v1512 = vmul.f32 %v1405, %v1405
        %v1513 = vmul.f32 %v1462, %v1462
        %1514 = vmatpush.msra.mxu0 0.0
        %1515 = vmatpush.msra.mxu0 0.0
        %1516 = vmatpush.msra.mxu0 0.0
        %1517 = vmatpush.msra.mxu0 0.0
        %1518 = vmatpush.msra.mxu0 0.0
        %1519 = vmatpush.msra.mxu0 0.0
        %1520 = vmatpush.msra.mxu0 0.0
        %1521 = vmatpush.msra.mxu0 0.0
        %1522 = vmatpush.msra.mxu0 0.0
        %1523 = vmatpush.msra.mxu0 0.0
        %1524 = vmatpush.msra.mxu0 0.0
        %1525 = vmatpush.msra.mxu0 0.0
        %1526 = vmatpush.msra.mxu0 %v1512
        %1527 = vmatpush.msra.mxu0 %v1510
        %1528 = vmatpush.msra.mxu0 %v1508
        %1529 = vmatpush.msra.mxu0 %v1506
        %1530 = vmatmul.f32.gmra.mxu0 %v661
        %v1531 = vpop.f32.mrf.mxu0
        %v1532 = vadd.f32 0.0, %v1531
        %1533 = vdwg.mxu0
        %1534 = vmatpush.msra.mxu0 0.0
        %1535 = vmatpush.msra.mxu0 0.0
        %1536 = vmatpush.msra.mxu0 0.0
        %1537 = vmatpush.msra.mxu0 0.0
        %1538 = vmatpush.msra.mxu0 0.0
        %1539 = vmatpush.msra.mxu0 0.0
        %1540 = vmatpush.msra.mxu0 0.0
        %1541 = vmatpush.msra.mxu0 0.0
        %1542 = vmatpush.msra.mxu0 0.0
        %1543 = vmatpush.msra.mxu0 0.0
        %1544 = vmatpush.msra.mxu0 0.0
        %1545 = vmatpush.msra.mxu0 0.0
        %1546 = vmatpush.msra.mxu0 %v1513
        %1547 = vmatpush.msra.mxu0 %v1511
        %1548 = vmatpush.msra.mxu0 %v1509
        %1549 = vmatpush.msra.mxu0 %v1507
        %1550 = vmatmul.f32.gmra.mxu0 %v661
        %v1551 = vpop.f32.mrf.mxu0
        %v1552 = vadd.f32 0.0, %v1551
        %1553 = vdwg.mxu0
        %v1556 = vrot.slane %v1532, 6
        %v1557 = vrot.slane %v1552, 6
        %v1560 = vsel %vm710, %v1484, %v1556
        %v1561 = vsel %vm710, %v1504, %v1557
        %v1562 = vld [vmem:[#allocation8] sm:$0xff]
        %v1563 = vld [vmem:[#allocation8 + $0x8] sm:$0xff]
        %v1564 = vld [vmem:[#allocation8 + $0x10] sm:$0xff]
        %v1565 = vld [vmem:[#allocation8 + $0x18] sm:$0xff]
        %v1566 = vld [vmem:[#allocation8 + $0x20] sm:$0xff]
        %v1567 = vld [vmem:[#allocation8 + $0x28] sm:$0xff]
        %v1568 = vld [vmem:[#allocation8 + $0x30] sm:$0xff]
        %v1569 = vld [vmem:[#allocation8 + $0x38] sm:$0xff]
        %v1570 = vld [vmem:[#allocation8 + $0x40] sm:$0xff]
        %v1571 = vld [vmem:[#allocation8 + $0x48] sm:$0xff]
        %v1572 = vld [vmem:[#allocation8 + $0x50] sm:$0xff]
        %v1573 = vld [vmem:[#allocation8 + $0x58] sm:$0xff]
        %v1574 = vld [vmem:[#allocation8 + $0x60] sm:$0xff]
        %v1575 = vld [vmem:[#allocation8 + $0x68] sm:$0xff]
        %v1576 = vld [vmem:[#allocation8 + $0x70] sm:$0xff]
        %v1577 = vld [vmem:[#allocation8 + $0x78] sm:$0xff]
        %v1578 = vld [vmem:[#allocation8 + $0x80] sm:$0xff]
        %v1579 = vld [vmem:[#allocation8 + $0x88] sm:$0xff]
        %v1580 = vld [vmem:[#allocation8 + $0x90] sm:$0xff]
        %v1581 = vld [vmem:[#allocation8 + $0x98] sm:$0xff]
        %v1582 = vld [vmem:[#allocation8 + $0xa0] sm:$0xff]
        %v1583 = vld [vmem:[#allocation8 + $0xa8] sm:$0xff]
        %v1584 = vld [vmem:[#allocation8 + $0xb0] sm:$0xff]
        %v1585 = vld [vmem:[#allocation8 + $0xb8] sm:$0xff]
        %v1586 = vld [vmem:[#allocation8 + $0xc0] sm:$0xff]
        %v1587 = vld [vmem:[#allocation8 + $0xc8] sm:$0xff]
        %v1588 = vld [vmem:[#allocation8 + $0xd0] sm:$0xff]
        %v1589 = vld [vmem:[#allocation8 + $0xd8] sm:$0xff]
        %v1590 = vld [vmem:[#allocation8 + $0xe0] sm:$0xff]
        %v1591 = vld [vmem:[#allocation8 + $0xe8] sm:$0xff]
        %v1592 = vld [vmem:[#allocation8 + $0xf0] sm:$0xff]
        %v1593 = vld [vmem:[#allocation8 + $0xf8] sm:$0xff]
        %v1594 = vld [vmem:[#allocation8 + $0x100] sm:$0xff]
        %v1595 = vld [vmem:[#allocation8 + $0x108] sm:$0xff]
        %v1596 = vld [vmem:[#allocation8 + $0x110] sm:$0xff]
        %v1597 = vld [vmem:[#allocation8 + $0x118] sm:$0xff]
        %v1598 = vld [vmem:[#allocation8 + $0x120] sm:$0xff]
        %v1599 = vld [vmem:[#allocation8 + $0x128] sm:$0xff]
        %v1600 = vld [vmem:[#allocation8 + $0x130] sm:$0xff]
        %v1601 = vld [vmem:[#allocation8 + $0x138] sm:$0xff]
        %v1602 = vld [vmem:[#allocation8 + $0x140] sm:$0xff]
        %v1603 = vld [vmem:[#allocation8 + $0x148] sm:$0xff]
        %v1604 = vld [vmem:[#allocation8 + $0x150] sm:$0xff]
        %v1605 = vld [vmem:[#allocation8 + $0x158] sm:$0xff]
        %v1606 = vld [vmem:[#allocation8 + $0x160] sm:$0xff]
        %v1607 = vld [vmem:[#allocation8 + $0x168] sm:$0xff]
        %v1608 = vld [vmem:[#allocation8 + $0x170] sm:$0xff]
        %v1609 = vld [vmem:[#allocation8 + $0x178] sm:$0xff]
        %v1610 = vld [vmem:[#allocation8 + $0x180] sm:$0xff]
        %v1611 = vld [vmem:[#allocation8 + $0x188] sm:$0xff]
        %v1612 = vld [vmem:[#allocation8 + $0x190] sm:$0xff]
        %v1613 = vld [vmem:[#allocation8 + $0x198] sm:$0xff]
        %v1614 = vld [vmem:[#allocation8 + $0x1a0] sm:$0xff]
        %v1615 = vld [vmem:[#allocation8 + $0x1a8] sm:$0xff]
        %v1616 = vld [vmem:[#allocation8 + $0x1b0] sm:$0xff]
        %v1617 = vld [vmem:[#allocation8 + $0x1b8] sm:$0xff]
        %v1618 = vld [vmem:[#allocation8 + $0x1c0] sm:$0xff]
        %v1619 = vld [vmem:[#allocation8 + $0x1c8] sm:$0xff]
        %v1620 = vld [vmem:[#allocation8 + $0x1d0] sm:$0xff]
        %v1621 = vld [vmem:[#allocation8 + $0x1d8] sm:$0xff]
        %v1622 = vld [vmem:[#allocation8 + $0x1e0] sm:$0xff]
        %v1623 = vld [vmem:[#allocation8 + $0x1e8] sm:$0xff]
        %v1624 = vld [vmem:[#allocation8 + $0x1f0] sm:$0xff]
        %v1625 = vld [vmem:[#allocation8 + $0x1f8] sm:$0xff]
        %1626 = vmatpush.msra.mxu0 %v1592
        %1627 = vmatpush.msra.mxu0 %v1590
        %1628 = vmatpush.msra.mxu0 %v1588
        %1629 = vmatpush.msra.mxu0 %v1586
        %1630 = vmatpush.msra.mxu0 %v1584
        %1631 = vmatpush.msra.mxu0 %v1582
        %1632 = vmatpush.msra.mxu0 %v1580
        %1633 = vmatpush.msra.mxu0 %v1578
        %1634 = vmatpush.msra.mxu0 %v1576
        %1635 = vmatpush.msra.mxu0 %v1574
        %1636 = vmatpush.msra.mxu0 %v1572
        %1637 = vmatpush.msra.mxu0 %v1570
        %1638 = vmatpush.msra.mxu0 %v1568
        %1639 = vmatpush.msra.mxu0 %v1566
        %1640 = vmatpush.msra.mxu0 %v1564
        %1641 = vmatpush.msra.mxu0 %v1562
        %1642 = vmatmul.f32.gmra.mxu0 %v1560
        %v1643 = vpop.f32.mrf.mxu0
        %v1644 = vadd.f32 0.0, %v1643
        %1645 = vdwg.mxu0
        %1646 = vmatpush.msra.mxu0 %v1624
        %1647 = vmatpush.msra.mxu0 %v1622
        %1648 = vmatpush.msra.mxu0 %v1620
        %1649 = vmatpush.msra.mxu0 %v1618
        %1650 = vmatpush.msra.mxu0 %v1616
        %1651 = vmatpush.msra.mxu0 %v1614
        %1652 = vmatpush.msra.mxu0 %v1612
        %1653 = vmatpush.msra.mxu0 %v1610
        %1654 = vmatpush.msra.mxu0 %v1608
        %1655 = vmatpush.msra.mxu0 %v1606
        %1656 = vmatpush.msra.mxu0 %v1604
        %1657 = vmatpush.msra.mxu0 %v1602
        %1658 = vmatpush.msra.mxu0 %v1600
        %1659 = vmatpush.msra.mxu0 %v1598
        %1660 = vmatpush.msra.mxu0 %v1596
        %1661 = vmatpush.msra.mxu0 %v1594
        %1662 = vmatmul.f32.gmra.mxu0 %v1561
        %v1663 = vpop.f32.mrf.mxu0
        %v1664 = vadd.f32 %v1644, %v1663
        %1665 = vdwg.mxu0
        %1666 = vmatpush.msra.mxu0 %v1593
        %1667 = vmatpush.msra.mxu0 %v1591
        %1668 = vmatpush.msra.mxu0 %v1589
        %1669 = vmatpush.msra.mxu0 %v1587
        %1670 = vmatpush.msra.mxu0 %v1585
        %1671 = vmatpush.msra.mxu0 %v1583
        %1672 = vmatpush.msra.mxu0 %v1581
        %1673 = vmatpush.msra.mxu0 %v1579
        %1674 = vmatpush.msra.mxu0 %v1577
        %1675 = vmatpush.msra.mxu0 %v1575
        %1676 = vmatpush.msra.mxu0 %v1573
        %1677 = vmatpush.msra.mxu0 %v1571
        %1678 = vmatpush.msra.mxu0 %v1569
        %1679 = vmatpush.msra.mxu0 %v1567
        %1680 = vmatpush.msra.mxu0 %v1565
        %1681 = vmatpush.msra.mxu0 %v1563
        %1682 = vmatmul.f32.gmra.mxu0 %v1560
        %v1683 = vpop.f32.mrf.mxu0
        %v1684 = vadd.f32 0.0, %v1683
        %1685 = vdwg.mxu0
        %1686 = vmatpush.msra.mxu0 %v1625
        %1687 = vmatpush.msra.mxu0 %v1623
        %1688 = vmatpush.msra.mxu0 %v1621
        %1689 = vmatpush.msra.mxu0 %v1619
        %1690 = vmatpush.msra.mxu0 %v1617
        %1691 = vmatpush.msra.mxu0 %v1615
        %1692 = vmatpush.msra.mxu0 %v1613
        %1693 = vmatpush.msra.mxu0 %v1611
        %1694 = vmatpush.msra.mxu0 %v1609
        %1695 = vmatpush.msra.mxu0 %v1607
        %1696 = vmatpush.msra.mxu0 %v1605
        %1697 = vmatpush.msra.mxu0 %v1603
        %1698 = vmatpush.msra.mxu0 %v1601
        %1699 = vmatpush.msra.mxu0 %v1599
        %1700 = vmatpush.msra.mxu0 %v1597
        %1701 = vmatpush.msra.mxu0 %v1595
        %1702 = vmatmul.f32.gmra.mxu0 %v1561
        %v1703 = vpop.f32.mrf.mxu0
        %v1704 = vadd.f32 %v1684, %v1703
        %1705 = vdwg.mxu0
        %v1706 = vmul.f32 %v1664, %v1664
        %v1707 = vmul.f32 %v1704, %v1704
        %v1710 = vrot.slane %v1706, 6
        %v1711 = vrot.slane %v1707, 6
        %v1714 = vsub.f32 %v1664, %v1710
        %v1715 = vsub.f32 %v1704, %v1711
        %v1716 = vmax.f32 %v1714, 0.0
        %v1717 = vmax.f32 %v1715, 0.0
        %v1718 = vadd.f32 %v1716, 1e-05
        %v1719 = vadd.f32 %v1717, 1e-05
        %v1720 = vrsqrt.pop %v1718
        %v1721 = vmul.f32 %v1720, %v1718
        %v1722 = vmul.f32 %v1721, %v1720
        %v1723 = vmul.f32 0.5, %v1722
        %v1724 = vsub.f32 1.5, %v1723
        %v1725 = vmul.f32 %v1720, %v1724
        %vm1726 = vweird.f32 %v1718
        %vm1727 = vweird.f32 %v1720
        %vm1728 = vmor %vm1726, %vm1727
        %v1729 = vsel %vm1728, %v1720, %v1725
        %v1730 = vrsqrt.pop %v1719
        %v1731 = vmul.f32 %v1730, %v1719
        %v1732 = vmul.f32 %v1731, %v1730
        %v1733 = vmul.f32 0.5, %v1732
        %v1734 = vsub.f32 1.5, %v1733
        %v1735 = vmul.f32 %v1730, %v1734
        %vm1736 = vweird.f32 %v1719
        %vm1737 = vweird.f32 %v1730
        %vm1738 = vmor %vm1736, %vm1737
        %v1739 = vsel %vm1738, %v1730, %v1735
        %v1741 = vperm.slane %v1464, 0
        %v1742 = vperm.slane %v1464, 1
        %v1745 = vmul.f32 %v1729, %v1741
        %v1746 = vmul.f32 %v1739, %v1742
        %v1749 = vrot.slane %v1745, 2
        %v1750 = vrot.slane %v1746, 2
        %v1753 = vmul.f32 %v1664, %v1749
        %v1754 = vmul.f32 %v1704, %v1750
        %v1756 = vperm.slane %v1465, 0
        %v1757 = vperm.slane %v1465, 1
        %v1760 = vsub.f32 %v1756, %v1753
        %v1761 = vsub.f32 %v1757, %v1754
        %v1764 = vrot.slane %v1760, 6
        %v1765 = vrot.slane %v1761, 6
        %v1766 = vrot.slane %v1764, 2
        %v1767 = vrot.slane %v1765, 2
        %v1768 = vsel %vm710, %v1749, 0
        %v1770 = vsel %vm710, %v1750, 0
        %v1772 = vsel %vm710, %v1766, 0
        %v1774 = vsel %vm710, %v1767, 0
        %1776 = vmatpush.msra.mxu0 0.0
        %1777 = vmatpush.msra.mxu0 0.0
        %1778 = vmatpush.msra.mxu0 0.0
        %1779 = vmatpush.msra.mxu0 0.0
        %1780 = vmatpush.msra.mxu0 0.0
        %1781 = vmatpush.msra.mxu0 0.0
        %1782 = vmatpush.msra.mxu0 0.0
        %1783 = vmatpush.msra.mxu0 0.0
        %1784 = vmatpush.msra.mxu0 0.0
        %1785 = vmatpush.msra.mxu0 0.0
        %1786 = vmatpush.msra.mxu0 0.0
        %1787 = vmatpush.msra.mxu0 0.0
        %1788 = vmatpush.msra.mxu0 0.0
        %1789 = vmatpush.msra.mxu0 0.0
        %1790 = vmatpush.msra.mxu0 0.0
        %1791 = vmatpush.msra.mxu0 %v1768
        %1792 = vmatmul.f32.gmra.mxu0 %v786
        %v1793 = vpop.f32.mrf.mxu0
        %v1794 = vadd.f32 0.0, %v1793
        %1795 = vmatmul.f32.gmra.mxu0 %v789
        %v1796 = vpop.f32.mrf.mxu0
        %v1797 = vadd.f32 0.0, %v1796
        %1798 = vmatmul.f32.gmra.mxu0 %v792
        %v1799 = vpop.f32.mrf.mxu0
        %v1800 = vadd.f32 0.0, %v1799
        %1801 = vmatmul.f32.gmra.mxu0 %v795
        %v1802 = vpop.f32.mrf.mxu0
        %v1803 = vadd.f32 0.0, %v1802
        %1804 = vdwg.mxu0
        %1805 = vmatpush.msra.mxu0 0.0
        %1806 = vmatpush.msra.mxu0 0.0
        %1807 = vmatpush.msra.mxu0 0.0
        %1808 = vmatpush.msra.mxu0 0.0
        %1809 = vmatpush.msra.mxu0 0.0
        %1810 = vmatpush.msra.mxu0 0.0
        %1811 = vmatpush.msra.mxu0 0.0
        %1812 = vmatpush.msra.mxu0 0.0
        %1813 = vmatpush.msra.mxu0 0.0
        %1814 = vmatpush.msra.mxu0 0.0
        %1815 = vmatpush.msra.mxu0 0.0
        %1816 = vmatpush.msra.mxu0 0.0
        %1817 = vmatpush.msra.mxu0 0.0
        %1818 = vmatpush.msra.mxu0 0.0
        %1819 = vmatpush.msra.mxu0 0.0
        %1820 = vmatpush.msra.mxu0 %v1770
        %1821 = vmatmul.f32.gmra.mxu0 %v786
        %v1822 = vpop.f32.mrf.mxu0
        %v1823 = vadd.f32 0.0, %v1822
        %1824 = vmatmul.f32.gmra.mxu0 %v789
        %v1825 = vpop.f32.mrf.mxu0
        %v1826 = vadd.f32 0.0, %v1825
        %1827 = vmatmul.f32.gmra.mxu0 %v792
        %v1828 = vpop.f32.mrf.mxu0
        %v1829 = vadd.f32 0.0, %v1828
        %1830 = vmatmul.f32.gmra.mxu0 %v795
        %v1831 = vpop.f32.mrf.mxu0
        %v1832 = vadd.f32 0.0, %v1831
        %1833 = vdwg.mxu0
        %1834 = vmatpush.msra.mxu0 0.0
        %1835 = vmatpush.msra.mxu0 0.0
        %1836 = vmatpush.msra.mxu0 0.0
        %1837 = vmatpush.msra.mxu0 0.0
        %1838 = vmatpush.msra.mxu0 0.0
        %1839 = vmatpush.msra.mxu0 0.0
        %1840 = vmatpush.msra.mxu0 0.0
        %1841 = vmatpush.msra.mxu0 0.0
        %1842 = vmatpush.msra.mxu0 0.0
        %1843 = vmatpush.msra.mxu0 0.0
        %1844 = vmatpush.msra.mxu0 0.0
        %1845 = vmatpush.msra.mxu0 0.0
        %1846 = vmatpush.msra.mxu0 0.0
        %1847 = vmatpush.msra.mxu0 0.0
        %1848 = vmatpush.msra.mxu0 0.0
        %1849 = vmatpush.msra.mxu0 %v1772
        %1850 = vmatmul.f32.gmra.mxu0 %v786
        %v1851 = vpop.f32.mrf.mxu0
        %v1852 = vadd.f32 0.0, %v1851
        %1853 = vmatmul.f32.gmra.mxu0 %v789
        %v1854 = vpop.f32.mrf.mxu0
        %v1855 = vadd.f32 0.0, %v1854
        %1856 = vmatmul.f32.gmra.mxu0 %v792
        %v1857 = vpop.f32.mrf.mxu0
        %v1858 = vadd.f32 0.0, %v1857
        %1859 = vmatmul.f32.gmra.mxu0 %v795
        %v1860 = vpop.f32.mrf.mxu0
        %v1861 = vadd.f32 0.0, %v1860
        %1862 = vdwg.mxu0
        %1863 = vmatpush.msra.mxu0 0.0
        %1864 = vmatpush.msra.mxu0 0.0
        %1865 = vmatpush.msra.mxu0 0.0
        %1866 = vmatpush.msra.mxu0 0.0
        %1867 = vmatpush.msra.mxu0 0.0
        %1868 = vmatpush.msra.mxu0 0.0
        %1869 = vmatpush.msra.mxu0 0.0
        %1870 = vmatpush.msra.mxu0 0.0
        %1871 = vmatpush.msra.mxu0 0.0
        %1872 = vmatpush.msra.mxu0 0.0
        %1873 = vmatpush.msra.mxu0 0.0
        %1874 = vmatpush.msra.mxu0 0.0
        %1875 = vmatpush.msra.mxu0 0.0
        %1876 = vmatpush.msra.mxu0 0.0
        %1877 = vmatpush.msra.mxu0 0.0
        %1878 = vmatpush.msra.mxu0 %v1774
        %1879 = vmatmul.f32.gmra.mxu0 %v786
        %v1880 = vpop.f32.mrf.mxu0
        %v1881 = vadd.f32 0.0, %v1880
        %1882 = vmatmul.f32.gmra.mxu0 %v789
        %v1883 = vpop.f32.mrf.mxu0
        %v1884 = vadd.f32 0.0, %v1883
        %1885 = vmatmul.f32.gmra.mxu0 %v792
        %v1886 = vpop.f32.mrf.mxu0
        %v1887 = vadd.f32 0.0, %v1886
        %1888 = vmatmul.f32.gmra.mxu0 %v795
        %v1889 = vpop.f32.mrf.mxu0
        %v1890 = vadd.f32 0.0, %v1889
        %1891 = vdwg.mxu0
        %v1892 = vmul.f32 %v1398, %v1794
        %v1893 = vmul.f32 %v1455, %v1823
        %v1894 = vmul.f32 %v1400, %v1797
        %v1895 = vmul.f32 %v1457, %v1826
        %v1896 = vmul.f32 %v1403, %v1800
        %v1897 = vmul.f32 %v1460, %v1829
        %v1898 = vmul.f32 %v1405, %v1803
        %v1899 = vmul.f32 %v1462, %v1832
        %v1900 = vadd.f32 %v1892, %v1852
        %v1901 = vadd.f32 %v1893, %v1881
        %v1902 = vadd.f32 %v1894, %v1855
        %v1903 = vadd.f32 %v1895, %v1884
        %v1904 = vadd.f32 %v1896, %v1858
        %v1905 = vadd.f32 %v1897, %v1887
        %v1906 = vadd.f32 %v1898, %v1861
        %v1907 = vadd.f32 %v1899, %v1890
        %v1908 = vxor.u32 %v1900, 2147483648
        %v1909 = vxor.u32 %v1901, 2147483648
        %v1910 = vxor.u32 %v1902, 2147483648
        %v1911 = vxor.u32 %v1903, 2147483648
        %v1912 = vxor.u32 %v1904, 2147483648
        %v1913 = vxor.u32 %v1905, 2147483648
        %v1914 = vxor.u32 %v1906, 2147483648
        %v1915 = vxor.u32 %v1907, 2147483648
        %v1916 = vmul.f32 %v1908, 1.442695
        %v1917 = vpow.pop %v1916
        %v1918 = vmul.f32 %v1909, 1.442695
        %v1919 = vpow.pop %v1918
        %v1920 = vmul.f32 %v1910, 1.442695
        %v1921 = vpow.pop %v1920
        %v1922 = vmul.f32 %v1911, 1.442695
        %v1923 = vpow.pop %v1922
        %v1924 = vmul.f32 %v1912, 1.442695
        %v1925 = vpow.pop %v1924
        %v1926 = vmul.f32 %v1913, 1.442695
        %v1927 = vpow.pop %v1926
        %v1928 = vmul.f32 %v1914, 1.442695
        %v1929 = vpow.pop %v1928
        %v1930 = vmul.f32 %v1915, 1.442695
        %v1931 = vpow.pop %v1930
        %v1932 = vadd.f32 %v1917, 1.0
        %v1933 = vadd.f32 %v1919, 1.0
        %v1934 = vadd.f32 %v1921, 1.0
        %v1935 = vadd.f32 %v1923, 1.0
        %v1936 = vadd.f32 %v1925, 1.0
        %v1937 = vadd.f32 %v1927, 1.0
        %v1938 = vadd.f32 %v1929, 1.0
        %v1939 = vadd.f32 %v1931, 1.0
        %v1940 = vrcp.pop %v1932
        %v1941 = vmul.f32 %v1932, %v1940
        %v1942 = vsub.f32 1.0, %v1941
        %v1943 = vmul.f32 %v1940, %v1942
        %v1944 = vadd.f32 %v1940, %v1943
        %vm1945 = vweird.f32 %v1932
        %vm1946 = vweird.f32 %v1940
        %vm1947 = vmor %vm1945, %vm1946
        %v1948 = vsel %vm1947, %v1940, %v1944
        %v1949 = vand.u32 2147483647, %v1932
        %vm1950 = vcmp.eq.f32.partialorder %v1949, 8.507059e+37
        %v1951 = vand.u32 %v1932, 2147483648
        %v1952 = vor.u32 1.1754944e-38, %v1951
        %v1953 = vsel %vm1950, %v1952, %v1948
        %v1954 = vmul.f32 1.0, %v1953
        %v1955 = vrcp.pop %v1933
        %v1956 = vmul.f32 %v1933, %v1955
        %v1957 = vsub.f32 1.0, %v1956
        %v1958 = vmul.f32 %v1955, %v1957
        %v1959 = vadd.f32 %v1955, %v1958
        %vm1960 = vweird.f32 %v1933
        %vm1961 = vweird.f32 %v1955
        %vm1962 = vmor %vm1960, %vm1961
        %v1963 = vsel %vm1962, %v1955, %v1959
        %v1964 = vand.u32 2147483647, %v1933
        %vm1965 = vcmp.eq.f32.partialorder %v1964, 8.507059e+37
        %v1966 = vand.u32 %v1933, 2147483648
        %v1967 = vor.u32 1.1754944e-38, %v1966
        %v1968 = vsel %vm1965, %v1967, %v1963
        %v1969 = vmul.f32 1.0, %v1968
        %v1970 = vrcp.pop %v1934
        %v1971 = vmul.f32 %v1934, %v1970
        %v1972 = vsub.f32 1.0, %v1971
        %v1973 = vmul.f32 %v1970, %v1972
        %v1974 = vadd.f32 %v1970, %v1973
        %vm1975 = vweird.f32 %v1934
        %vm1976 = vweird.f32 %v1970
        %vm1977 = vmor %vm1975, %vm1976
        %v1978 = vsel %vm1977, %v1970, %v1974
        %v1979 = vand.u32 2147483647, %v1934
        %vm1980 = vcmp.eq.f32.partialorder %v1979, 8.507059e+37
        %v1981 = vand.u32 %v1934, 2147483648
        %v1982 = vor.u32 1.1754944e-38, %v1981
        %v1983 = vsel %vm1980, %v1982, %v1978
        %v1984 = vmul.f32 1.0, %v1983
        %v1985 = vrcp.pop %v1935
        %v1986 = vmul.f32 %v1935, %v1985
        %v1987 = vsub.f32 1.0, %v1986
        %v1988 = vmul.f32 %v1985, %v1987
        %v1989 = vadd.f32 %v1985, %v1988
        %vm1990 = vweird.f32 %v1935
        %vm1991 = vweird.f32 %v1985
        %vm1992 = vmor %vm1990, %vm1991
        %v1993 = vsel %vm1992, %v1985, %v1989
        %v1994 = vand.u32 2147483647, %v1935
        %vm1995 = vcmp.eq.f32.partialorder %v1994, 8.507059e+37
        %v1996 = vand.u32 %v1935, 2147483648
        %v1997 = vor.u32 1.1754944e-38, %v1996
        %v1998 = vsel %vm1995, %v1997, %v1993
        %v1999 = vmul.f32 1.0, %v1998
        %v2000 = vrcp.pop %v1936
        %v2001 = vmul.f32 %v1936, %v2000
        %v2002 = vsub.f32 1.0, %v2001
        %v2003 = vmul.f32 %v2000, %v2002
        %v2004 = vadd.f32 %v2000, %v2003
        %vm2005 = vweird.f32 %v1936
        %vm2006 = vweird.f32 %v2000
        %vm2007 = vmor %vm2005, %vm2006
        %v2008 = vsel %vm2007, %v2000, %v2004
        %v2009 = vand.u32 2147483647, %v1936
        %vm2010 = vcmp.eq.f32.partialorder %v2009, 8.507059e+37
        %v2011 = vand.u32 %v1936, 2147483648
        %v2012 = vor.u32 1.1754944e-38, %v2011
        %v2013 = vsel %vm2010, %v2012, %v2008
        %v2014 = vmul.f32 1.0, %v2013
        %v2015 = vrcp.pop %v1937
        %v2016 = vmul.f32 %v1937, %v2015
        %v2017 = vsub.f32 1.0, %v2016
        %v2018 = vmul.f32 %v2015, %v2017
        %v2019 = vadd.f32 %v2015, %v2018
        %vm2020 = vweird.f32 %v1937
        %vm2021 = vweird.f32 %v2015
        %vm2022 = vmor %vm2020, %vm2021
        %v2023 = vsel %vm2022, %v2015, %v2019
        %v2024 = vand.u32 2147483647, %v1937
        %vm2025 = vcmp.eq.f32.partialorder %v2024, 8.507059e+37
        %v2026 = vand.u32 %v1937, 2147483648
        %v2027 = vor.u32 1.1754944e-38, %v2026
        %v2028 = vsel %vm2025, %v2027, %v2023
        %v2029 = vmul.f32 1.0, %v2028
        %v2030 = vrcp.pop %v1938
        %v2031 = vmul.f32 %v1938, %v2030
        %v2032 = vsub.f32 1.0, %v2031
        %v2033 = vmul.f32 %v2030, %v2032
        %v2034 = vadd.f32 %v2030, %v2033
        %vm2035 = vweird.f32 %v1938
        %vm2036 = vweird.f32 %v2030
        %vm2037 = vmor %vm2035, %vm2036
        %v2038 = vsel %vm2037, %v2030, %v2034
        %v2039 = vand.u32 2147483647, %v1938
        %vm2040 = vcmp.eq.f32.partialorder %v2039, 8.507059e+37
        %v2041 = vand.u32 %v1938, 2147483648
        %v2042 = vor.u32 1.1754944e-38, %v2041
        %v2043 = vsel %vm2040, %v2042, %v2038
        %v2044 = vmul.f32 1.0, %v2043
        %v2045 = vrcp.pop %v1939
        %v2046 = vmul.f32 %v1939, %v2045
        %v2047 = vsub.f32 1.0, %v2046
        %v2048 = vmul.f32 %v2045, %v2047
        %v2049 = vadd.f32 %v2045, %v2048
        %vm2050 = vweird.f32 %v1939
        %vm2051 = vweird.f32 %v2045
        %vm2052 = vmor %vm2050, %vm2051
        %v2053 = vsel %vm2052, %v2045, %v2049
        %v2054 = vand.u32 2147483647, %v1939
        %vm2055 = vcmp.eq.f32.partialorder %v2054, 8.507059e+37
        %v2056 = vand.u32 %v1939, 2147483648
        %v2057 = vor.u32 1.1754944e-38, %v2056
        %v2058 = vsel %vm2055, %v2057, %v2053
        %v2059 = vmul.f32 1.0, %v2058
        %v2060 = vmul.f32 %v1900, %v1954
        %v2061 = vmul.f32 %v1901, %v1969
        %v2062 = vmul.f32 %v1902, %v1984
        %v2063 = vmul.f32 %v1903, %v1999
        %v2064 = vmul.f32 %v1904, %v2014
        %v2065 = vmul.f32 %v1905, %v2029
        %v2066 = vmul.f32 %v1906, %v2044
        %v2067 = vmul.f32 %v1907, %v2059
        %v2068 = vrot.slane %v2060, 7
        %v2069 = vrot.slane %v2061, 7
        %v2070 = vrot.slane %v2062, 7
        %v2071 = vrot.slane %v2063, 7
        %v2072 = vrot.slane %v2064, 7
        %v2073 = vrot.slane %v2065, 7
        %v2074 = vrot.slane %v2066, 7
        %v2075 = vrot.slane %v2067, 7
        %v2076 = vsel %vm951, %v2072, %v2074
        %v2077 = vsel %vm951, %v2073, %v2075
        %v2078 = vsel %vm951, %v2070, %v2072
        %v2079 = vsel %vm951, %v2071, %v2073
        %v2080 = vsel %vm951, %v2068, %v2070
        %v2081 = vsel %vm951, %v2069, %v2071
        %v2082 = vsel %vm951, %v2074, %v2068
        %v2083 = vsel %vm951, %v2075, %v2069
        %v2084 = vsel %vm960, 0.0, %v2082
        %v2085 = vsel %vm960, 0.0, %v2083
        %v2086 = vsel %vm961, 0.0, %v2080
        %v2087 = vsel %vm961, 0.0, %v2081
        %v2088 = vsel %vm962, 0.0, %v2078
        %v2089 = vsel %vm962, 0.0, %v2079
        %v2090 = vsel %vm963, 0.0, %v2076
        %v2091 = vsel %vm963, 0.0, %v2077
        %v2092 = vrot.slane %v2060, 1
        %v2093 = vrot.slane %v2061, 1
        %v2094 = vrot.slane %v2062, 1
        %v2095 = vrot.slane %v2063, 1
        %v2096 = vrot.slane %v2064, 1
        %v2097 = vrot.slane %v2065, 1
        %v2098 = vrot.slane %v2066, 1
        %v2099 = vrot.slane %v2067, 1
        %v2100 = vsel %vm972, %v2096, %v2098
        %v2101 = vsel %vm972, %v2097, %v2099
        %v2102 = vsel %vm972, %v2094, %v2096
        %v2103 = vsel %vm972, %v2095, %v2097
        %v2104 = vsel %vm972, %v2092, %v2094
        %v2105 = vsel %vm972, %v2093, %v2095
        %v2106 = vsel %vm972, %v2098, %v2092
        %v2107 = vsel %vm972, %v2099, %v2093
        %v2108 = vsel %vm981, 0.0, %v2104
        %v2109 = vsel %vm981, 0.0, %v2105
        %v2110 = vsel %vm982, 0.0, %v2102
        %v2111 = vsel %vm982, 0.0, %v2103
        %v2112 = vsel %vm983, 0.0, %v2100
        %v2113 = vsel %vm983, 0.0, %v2101
        %v2114 = vsel %vm984, 0.0, %v2106
        %v2115 = vsel %vm984, 0.0, %v2107
        %v2116 = vpack.c.bf16 %v2086, %v2084
        %v2117 = vpack.c.bf16 %v2087, %v2085
        %v2118 = vpack.c.bf16 %v2062, %v2060
        %v2119 = vpack.c.bf16 %v2063, %v2061
        %v2120 = vpack.c.bf16 %v2110, %v2108
        %v2121 = vpack.c.bf16 %v2111, %v2109
        %v2122 = vpack.c.bf16 %v2090, %v2088
        %v2123 = vpack.c.bf16 %v2091, %v2089
        %v2124 = vpack.c.bf16 %v2066, %v2064
        %v2125 = vpack.c.bf16 %v2067, %v2065
        %v2126 = vpack.c.bf16 %v2114, %v2112
        %v2127 = vpack.c.bf16 %v2115, %v2113
        %v2128 = vld [vmem:[#allocation10] sm:$0xff]
        %v2129 = vld [vmem:[#allocation10 + $0x8] sm:$0xff]
        %v2130 = vld [vmem:[#allocation10 + $0x10] sm:$0xff]
        %v2131 = vld [vmem:[#allocation10 + $0x18] sm:$0xff]
        %v2132 = vld [vmem:[#allocation10 + $0x20] sm:$0xff]
        %v2133 = vld [vmem:[#allocation10 + $0x28] sm:$0xff]
        %v2134 = vld [vmem:[#allocation10 + $0x30] sm:$0xff]
        %v2135 = vld [vmem:[#allocation10 + $0x38] sm:$0xff]
        %v2136 = vld [vmem:[#allocation10 + $0x40] sm:$0xff]
        %v2137 = vld [vmem:[#allocation10 + $0x48] sm:$0xff]
        %v2138 = vld [vmem:[#allocation10 + $0x50] sm:$0xff]
        %v2139 = vld [vmem:[#allocation10 + $0x58] sm:$0xff]
        %v2140 = vld [vmem:[#allocation10 + $0x60] sm:$0xff]
        %v2141 = vld [vmem:[#allocation10 + $0x68] sm:$0xff]
        %v2142 = vld [vmem:[#allocation10 + $0x70] sm:$0xff]
        %v2143 = vld [vmem:[#allocation10 + $0x78] sm:$0xff]
        %v2144 = vld [vmem:[#allocation10 + $0x80] sm:$0xff]
        %v2145 = vld [vmem:[#allocation10 + $0x88] sm:$0xff]
        %v2146 = vld [vmem:[#allocation10 + $0x90] sm:$0xff]
        %v2147 = vld [vmem:[#allocation10 + $0x98] sm:$0xff]
        %v2148 = vld [vmem:[#allocation10 + $0xa0] sm:$0xff]
        %v2149 = vld [vmem:[#allocation10 + $0xa8] sm:$0xff]
        %v2150 = vld [vmem:[#allocation10 + $0xb0] sm:$0xff]
        %v2151 = vld [vmem:[#allocation10 + $0xb8] sm:$0xff]
        %v2152 = vld [vmem:[#allocation10 + $0xc0] sm:$0xff]
        %v2153 = vld [vmem:[#allocation10 + $0xc8] sm:$0xff]
        %v2154 = vld [vmem:[#allocation10 + $0xd0] sm:$0xff]
        %v2155 = vld [vmem:[#allocation10 + $0xd8] sm:$0xff]
        %v2156 = vld [vmem:[#allocation10 + $0xe0] sm:$0xff]
        %v2157 = vld [vmem:[#allocation10 + $0xe8] sm:$0xff]
        %v2158 = vld [vmem:[#allocation10 + $0xf0] sm:$0xff]
        %v2159 = vld [vmem:[#allocation10 + $0xf8] sm:$0xff]
        %v2160 = vld [vmem:[#allocation10 + $0x100] sm:$0xff]
        %v2161 = vld [vmem:[#allocation10 + $0x108] sm:$0xff]
        %v2162 = vld [vmem:[#allocation10 + $0x110] sm:$0xff]
        %v2163 = vld [vmem:[#allocation10 + $0x118] sm:$0xff]
        %v2164 = vld [vmem:[#allocation10 + $0x120] sm:$0xff]
        %v2165 = vld [vmem:[#allocation10 + $0x128] sm:$0xff]
        %v2166 = vld [vmem:[#allocation10 + $0x130] sm:$0xff]
        %v2167 = vld [vmem:[#allocation10 + $0x138] sm:$0xff]
        %v2168 = vld [vmem:[#allocation10 + $0x140] sm:$0xff]
        %v2169 = vld [vmem:[#allocation10 + $0x148] sm:$0xff]
        %v2170 = vld [vmem:[#allocation10 + $0x150] sm:$0xff]
        %v2171 = vld [vmem:[#allocation10 + $0x158] sm:$0xff]
        %v2172 = vld [vmem:[#allocation10 + $0x160] sm:$0xff]
        %v2173 = vld [vmem:[#allocation10 + $0x168] sm:$0xff]
        %v2174 = vld [vmem:[#allocation10 + $0x170] sm:$0xff]
        %v2175 = vld [vmem:[#allocation10 + $0x178] sm:$0xff]
        %v2176 = vld [vmem:[#allocation10 + $0x180] sm:$0xff]
        %v2177 = vld [vmem:[#allocation10 + $0x188] sm:$0xff]
        %v2178 = vld [vmem:[#allocation10 + $0x190] sm:$0xff]
        %v2179 = vld [vmem:[#allocation10 + $0x198] sm:$0xff]
        %v2180 = vld [vmem:[#allocation10 + $0x1a0] sm:$0xff]
        %v2181 = vld [vmem:[#allocation10 + $0x1a8] sm:$0xff]
        %v2182 = vld [vmem:[#allocation10 + $0x1b0] sm:$0xff]
        %v2183 = vld [vmem:[#allocation10 + $0x1b8] sm:$0xff]
        %v2184 = vld [vmem:[#allocation10 + $0x1c0] sm:$0xff]
        %v2185 = vld [vmem:[#allocation10 + $0x1c8] sm:$0xff]
        %v2186 = vld [vmem:[#allocation10 + $0x1d0] sm:$0xff]
        %v2187 = vld [vmem:[#allocation10 + $0x1d8] sm:$0xff]
        %v2188 = vld [vmem:[#allocation10 + $0x1e0] sm:$0xff]
        %v2189 = vld [vmem:[#allocation10 + $0x1e8] sm:$0xff]
        %v2190 = vld [vmem:[#allocation10 + $0x1f0] sm:$0xff]
        %v2191 = vld [vmem:[#allocation10 + $0x1f8] sm:$0xff]
        %v2192 = vld [vmem:[#allocation10 + $0x200] sm:$0xff]
        %v2193 = vld [vmem:[#allocation10 + $0x208] sm:$0xff]
        %v2194 = vld [vmem:[#allocation10 + $0x210] sm:$0xff]
        %v2195 = vld [vmem:[#allocation10 + $0x218] sm:$0xff]
        %v2196 = vld [vmem:[#allocation10 + $0x220] sm:$0xff]
        %v2197 = vld [vmem:[#allocation10 + $0x228] sm:$0xff]
        %v2198 = vld [vmem:[#allocation10 + $0x230] sm:$0xff]
        %v2199 = vld [vmem:[#allocation10 + $0x238] sm:$0xff]
        %v2200 = vld [vmem:[#allocation10 + $0x240] sm:$0xff]
        %v2201 = vld [vmem:[#allocation10 + $0x248] sm:$0xff]
        %v2202 = vld [vmem:[#allocation10 + $0x250] sm:$0xff]
        %v2203 = vld [vmem:[#allocation10 + $0x258] sm:$0xff]
        %v2204 = vld [vmem:[#allocation10 + $0x260] sm:$0xff]
        %v2205 = vld [vmem:[#allocation10 + $0x268] sm:$0xff]
        %v2206 = vld [vmem:[#allocation10 + $0x270] sm:$0xff]
        %v2207 = vld [vmem:[#allocation10 + $0x278] sm:$0xff]
        %v2208 = vld [vmem:[#allocation10 + $0x280] sm:$0xff]
        %v2209 = vld [vmem:[#allocation10 + $0x288] sm:$0xff]
        %v2210 = vld [vmem:[#allocation10 + $0x290] sm:$0xff]
        %v2211 = vld [vmem:[#allocation10 + $0x298] sm:$0xff]
        %v2212 = vld [vmem:[#allocation10 + $0x2a0] sm:$0xff]
        %v2213 = vld [vmem:[#allocation10 + $0x2a8] sm:$0xff]
        %v2214 = vld [vmem:[#allocation10 + $0x2b0] sm:$0xff]
        %v2215 = vld [vmem:[#allocation10 + $0x2b8] sm:$0xff]
        %v2216 = vld [vmem:[#allocation10 + $0x2c0] sm:$0xff]
        %v2217 = vld [vmem:[#allocation10 + $0x2c8] sm:$0xff]
        %v2218 = vld [vmem:[#allocation10 + $0x2d0] sm:$0xff]
        %v2219 = vld [vmem:[#allocation10 + $0x2d8] sm:$0xff]
        %v2220 = vld [vmem:[#allocation10 + $0x2e0] sm:$0xff]
        %v2221 = vld [vmem:[#allocation10 + $0x2e8] sm:$0xff]
        %v2222 = vld [vmem:[#allocation10 + $0x2f0] sm:$0xff]
        %v2223 = vld [vmem:[#allocation10 + $0x2f8] sm:$0xff]
        %v2224 = vpack.c.bf16 %v653, %v652
        %v2225 = vpack.c.bf16 %v655, %v654
        %v2226 = vld [vmem:[#allocation11] sm:$0xff]
        %v2227 = vld [vmem:[#allocation11 + $0x8] sm:$0xff]
        %v2228 = vld [vmem:[#allocation11 + $0x10] sm:$0xff]
        %v2229 = vld [vmem:[#allocation11 + $0x18] sm:$0xff]
        %v2230 = vld [vmem:[#allocation11 + $0x20] sm:$0xff]
        %v2231 = vld [vmem:[#allocation11 + $0x28] sm:$0xff]
        %v2232 = vld [vmem:[#allocation11 + $0x30] sm:$0xff]
        %v2233 = vld [vmem:[#allocation11 + $0x38] sm:$0xff]
        %v2234 = vld [vmem:[#allocation11 + $0x40] sm:$0xff]
        %v2235 = vld [vmem:[#allocation11 + $0x48] sm:$0xff]
        %v2236 = vld [vmem:[#allocation11 + $0x50] sm:$0xff]
        %v2237 = vld [vmem:[#allocation11 + $0x58] sm:$0xff]
        %v2238 = vld [vmem:[#allocation11 + $0x60] sm:$0xff]
        %v2239 = vld [vmem:[#allocation11 + $0x68] sm:$0xff]
        %v2240 = vld [vmem:[#allocation11 + $0x70] sm:$0xff]
        %v2241 = vld [vmem:[#allocation11 + $0x78] sm:$0xff]
        %v2258 = vunpack.c.l.b16 %v2226
        %v2259 = vunpack.c.h.b16 %v2226
        %v2260 = vunpack.c.l.b16 %v2227
        %v2261 = vunpack.c.h.b16 %v2227
        %v2262 = vunpack.c.l.b16 %v2228
        %v2263 = vunpack.c.h.b16 %v2228
        %v2264 = vunpack.c.l.b16 %v2229
        %v2265 = vunpack.c.h.b16 %v2229
        %v2266 = vunpack.c.l.b16 %v2230
        %v2267 = vunpack.c.h.b16 %v2230
        %v2268 = vunpack.c.l.b16 %v2231
        %v2269 = vunpack.c.h.b16 %v2231
        %v2270 = vunpack.c.l.b16 %v2232
        %v2271 = vunpack.c.h.b16 %v2232
        %v2272 = vunpack.c.l.b16 %v2233
        %v2273 = vunpack.c.h.b16 %v2233
        %v2274 = vunpack.c.l.b16 %v2234
        %v2275 = vunpack.c.h.b16 %v2234
        %v2276 = vunpack.c.l.b16 %v2235
        %v2277 = vunpack.c.h.b16 %v2235
        %v2278 = vunpack.c.l.b16 %v2236
        %v2279 = vunpack.c.h.b16 %v2236
        %v2280 = vunpack.c.l.b16 %v2237
        %v2281 = vunpack.c.h.b16 %v2237
        %v2282 = vunpack.c.l.b16 %v2238
        %v2283 = vunpack.c.h.b16 %v2238
        %v2284 = vunpack.c.l.b16 %v2239
        %v2285 = vunpack.c.h.b16 %v2239
        %v2286 = vunpack.c.l.b16 %v2240
        %v2287 = vunpack.c.h.b16 %v2240
        %v2288 = vunpack.c.l.b16 %v2241
        %v2289 = vunpack.c.h.b16 %v2241
        %v2290 = vpack.c.b16 %v2260, %v2258
        %v2291 = vpack.c.b16 %v2261, %v2259
        %v2292 = vpack.c.b16 %v2264, %v2262
        %v2293 = vpack.c.b16 %v2265, %v2263
        %v2294 = vpack.c.b16 %v2268, %v2266
        %v2295 = vpack.c.b16 %v2269, %v2267
        %v2296 = vpack.c.b16 %v2272, %v2270
        %v2297 = vpack.c.b16 %v2273, %v2271
        %v2298 = vpack.c.b16 %v2276, %v2274
        %v2299 = vpack.c.b16 %v2277, %v2275
        %v2300 = vpack.c.b16 %v2280, %v2278
        %v2301 = vpack.c.b16 %v2281, %v2279
        %v2302 = vpack.c.b16 %v2284, %v2282
        %v2303 = vpack.c.b16 %v2285, %v2283
        %v2304 = vpack.c.b16 %v2288, %v2286
        %v2305 = vpack.c.b16 %v2289, %v2287
        %2322 = vmatpush.bf16.msra.mxu0 %v2304
        %2323 = vmatpush.bf16.msra.mxu0 %v2302
        %2324 = vmatpush.bf16.msra.mxu0 %v2300
        %2325 = vmatpush.bf16.msra.mxu0 %v2298
        %2326 = vmatpush.bf16.msra.mxu0 %v2296
        %2327 = vmatpush.bf16.msra.mxu0 %v2294
        %2328 = vmatpush.bf16.msra.mxu0 %v2292
        %2329 = vmatpush.bf16.msra.mxu0 %v2290
        %2330 = vmatmul.bf16.gmra.mxu0 %v2224
        %v2331 = vpop.f32.mrf.mxu0
        %v2332 = vadd.f32 0.0, %v2331
        %v2333 = vpop.f32.mrf.mxu0
        %v2334 = vadd.f32 0.0, %v2333
        %2335 = vmatmul.bf16.gmra.mxu0 %v2225
        %v2336 = vpop.f32.mrf.mxu0
        %v2337 = vadd.f32 0.0, %v2336
        %v2338 = vpop.f32.mrf.mxu0
        %v2339 = vadd.f32 0.0, %v2338
        %2340 = vdwg.mxu0
        %2341 = vmatpush.bf16.msra.mxu0 %v2305
        %2342 = vmatpush.bf16.msra.mxu0 %v2303
        %2343 = vmatpush.bf16.msra.mxu0 %v2301
        %2344 = vmatpush.bf16.msra.mxu0 %v2299
        %2345 = vmatpush.bf16.msra.mxu0 %v2297
        %2346 = vmatpush.bf16.msra.mxu0 %v2295
        %2347 = vmatpush.bf16.msra.mxu0 %v2293
        %2348 = vmatpush.bf16.msra.mxu0 %v2291
        %2349 = vmatmul.bf16.gmra.mxu0 %v2224
        %v2350 = vpop.f32.mrf.mxu0
        %v2351 = vadd.f32 0.0, %v2350
        %v2352 = vpop.f32.mrf.mxu0
        %v2353 = vadd.f32 0.0, %v2352
        %2354 = vmatmul.bf16.gmra.mxu0 %v2225
        %v2355 = vpop.f32.mrf.mxu0
        %v2356 = vadd.f32 0.0, %v2355
        %v2357 = vpop.f32.mrf.mxu0
        %v2358 = vadd.f32 0.0, %v2357
        %2359 = vdwg.mxu0
        %v2456 = vunpack.c.l.b16 %v2128
        %v2457 = vunpack.c.h.b16 %v2128
        %v2458 = vunpack.c.l.b16 %v2129
        %v2459 = vunpack.c.h.b16 %v2129
        %v2460 = vunpack.c.l.b16 %v2130
        %v2461 = vunpack.c.h.b16 %v2130
        %v2462 = vunpack.c.l.b16 %v2131
        %v2463 = vunpack.c.h.b16 %v2131
        %v2464 = vunpack.c.l.b16 %v2132
        %v2465 = vunpack.c.h.b16 %v2132
        %v2466 = vunpack.c.l.b16 %v2133
        %v2467 = vunpack.c.h.b16 %v2133
        %v2468 = vunpack.c.l.b16 %v2134
        %v2469 = vunpack.c.h.b16 %v2134
        %v2470 = vunpack.c.l.b16 %v2135
        %v2471 = vunpack.c.h.b16 %v2135
        %v2472 = vunpack.c.l.b16 %v2136
        %v2473 = vunpack.c.h.b16 %v2136
        %v2474 = vunpack.c.l.b16 %v2137
        %v2475 = vunpack.c.h.b16 %v2137
        %v2476 = vunpack.c.l.b16 %v2138
        %v2477 = vunpack.c.h.b16 %v2138
        %v2478 = vunpack.c.l.b16 %v2139
        %v2479 = vunpack.c.h.b16 %v2139
        %v2480 = vunpack.c.l.b16 %v2140
        %v2481 = vunpack.c.h.b16 %v2140
        %v2482 = vunpack.c.l.b16 %v2141
        %v2483 = vunpack.c.h.b16 %v2141
        %v2484 = vunpack.c.l.b16 %v2142
        %v2485 = vunpack.c.h.b16 %v2142
        %v2486 = vunpack.c.l.b16 %v2143
        %v2487 = vunpack.c.h.b16 %v2143
        %v2488 = vunpack.c.l.b16 %v2144
        %v2489 = vunpack.c.h.b16 %v2144
        %v2490 = vunpack.c.l.b16 %v2145
        %v2491 = vunpack.c.h.b16 %v2145
        %v2492 = vunpack.c.l.b16 %v2146
        %v2493 = vunpack.c.h.b16 %v2146
        %v2494 = vunpack.c.l.b16 %v2147
        %v2495 = vunpack.c.h.b16 %v2147
        %v2496 = vunpack.c.l.b16 %v2148
        %v2497 = vunpack.c.h.b16 %v2148
        %v2498 = vunpack.c.l.b16 %v2149
        %v2499 = vunpack.c.h.b16 %v2149
        %v2500 = vunpack.c.l.b16 %v2150
        %v2501 = vunpack.c.h.b16 %v2150
        %v2502 = vunpack.c.l.b16 %v2151
        %v2503 = vunpack.c.h.b16 %v2151
        %v2504 = vunpack.c.l.b16 %v2152
        %v2505 = vunpack.c.h.b16 %v2152
        %v2506 = vunpack.c.l.b16 %v2153
        %v2507 = vunpack.c.h.b16 %v2153
        %v2508 = vunpack.c.l.b16 %v2154
        %v2509 = vunpack.c.h.b16 %v2154
        %v2510 = vunpack.c.l.b16 %v2155
        %v2511 = vunpack.c.h.b16 %v2155
        %v2512 = vunpack.c.l.b16 %v2156
        %v2513 = vunpack.c.h.b16 %v2156
        %v2514 = vunpack.c.l.b16 %v2157
        %v2515 = vunpack.c.h.b16 %v2157
        %v2516 = vunpack.c.l.b16 %v2158
        %v2517 = vunpack.c.h.b16 %v2158
        %v2518 = vunpack.c.l.b16 %v2159
        %v2519 = vunpack.c.h.b16 %v2159
        %v2520 = vunpack.c.l.b16 %v2160
        %v2521 = vunpack.c.h.b16 %v2160
        %v2522 = vunpack.c.l.b16 %v2161
        %v2523 = vunpack.c.h.b16 %v2161
        %v2524 = vunpack.c.l.b16 %v2162
        %v2525 = vunpack.c.h.b16 %v2162
        %v2526 = vunpack.c.l.b16 %v2163
        %v2527 = vunpack.c.h.b16 %v2163
        %v2528 = vunpack.c.l.b16 %v2164
        %v2529 = vunpack.c.h.b16 %v2164
        %v2530 = vunpack.c.l.b16 %v2165
        %v2531 = vunpack.c.h.b16 %v2165
        %v2532 = vunpack.c.l.b16 %v2166
        %v2533 = vunpack.c.h.b16 %v2166
        %v2534 = vunpack.c.l.b16 %v2167
        %v2535 = vunpack.c.h.b16 %v2167
        %v2536 = vunpack.c.l.b16 %v2168
        %v2537 = vunpack.c.h.b16 %v2168
        %v2538 = vunpack.c.l.b16 %v2169
        %v2539 = vunpack.c.h.b16 %v2169
        %v2540 = vunpack.c.l.b16 %v2170
        %v2541 = vunpack.c.h.b16 %v2170
        %v2542 = vunpack.c.l.b16 %v2171
        %v2543 = vunpack.c.h.b16 %v2171
        %v2544 = vunpack.c.l.b16 %v2172
        %v2545 = vunpack.c.h.b16 %v2172
        %v2546 = vunpack.c.l.b16 %v2173
        %v2547 = vunpack.c.h.b16 %v2173
        %v2548 = vunpack.c.l.b16 %v2174
        %v2549 = vunpack.c.h.b16 %v2174
        %v2550 = vunpack.c.l.b16 %v2175
        %v2551 = vunpack.c.h.b16 %v2175
        %v2552 = vunpack.c.l.b16 %v2176
        %v2553 = vunpack.c.h.b16 %v2176
        %v2554 = vunpack.c.l.b16 %v2177
        %v2555 = vunpack.c.h.b16 %v2177
        %v2556 = vunpack.c.l.b16 %v2178
        %v2557 = vunpack.c.h.b16 %v2178
        %v2558 = vunpack.c.l.b16 %v2179
        %v2559 = vunpack.c.h.b16 %v2179
        %v2560 = vunpack.c.l.b16 %v2180
        %v2561 = vunpack.c.h.b16 %v2180
        %v2562 = vunpack.c.l.b16 %v2181
        %v2563 = vunpack.c.h.b16 %v2181
        %v2564 = vunpack.c.l.b16 %v2182
        %v2565 = vunpack.c.h.b16 %v2182
        %v2566 = vunpack.c.l.b16 %v2183
        %v2567 = vunpack.c.h.b16 %v2183
        %v2568 = vunpack.c.l.b16 %v2184
        %v2569 = vunpack.c.h.b16 %v2184
        %v2570 = vunpack.c.l.b16 %v2185
        %v2571 = vunpack.c.h.b16 %v2185
        %v2572 = vunpack.c.l.b16 %v2186
        %v2573 = vunpack.c.h.b16 %v2186
        %v2574 = vunpack.c.l.b16 %v2187
        %v2575 = vunpack.c.h.b16 %v2187
        %v2576 = vunpack.c.l.b16 %v2188
        %v2577 = vunpack.c.h.b16 %v2188
        %v2578 = vunpack.c.l.b16 %v2189
        %v2579 = vunpack.c.h.b16 %v2189
        %v2580 = vunpack.c.l.b16 %v2190
        %v2581 = vunpack.c.h.b16 %v2190
        %v2582 = vunpack.c.l.b16 %v2191
        %v2583 = vunpack.c.h.b16 %v2191
        %v2584 = vunpack.c.l.b16 %v2192
        %v2585 = vunpack.c.h.b16 %v2192
        %v2586 = vunpack.c.l.b16 %v2193
        %v2587 = vunpack.c.h.b16 %v2193
        %v2588 = vunpack.c.l.b16 %v2194
        %v2589 = vunpack.c.h.b16 %v2194
        %v2590 = vunpack.c.l.b16 %v2195
        %v2591 = vunpack.c.h.b16 %v2195
        %v2592 = vunpack.c.l.b16 %v2196
        %v2593 = vunpack.c.h.b16 %v2196
        %v2594 = vunpack.c.l.b16 %v2197
        %v2595 = vunpack.c.h.b16 %v2197
        %v2596 = vunpack.c.l.b16 %v2198
        %v2597 = vunpack.c.h.b16 %v2198
        %v2598 = vunpack.c.l.b16 %v2199
        %v2599 = vunpack.c.h.b16 %v2199
        %v2600 = vunpack.c.l.b16 %v2200
        %v2601 = vunpack.c.h.b16 %v2200
        %v2602 = vunpack.c.l.b16 %v2201
        %v2603 = vunpack.c.h.b16 %v2201
        %v2604 = vunpack.c.l.b16 %v2202
        %v2605 = vunpack.c.h.b16 %v2202
        %v2606 = vunpack.c.l.b16 %v2203
        %v2607 = vunpack.c.h.b16 %v2203
        %v2608 = vunpack.c.l.b16 %v2204
        %v2609 = vunpack.c.h.b16 %v2204
        %v2610 = vunpack.c.l.b16 %v2205
        %v2611 = vunpack.c.h.b16 %v2205
        %v2612 = vunpack.c.l.b16 %v2206
        %v2613 = vunpack.c.h.b16 %v2206
        %v2614 = vunpack.c.l.b16 %v2207
        %v2615 = vunpack.c.h.b16 %v2207
        %v2616 = vunpack.c.l.b16 %v2208
        %v2617 = vunpack.c.h.b16 %v2208
        %v2618 = vunpack.c.l.b16 %v2209
        %v2619 = vunpack.c.h.b16 %v2209
        %v2620 = vunpack.c.l.b16 %v2210
        %v2621 = vunpack.c.h.b16 %v2210
        %v2622 = vunpack.c.l.b16 %v2211
        %v2623 = vunpack.c.h.b16 %v2211
        %v2624 = vunpack.c.l.b16 %v2212
        %v2625 = vunpack.c.h.b16 %v2212
        %v2626 = vunpack.c.l.b16 %v2213
        %v2627 = vunpack.c.h.b16 %v2213
        %v2628 = vunpack.c.l.b16 %v2214
        %v2629 = vunpack.c.h.b16 %v2214
        %v2630 = vunpack.c.l.b16 %v2215
        %v2631 = vunpack.c.h.b16 %v2215
        %v2632 = vunpack.c.l.b16 %v2216
        %v2633 = vunpack.c.h.b16 %v2216
        %v2634 = vunpack.c.l.b16 %v2217
        %v2635 = vunpack.c.h.b16 %v2217
        %v2636 = vunpack.c.l.b16 %v2218
        %v2637 = vunpack.c.h.b16 %v2218
        %v2638 = vunpack.c.l.b16 %v2219
        %v2639 = vunpack.c.h.b16 %v2219
        %v2640 = vunpack.c.l.b16 %v2220
        %v2641 = vunpack.c.h.b16 %v2220
        %v2642 = vunpack.c.l.b16 %v2221
        %v2643 = vunpack.c.h.b16 %v2221
        %v2644 = vunpack.c.l.b16 %v2222
        %v2645 = vunpack.c.h.b16 %v2222
        %v2646 = vunpack.c.l.b16 %v2223
        %v2647 = vunpack.c.h.b16 %v2223
        %v2648 = vpack.c.b16 %v2458, %v2456
        %v2649 = vpack.c.b16 %v2459, %v2457
        %v2650 = vpack.c.b16 %v2462, %v2460
        %v2651 = vpack.c.b16 %v2463, %v2461
        %v2652 = vpack.c.b16 %v2466, %v2464
        %v2653 = vpack.c.b16 %v2467, %v2465
        %v2654 = vpack.c.b16 %v2470, %v2468
        %v2655 = vpack.c.b16 %v2471, %v2469
        %v2656 = vpack.c.b16 %v2474, %v2472
        %v2657 = vpack.c.b16 %v2475, %v2473
        %v2658 = vpack.c.b16 %v2478, %v2476
        %v2659 = vpack.c.b16 %v2479, %v2477
        %v2660 = vpack.c.b16 %v2482, %v2480
        %v2661 = vpack.c.b16 %v2483, %v2481
        %v2662 = vpack.c.b16 %v2486, %v2484
        %v2663 = vpack.c.b16 %v2487, %v2485
        %v2664 = vpack.c.b16 %v2490, %v2488
        %v2665 = vpack.c.b16 %v2491, %v2489
        %v2666 = vpack.c.b16 %v2494, %v2492
        %v2667 = vpack.c.b16 %v2495, %v2493
        %v2668 = vpack.c.b16 %v2498, %v2496
        %v2669 = vpack.c.b16 %v2499, %v2497
        %v2670 = vpack.c.b16 %v2502, %v2500
        %v2671 = vpack.c.b16 %v2503, %v2501
        %v2672 = vpack.c.b16 %v2506, %v2504
        %v2673 = vpack.c.b16 %v2507, %v2505
        %v2674 = vpack.c.b16 %v2510, %v2508
        %v2675 = vpack.c.b16 %v2511, %v2509
        %v2676 = vpack.c.b16 %v2514, %v2512
        %v2677 = vpack.c.b16 %v2515, %v2513
        %v2678 = vpack.c.b16 %v2518, %v2516
        %v2679 = vpack.c.b16 %v2519, %v2517
        %v2680 = vpack.c.b16 %v2522, %v2520
        %v2681 = vpack.c.b16 %v2523, %v2521
        %v2682 = vpack.c.b16 %v2526, %v2524
        %v2683 = vpack.c.b16 %v2527, %v2525
        %v2684 = vpack.c.b16 %v2530, %v2528
        %v2685 = vpack.c.b16 %v2531, %v2529
        %v2686 = vpack.c.b16 %v2534, %v2532
        %v2687 = vpack.c.b16 %v2535, %v2533
        %v2688 = vpack.c.b16 %v2538, %v2536
        %v2689 = vpack.c.b16 %v2539, %v2537
        %v2690 = vpack.c.b16 %v2542, %v2540
        %v2691 = vpack.c.b16 %v2543, %v2541
        %v2692 = vpack.c.b16 %v2546, %v2544
        %v2693 = vpack.c.b16 %v2547, %v2545
        %v2694 = vpack.c.b16 %v2550, %v2548
        %v2695 = vpack.c.b16 %v2551, %v2549
        %v2696 = vpack.c.b16 %v2554, %v2552
        %v2697 = vpack.c.b16 %v2555, %v2553
        %v2698 = vpack.c.b16 %v2558, %v2556
        %v2699 = vpack.c.b16 %v2559, %v2557
        %v2700 = vpack.c.b16 %v2562, %v2560
        %v2701 = vpack.c.b16 %v2563, %v2561
        %v2702 = vpack.c.b16 %v2566, %v2564
        %v2703 = vpack.c.b16 %v2567, %v2565
        %v2704 = vpack.c.b16 %v2570, %v2568
        %v2705 = vpack.c.b16 %v2571, %v2569
        %v2706 = vpack.c.b16 %v2574, %v2572
        %v2707 = vpack.c.b16 %v2575, %v2573
        %v2708 = vpack.c.b16 %v2578, %v2576
        %v2709 = vpack.c.b16 %v2579, %v2577
        %v2710 = vpack.c.b16 %v2582, %v2580
        %v2711 = vpack.c.b16 %v2583, %v2581
        %v2712 = vpack.c.b16 %v2586, %v2584
        %v2713 = vpack.c.b16 %v2587, %v2585
        %v2714 = vpack.c.b16 %v2590, %v2588
        %v2715 = vpack.c.b16 %v2591, %v2589
        %v2716 = vpack.c.b16 %v2594, %v2592
        %v2717 = vpack.c.b16 %v2595, %v2593
        %v2718 = vpack.c.b16 %v2598, %v2596
        %v2719 = vpack.c.b16 %v2599, %v2597
        %v2720 = vpack.c.b16 %v2602, %v2600
        %v2721 = vpack.c.b16 %v2603, %v2601
        %v2722 = vpack.c.b16 %v2606, %v2604
        %v2723 = vpack.c.b16 %v2607, %v2605
        %v2724 = vpack.c.b16 %v2610, %v2608
        %v2725 = vpack.c.b16 %v2611, %v2609
        %v2726 = vpack.c.b16 %v2614, %v2612
        %v2727 = vpack.c.b16 %v2615, %v2613
        %v2728 = vpack.c.b16 %v2618, %v2616
        %v2729 = vpack.c.b16 %v2619, %v2617
        %v2730 = vpack.c.b16 %v2622, %v2620
        %v2731 = vpack.c.b16 %v2623, %v2621
        %v2732 = vpack.c.b16 %v2626, %v2624
        %v2733 = vpack.c.b16 %v2627, %v2625
        %v2734 = vpack.c.b16 %v2630, %v2628
        %v2735 = vpack.c.b16 %v2631, %v2629
        %v2736 = vpack.c.b16 %v2634, %v2632
        %v2737 = vpack.c.b16 %v2635, %v2633
        %v2738 = vpack.c.b16 %v2638, %v2636
        %v2739 = vpack.c.b16 %v2639, %v2637
        %v2740 = vpack.c.b16 %v2642, %v2640
        %v2741 = vpack.c.b16 %v2643, %v2641
        %v2742 = vpack.c.b16 %v2646, %v2644
        %v2743 = vpack.c.b16 %v2647, %v2645
        %2840 = vmatpush.bf16.msra.mxu0 %v2662
        %2841 = vmatpush.bf16.msra.mxu0 %v2660
        %2842 = vmatpush.bf16.msra.mxu0 %v2658
        %2843 = vmatpush.bf16.msra.mxu0 %v2656
        %2844 = vmatpush.bf16.msra.mxu0 %v2654
        %2845 = vmatpush.bf16.msra.mxu0 %v2652
        %2846 = vmatpush.bf16.msra.mxu0 %v2650
        %2847 = vmatpush.bf16.msra.mxu0 %v2648
        %2848 = vmatmul.bf16.gmra.mxu0 %v2116
        %v2849 = vpop.f32.mrf.mxu0
        %v2850 = vadd.f32 %v2332, %v2849
        %v2851 = vpop.f32.mrf.mxu0
        %v2852 = vadd.f32 %v2334, %v2851
        %2853 = vmatmul.bf16.gmra.mxu0 %v2122
        %v2854 = vpop.f32.mrf.mxu0
        %v2855 = vadd.f32 %v2337, %v2854
        %v2856 = vpop.f32.mrf.mxu0
        %v2857 = vadd.f32 %v2339, %v2856
        %2858 = vdwg.mxu0
        %2859 = vmatpush.bf16.msra.mxu0 %v2678
        %2860 = vmatpush.bf16.msra.mxu0 %v2676
        %2861 = vmatpush.bf16.msra.mxu0 %v2674
        %2862 = vmatpush.bf16.msra.mxu0 %v2672
        %2863 = vmatpush.bf16.msra.mxu0 %v2670
        %2864 = vmatpush.bf16.msra.mxu0 %v2668
        %2865 = vmatpush.bf16.msra.mxu0 %v2666
        %2866 = vmatpush.bf16.msra.mxu0 %v2664
        %2867 = vmatmul.bf16.gmra.mxu0 %v2117
        %v2868 = vpop.f32.mrf.mxu0
        %v2869 = vadd.f32 %v2850, %v2868
        %v2870 = vpop.f32.mrf.mxu0
        %v2871 = vadd.f32 %v2852, %v2870
        %2872 = vmatmul.bf16.gmra.mxu0 %v2123
        %v2873 = vpop.f32.mrf.mxu0
        %v2874 = vadd.f32 %v2855, %v2873
        %v2875 = vpop.f32.mrf.mxu0
        %v2876 = vadd.f32 %v2857, %v2875
        %2877 = vdwg.mxu0
        %2878 = vmatpush.bf16.msra.mxu0 %v2694
        %2879 = vmatpush.bf16.msra.mxu0 %v2692
        %2880 = vmatpush.bf16.msra.mxu0 %v2690
        %2881 = vmatpush.bf16.msra.mxu0 %v2688
        %2882 = vmatpush.bf16.msra.mxu0 %v2686
        %2883 = vmatpush.bf16.msra.mxu0 %v2684
        %2884 = vmatpush.bf16.msra.mxu0 %v2682
        %2885 = vmatpush.bf16.msra.mxu0 %v2680
        %2886 = vmatmul.bf16.gmra.mxu0 %v2118
        %v2887 = vpop.f32.mrf.mxu0
        %v2888 = vadd.f32 %v2869, %v2887
        %v2889 = vpop.f32.mrf.mxu0
        %v2890 = vadd.f32 %v2871, %v2889
        %2891 = vmatmul.bf16.gmra.mxu0 %v2124
        %v2892 = vpop.f32.mrf.mxu0
        %v2893 = vadd.f32 %v2874, %v2892
        %v2894 = vpop.f32.mrf.mxu0
        %v2895 = vadd.f32 %v2876, %v2894
        %2896 = vdwg.mxu0
        %2897 = vmatpush.bf16.msra.mxu0 %v2710
        %2898 = vmatpush.bf16.msra.mxu0 %v2708
        %2899 = vmatpush.bf16.msra.mxu0 %v2706
        %2900 = vmatpush.bf16.msra.mxu0 %v2704
        %2901 = vmatpush.bf16.msra.mxu0 %v2702
        %2902 = vmatpush.bf16.msra.mxu0 %v2700
        %2903 = vmatpush.bf16.msra.mxu0 %v2698
        %2904 = vmatpush.bf16.msra.mxu0 %v2696
        %2905 = vmatmul.bf16.gmra.mxu0 %v2119
        %v2906 = vpop.f32.mrf.mxu0
        %v2907 = vadd.f32 %v2888, %v2906
        %v2908 = vpop.f32.mrf.mxu0
        %v2909 = vadd.f32 %v2890, %v2908
        %2910 = vmatmul.bf16.gmra.mxu0 %v2125
        %v2911 = vpop.f32.mrf.mxu0
        %v2912 = vadd.f32 %v2893, %v2911
        %v2913 = vpop.f32.mrf.mxu0
        %v2914 = vadd.f32 %v2895, %v2913
        %2915 = vdwg.mxu0
        %2916 = vmatpush.bf16.msra.mxu0 %v2726
        %2917 = vmatpush.bf16.msra.mxu0 %v2724
        %2918 = vmatpush.bf16.msra.mxu0 %v2722
        %2919 = vmatpush.bf16.msra.mxu0 %v2720
        %2920 = vmatpush.bf16.msra.mxu0 %v2718
        %2921 = vmatpush.bf16.msra.mxu0 %v2716
        %2922 = vmatpush.bf16.msra.mxu0 %v2714
        %2923 = vmatpush.bf16.msra.mxu0 %v2712
        %2924 = vmatmul.bf16.gmra.mxu0 %v2120
        %v2925 = vpop.f32.mrf.mxu0
        %v2926 = vadd.f32 %v2907, %v2925
        %v2927 = vpop.f32.mrf.mxu0
        %v2928 = vadd.f32 %v2909, %v2927
        %2929 = vmatmul.bf16.gmra.mxu0 %v2126
        %v2930 = vpop.f32.mrf.mxu0
        %v2931 = vadd.f32 %v2912, %v2930
        %v2932 = vpop.f32.mrf.mxu0
        %v2933 = vadd.f32 %v2914, %v2932
        %2934 = vdwg.mxu0
        %2935 = vmatpush.bf16.msra.mxu0 %v2742
        %2936 = vmatpush.bf16.msra.mxu0 %v2740
        %2937 = vmatpush.bf16.msra.mxu0 %v2738
        %2938 = vmatpush.bf16.msra.mxu0 %v2736
        %2939 = vmatpush.bf16.msra.mxu0 %v2734
        %2940 = vmatpush.bf16.msra.mxu0 %v2732
        %2941 = vmatpush.bf16.msra.mxu0 %v2730
        %2942 = vmatpush.bf16.msra.mxu0 %v2728
        %2943 = vmatmul.bf16.gmra.mxu0 %v2121
        %v2944 = vpop.f32.mrf.mxu0
        %v2945 = vadd.f32 %v2926, %v2944
        %v2946 = vpop.f32.mrf.mxu0
        %v2947 = vadd.f32 %v2928, %v2946
        %2948 = vmatmul.bf16.gmra.mxu0 %v2127
        %v2949 = vpop.f32.mrf.mxu0
        %v2950 = vadd.f32 %v2931, %v2949
        %v2951 = vpop.f32.mrf.mxu0
        %v2952 = vadd.f32 %v2933, %v2951
        %2953 = vdwg.mxu0
        %2954 = vmatpush.bf16.msra.mxu0 %v2663
        %2955 = vmatpush.bf16.msra.mxu0 %v2661
        %2956 = vmatpush.bf16.msra.mxu0 %v2659
        %2957 = vmatpush.bf16.msra.mxu0 %v2657
        %2958 = vmatpush.bf16.msra.mxu0 %v2655
        %2959 = vmatpush.bf16.msra.mxu0 %v2653
        %2960 = vmatpush.bf16.msra.mxu0 %v2651
        %2961 = vmatpush.bf16.msra.mxu0 %v2649
        %2962 = vmatmul.bf16.gmra.mxu0 %v2116
        %v2963 = vpop.f32.mrf.mxu0
        %v2964 = vadd.f32 %v2351, %v2963
        %v2965 = vpop.f32.mrf.mxu0
        %v2966 = vadd.f32 %v2353, %v2965
        %2967 = vmatmul.bf16.gmra.mxu0 %v2122
        %v2968 = vpop.f32.mrf.mxu0
        %v2969 = vadd.f32 %v2356, %v2968
        %v2970 = vpop.f32.mrf.mxu0
        %v2971 = vadd.f32 %v2358, %v2970
        %2972 = vdwg.mxu0
        %2973 = vmatpush.bf16.msra.mxu0 %v2679
        %2974 = vmatpush.bf16.msra.mxu0 %v2677
        %2975 = vmatpush.bf16.msra.mxu0 %v2675
        %2976 = vmatpush.bf16.msra.mxu0 %v2673
        %2977 = vmatpush.bf16.msra.mxu0 %v2671
        %2978 = vmatpush.bf16.msra.mxu0 %v2669
        %2979 = vmatpush.bf16.msra.mxu0 %v2667
        %2980 = vmatpush.bf16.msra.mxu0 %v2665
        %2981 = vmatmul.bf16.gmra.mxu0 %v2117
        %v2982 = vpop.f32.mrf.mxu0
        %v2983 = vadd.f32 %v2964, %v2982
        %v2984 = vpop.f32.mrf.mxu0
        %v2985 = vadd.f32 %v2966, %v2984
        %2986 = vmatmul.bf16.gmra.mxu0 %v2123
        %v2987 = vpop.f32.mrf.mxu0
        %v2988 = vadd.f32 %v2969, %v2987
        %v2989 = vpop.f32.mrf.mxu0
        %v2990 = vadd.f32 %v2971, %v2989
        %2991 = vdwg.mxu0
        %2992 = vmatpush.bf16.msra.mxu0 %v2695
        %2993 = vmatpush.bf16.msra.mxu0 %v2693
        %2994 = vmatpush.bf16.msra.mxu0 %v2691
        %2995 = vmatpush.bf16.msra.mxu0 %v2689
        %2996 = vmatpush.bf16.msra.mxu0 %v2687
        %2997 = vmatpush.bf16.msra.mxu0 %v2685
        %2998 = vmatpush.bf16.msra.mxu0 %v2683
        %2999 = vmatpush.bf16.msra.mxu0 %v2681
        %3000 = vmatmul.bf16.gmra.mxu0 %v2118
        %v3001 = vpop.f32.mrf.mxu0
        %v3002 = vadd.f32 %v2983, %v3001
        %v3003 = vpop.f32.mrf.mxu0
        %v3004 = vadd.f32 %v2985, %v3003
        %3005 = vmatmul.bf16.gmra.mxu0 %v2124
        %v3006 = vpop.f32.mrf.mxu0
        %v3007 = vadd.f32 %v2988, %v3006
        %v3008 = vpop.f32.mrf.mxu0
        %v3009 = vadd.f32 %v2990, %v3008
        %3010 = vdwg.mxu0
        %3011 = vmatpush.bf16.msra.mxu0 %v2711
        %3012 = vmatpush.bf16.msra.mxu0 %v2709
        %3013 = vmatpush.bf16.msra.mxu0 %v2707
        %3014 = vmatpush.bf16.msra.mxu0 %v2705
        %3015 = vmatpush.bf16.msra.mxu0 %v2703
        %3016 = vmatpush.bf16.msra.mxu0 %v2701
        %3017 = vmatpush.bf16.msra.mxu0 %v2699
        %3018 = vmatpush.bf16.msra.mxu0 %v2697
        %3019 = vmatmul.bf16.gmra.mxu0 %v2119
        %v3020 = vpop.f32.mrf.mxu0
        %v3021 = vadd.f32 %v3002, %v3020
        %v3022 = vpop.f32.mrf.mxu0
        %v3023 = vadd.f32 %v3004, %v3022
        %3024 = vmatmul.bf16.gmra.mxu0 %v2125
        %v3025 = vpop.f32.mrf.mxu0
        %v3026 = vadd.f32 %v3007, %v3025
        %v3027 = vpop.f32.mrf.mxu0
        %v3028 = vadd.f32 %v3009, %v3027
        %3029 = vdwg.mxu0
        %3030 = vmatpush.bf16.msra.mxu0 %v2727
        %3031 = vmatpush.bf16.msra.mxu0 %v2725
        %3032 = vmatpush.bf16.msra.mxu0 %v2723
        %3033 = vmatpush.bf16.msra.mxu0 %v2721
        %3034 = vmatpush.bf16.msra.mxu0 %v2719
        %3035 = vmatpush.bf16.msra.mxu0 %v2717
        %3036 = vmatpush.bf16.msra.mxu0 %v2715
        %3037 = vmatpush.bf16.msra.mxu0 %v2713
        %3038 = vmatmul.bf16.gmra.mxu0 %v2120
        %v3039 = vpop.f32.mrf.mxu0
        %v3040 = vadd.f32 %v3021, %v3039
        %v3041 = vpop.f32.mrf.mxu0
        %v3042 = vadd.f32 %v3023, %v3041
        %3043 = vmatmul.bf16.gmra.mxu0 %v2126
        %v3044 = vpop.f32.mrf.mxu0
        %v3045 = vadd.f32 %v3026, %v3044
        %v3046 = vpop.f32.mrf.mxu0
        %v3047 = vadd.f32 %v3028, %v3046
        %3048 = vdwg.mxu0
        %3049 = vmatpush.bf16.msra.mxu0 %v2743
        %3050 = vmatpush.bf16.msra.mxu0 %v2741
        %3051 = vmatpush.bf16.msra.mxu0 %v2739
        %3052 = vmatpush.bf16.msra.mxu0 %v2737
        %3053 = vmatpush.bf16.msra.mxu0 %v2735
        %3054 = vmatpush.bf16.msra.mxu0 %v2733
        %3055 = vmatpush.bf16.msra.mxu0 %v2731
        %3056 = vmatpush.bf16.msra.mxu0 %v2729
        %3057 = vmatmul.bf16.gmra.mxu0 %v2121
        %v3058 = vpop.f32.mrf.mxu0
        %v3059 = vadd.f32 %v3040, %v3058
        %v3060 = vpop.f32.mrf.mxu0
        %v3061 = vadd.f32 %v3042, %v3060
        %3062 = vmatmul.bf16.gmra.mxu0 %v2127
        %v3063 = vpop.f32.mrf.mxu0
        %v3064 = vadd.f32 %v3045, %v3063
        %v3065 = vpop.f32.mrf.mxu0
        %v3066 = vadd.f32 %v3047, %v3065
        %3067 = vdwg.mxu0
        %v3068 = vld [vmem:[%s10] sm:$0x3]
        %v3070 = vperm.slane %v3068, 0
        %v3071 = vperm.slane %v3068, 1
        %v3074 = vadd.f32 %v2945, %v3070
        %v3075 = vadd.f32 %v3059, %v3071
        %v3076 = vadd.f32 %v2947, %v3070
        %v3077 = vadd.f32 %v3061, %v3071
        %v3078 = vadd.f32 %v2950, %v3070
        %v3079 = vadd.f32 %v3064, %v3071
        %v3080 = vadd.f32 %v2952, %v3070
        %v3081 = vadd.f32 %v3066, %v3071
        %3082 = vst [vmem:[%s585] sm:$0xff] %v3074
        %3083 = vst [vmem:[%s585 + $0x8] sm:$0xff] %v3075
        %3084 = vst [vmem:[%s585 + $0x10] sm:$0xff] %v3076
        %3085 = vst [vmem:[%s585 + $0x18] sm:$0xff] %v3077
        %3086 = vst [vmem:[%s585 + $0x20] sm:$0xff] %v3078
        %3087 = vst [vmem:[%s585 + $0x28] sm:$0xff] %v3079
        %3088 = vst [vmem:[%s585 + $0x30] sm:$0xff] %v3080
        %3089 = vst [vmem:[%s585 + $0x38] sm:$0xff] %v3081
        %s3090 = sand.u32 %s346, 1
        %s3091 = scalar_lea.sflag [#allocation4], %s3090
        %s3092 = sand.u32 %s346, 1
        %s3093 = smul.addr %s3092, 64
        %s3094 = scalar_lea.vmem [#allocation13], %s3093
        // Predicated region
        $region101: #{tpu_custom_call.1} parent=75 // pred_check
          %p3095 = pneg %p356
        $region102: #{tpu_custom_call.1} parent=75 // pred_check_branch
          %3097 = sbr.rel (%p3095) target = $region104
        $region103: #{tpu_custom_call.1} parent=75 // pred_region
          %3099 = vsyncadd %s3091, 0
          %s3100 = smul.addr %s34, 8
          %s3101 = smul.addr %s3100, 8
          %s3102 = scalar_lea.hbm %s14, %s3101
          %s3103 = sshll.u32 %s3094, 4
          %s3104 = int_to_ptr.vmem [resolvable:$true] %s3103
          %s3105 = sshll.u32 %s3102, 4
          %s3106 = int_to_ptr.hbm [resolvable:$true] %s3105
          %3111 = dma.vmem_to_hbm [thread:$0]  %s3104, 1024, %s3106, %s3091, 256, 256, 16
        $region104: #{tpu_custom_call.1} parent=75 // pred_fallthru
          _
      $region76: #{tpu_custom_call.1} parent=5 // pred_fallthru
        _
      %p3112 = scmp.le.s32.totalorder 2, %s29
      // Predicated region
      $region105: #{tpu_custom_call.1} parent=5 // pred_check
        %p3113 = pneg %p3112
      $region106: #{tpu_custom_call.1} parent=5 // pred_check_branch
        %3115 = sbr.rel (%p3113) target = $region108
      $region107: #{tpu_custom_call.1} parent=5 // pred_region
        %s3116 = ssub.s32 %s29, 2
        // Predicated region
        $region109: #{tpu_custom_call.1} parent=107 // pred_check
          %p3117 = pneg %p362
        $region110: #{tpu_custom_call.1} parent=107 // pred_check_branch
          %3119 = sbr.rel (%p3117) target = $region112
        $region111: #{tpu_custom_call.1} parent=107 // pred_region
          %s3120 = sand.u32 %s347, 1
          %s3121 = scalar_lea.sflag [#allocation4], %s3120
          %s3122 = sand.u32 %s347, 1
          %s3123 = smul.addr %s3122, 64
          %s3124 = scalar_lea.vmem [#allocation13], %s3123
          %3126 = dma.done %s3121, 1024
        $region112: #{tpu_custom_call.1} parent=107 // pred_fallthru
          _
      $region108: #{tpu_custom_call.1} parent=5 // pred_fallthru
        _
    $region6: #{tpu_custom_call.1} parent=1 // loop_footer
      %s33 = sadd.s32 1, %s29
    $region7: #{tpu_custom_call.1} parent=1 // loop_footer_branch
      %28 = sbr.rel target = $region3
    $region8: #{tpu_custom_call.1} parent=1 // loop_exit
      _
    %3127 = vsyncpa [#allocation3], 1
    %s3128 = scalar_lea.sflag [#allocation3], 1
    %3129 = vsyncpa %s3128, 1
    %3130 = vsyncpa [#allocation6], 1
    %3131 = vsyncpa [#allocation9], 1
    %3132 = vsyncpa [#allocation12], 1
    %3133 = vsyncpa [#allocation4], 1
    %s3134 = scalar_lea.sflag [#allocation4], 1
    %3135 = vsyncpa %s3134, 1

</llo_original>
